<compile_context>
chip_gen: v7x
topology: tpu7x:2x2x1
jax: 0.10.0
libtpu: 0.0.40
codegen_flags: <defaults>
</compile_context>

<pallas_src>
import functools

import numpy as np
import jax
import jax.numpy as jnp
from jax.experimental import pallas as pl
from jax.experimental.pallas import tpu as pltpu

START_TAG = "<START>"
STOP_TAG = "<STOP>"
NEG = -10000.0          # semantic "disallowed transition" value (as in PyTorch)
PAD = -1.0e9            # fill for padded tag rows/lanes (distinct from NEG)


# --------------------------------------------------------------------------
# Fused kernel: BiLSTM + hidden2tag + Viterbi recursion + in-kernel backtrack
# --------------------------------------------------------------------------
def bilstm_crf_kernel(x_ref, xrev_ref, wihF_ref, wihB_ref, b_ref, whh_ref,
                      wtf_ref, wtb_ref, btag_ref, transT_ref, tstop_ref,
                      h0_ref, c0_ref,
                      feats_ref, path_ref, score_ref,
                      xg_sc, hs_sc, fB_sc, bptr_sc,
                      *, hid, seq, bg, start_idx):
    H = hid
    S = seq
    BG = bg
    Pp = transT_ref.shape[0]          # padded "prev" tag axis (8 sublanes)
    Tp = transT_ref.shape[1]          # padded "next" tag axis (128 lanes)

    # ---- (1) input-to-hidden projections for all timesteps / both dirs -----
    # Forward gate lane-blocks come from x (time order), backward blocks from
    # the time-reversed copy, so the recurrence needs NO per-step select.
    xg_sc[...] = (jnp.dot(x_ref[...], wihF_ref[...],
                          preferred_element_type=jnp.float32)
                  + jnp.dot(xrev_ref[...], wihB_ref[...],
                            preferred_element_type=jnp.float32)
                  + b_ref[...])

    # ---- (2) bidirectional LSTM recurrence (BG sentences per sublane tile) -
    # Lane layout (width H each): [i_f,i_b,f_f,f_b,o_f,o_b,g_f,g_b].
    def lstm_step(t, carry):
        h, c = carry                                      # (BG, 2H): [fwd|bwd]
        row = pl.multiple_of(t * BG, BG)
        gates = xg_sc[pl.ds(row, BG), :] + jnp.dot(
            h, whh_ref[...], preferred_element_type=jnp.float32)   # (BG, 8H)
        ifo = jax.nn.sigmoid(gates[:, :6 * H])
        g = jnp.tanh(gates[:, 6 * H:])
        i_g = ifo[:, :2 * H]
        f_g = ifo[:, 2 * H:4 * H]
        o_g = ifo[:, 4 * H:6 * H]
        c_new = f_g * c + i_g * g
        h_new = o_g * jnp.tanh(c_new)
        hs_sc[pl.ds(row, BG), :] = h_new                  # ONE store per step
        return h_new, c_new

    jax.lax.fori_loop(0, S, lstm_step, (h0_ref[...], c0_ref[...]),
                      unroll=True)

    # ---- (3) hidden2tag; backward half was stored time-reversed, so split
    #          w_tag into two zero-padded halves and add with a block reversal.
    feats_ref[...] = (jnp.dot(hs_sc[...], wtf_ref[...],
                              preferred_element_type=jnp.float32)
                      + btag_ref[...])
    fB_sc[...] = jnp.dot(hs_sc[...], wtb_ref[...],
                         preferred_element_type=jnp.float32)

    def comb_step(t, _):
        i = pl.multiple_of(t * BG, BG)
        r = pl.multiple_of((S - 1 - t) * BG, BG)
        feats_ref[pl.ds(i, BG), :] = (feats_ref[pl.ds(i, BG), :]
                                      + fB_sc[pl.ds(r, BG), :])
        return 0

    jax.lax.fori_loop(0, S, comb_step, 0, unroll=True)

    # ---- (4) Viterbi forward recursion; prev axis is only Pp=8 sublanes ----
    prev_iota = jax.lax.broadcasted_iota(jnp.int32, (1, Pp, Tp), 1)
    lane3 = jax.lax.broadcasted_iota(jnp.int32, (1, Pp, Tp), 2)
    eye3 = prev_iota == lane3
    lane2 = jax.lax.broadcasted_iota(jnp.int32, (1, Tp), 1)
    col_iota = jax.lax.broadcasted_iota(jnp.int32, (1, Pp, 1), 1)
    BIG = jnp.int32(Tp)
    FILL = jnp.float32(-1e30)

    transT = transT_ref[...]                         # (Pp, Tp): [prev, next]
    fv0 = jnp.broadcast_to(
        jnp.where(col_iota == start_idx, jnp.float32(0.0), jnp.float32(NEG)),
        (BG, Pp, 1))

    def vit_step(t, fv):
        row = pl.multiple_of(t * BG, BG)
        ntv = transT[None, :, :] + fv                # (BG, Pp, Tp)
        m = jnp.max(ntv, axis=1)                     # (BG, Tp)
        bp = jnp.min(jnp.where(ntv >= m[:, None, :], prev_iota, BIG),
                     axis=1)                         # (BG, Tp) int32 argmax
        bptr_sc[pl.ds(row, BG), :] = bp
        v = m + feats_ref[pl.ds(row, BG), :]         # (BG, Tp)
        # next-tag row -> prev-tag column (per sentence) via masked reduce
        return jnp.max(jnp.where(eye3, v[:, None, :], FILL),
                       axis=2, keepdims=True)        # (BG, Pp, 1)

    fv = jax.lax.fori_loop(0, S, vit_step, fv0, unroll=True)

    fv_row = jnp.max(jnp.where(eye3, fv, FILL), axis=1)      # (BG, Tp)
    term = fv_row + tstop_ref[...]                           # (BG, Tp)
    score = jnp.max(term, axis=1, keepdims=True)             # (BG, 1)
    best = jnp.min(jnp.where(term >= score, lane2, BIG),
                   axis=1, keepdims=True)                    # (BG, 1) int32
    score_ref[...] = jnp.broadcast_to(score, (BG, Tp))

    # ---- (5) in-kernel backpointer chase (int32 throughout) ----------------
    path_ref[pl.ds((S - 1) * BG, BG), :] = jnp.broadcast_to(best, (BG, Tp))

    def back_step(i, best_t):
        t = S - 1 - i
        row = pl.multiple_of(t * BG, BG)
        bpt = bptr_sc[pl.ds(row, BG), :]                       # (BG, Tp)
        prv = jnp.max(jnp.where(lane2 == best_t, bpt, jnp.int32(-1)),
                      axis=1, keepdims=True)                   # (BG, 1)
        dst = pl.multiple_of((t - 1) * BG, BG)
        path_ref[pl.ds(dst, BG), :] = jnp.broadcast_to(prv, (BG, Tp))
        return prv

    jax.lax.fori_loop(0, S - 1, back_step, best, unroll=True)


def bilstm_crf_pallas(x, x_rev, kp, *, hid, seq, bg, groups, start_idx):
    E = x.shape[1]
    SB = seq * bg
    Pp, Tp = kp["transT"].shape
    kern = functools.partial(bilstm_crf_kernel, hid=hid, seq=seq, bg=bg,
                             start_idx=start_idx)
    grid_spec = pltpu.PrefetchScalarGridSpec(
        num_scalar_prefetch=0,
        grid=(groups,),
        in_specs=[
            pl.BlockSpec((SB, E), lambda g: (g, 0)),            # x (fwd time)
            pl.BlockSpec((SB, E), lambda g: (g, 0)),            # x (rev time)
            pl.BlockSpec((E, 8 * hid), lambda g: (0, 0)),       # wih fwd lanes
            pl.BlockSpec((E, 8 * hid), lambda g: (0, 0)),       # wih bwd lanes
            pl.BlockSpec((1, 8 * hid), lambda g: (0, 0)),       # gate bias
            pl.BlockSpec((2 * hid, 8 * hid), lambda g: (0, 0)), # whh
            pl.BlockSpec((2 * hid, Tp), lambda g: (0, 0)),      # w_tag fwd rows
            pl.BlockSpec((2 * hid, Tp), lambda g: (0, 0)),      # w_tag bwd rows
            pl.BlockSpec((1, Tp), lambda g: (0, 0)),            # b_tag
            pl.BlockSpec((Pp, Tp), lambda g: (0, 0)),           # transT
            pl.BlockSpec((1, Tp), lambda g: (0, 0)),            # trans[STOP,:]
            pl.BlockSpec((bg, 2 * hid), lambda g: (0, 0)),      # h0
            pl.BlockSpec((bg, 2 * hid), lambda g: (0, 0)),      # c0
        ],
        out_specs=(
            pl.BlockSpec((SB, Tp), lambda g: (g, 0)),           # feats
            pl.BlockSpec((SB, Tp), lambda g: (g, 0)),           # decoded path
            pl.BlockSpec((bg, Tp), lambda g: (g, 0)),           # path score
        ),
        scratch_shapes=[
            pltpu.VMEM((SB, 8 * hid), jnp.float32),   # input projections
            pltpu.VMEM((SB, 2 * hid), jnp.float32),   # hidden states
            pltpu.VMEM((SB, Tp), jnp.float32),        # bwd-half feats (rev)
            pltpu.VMEM((SB, Tp), jnp.int32),          # Viterbi backpointers
        ],
    )
    return pl.pallas_call(
        kern,
        out_shape=(jax.ShapeDtypeStruct((groups * SB, Tp), jnp.float32),
                   jax.ShapeDtypeStruct((groups * SB, Tp), jnp.int32),
                   jax.ShapeDtypeStruct((groups * bg, Tp), jnp.float32)),
        grid_spec=grid_spec,
        compiler_params=pltpu.CompilerParams(
            dimension_semantics=("parallel",)),
    )(x, x_rev, kp["wihF"], kp["wihB"], kp["b"], kp["whh"], kp["wtagF"],
      kp["wtagB"], kp["btag"], kp["transT"], kp["t_stop"], kp["h0"], kp["c0"])


@functools.partial(jax.jit,
                   static_argnames=("hid", "seq", "bg", "groups", "start_idx"))
def bilstm_crf_forward(sentences, embedding, kp, hid, seq, bg, groups,
                       start_idx):
    # TODO(synk): the nn.Embedding lookup is a plain-JAX gather (glue);
    # BiLSTM + hidden2tag + Viterbi + backtrack all run in one Pallas kernel.
    B = sentences.shape[0]
    x = embedding[sentences]                                   # (B, S, E)
    E = x.shape[-1]

    def arrange(a):   # (B, S, E) -> (G*S*BG, E), row = ((g*S)+t)*BG + j
        return (a.reshape(groups, bg, seq, E)
                 .transpose(0, 2, 1, 3)
                 .reshape(groups * seq * bg, E))

    feats, path, score = bilstm_crf_pallas(
        arrange(x), arrange(x[:, ::-1, :]), kp,
        hid=hid, seq=seq, bg=bg, groups=groups, start_idx=start_idx)

    path_b = (path[:, 0].reshape(groups, seq, bg)
              .transpose(0, 2, 1).reshape(B, seq))
    feats_b = (feats.reshape(groups, seq, bg, -1)
               .transpose(0, 2, 1, 3).reshape(B, seq, -1))
    return score[:, 0], path_b, feats_b


# --------------------------------------------------------------------------
# Parameter creation (natural per-gate layout) and kernel packing
# --------------------------------------------------------------------------
def make_params(key, vocab, E, H, T, start_idx, stop_idx):
    ks = jax.random.split(key, 12)

    def nrm(k, shape, s=0.1):
        return (s * jax.random.normal(k, shape)).astype(jnp.float32)

    p = {
        "embedding": nrm(ks[0], (vocab, E), 1.0),
        "wih_f": nrm(ks[1], (4, E, H)),       # gate order i, f, g, o
        "whh_f": nrm(ks[2], (4, H, H)),
        "b_f":   nrm(ks[3], (4, 1, H)),
        "wih_b": nrm(ks[4], (4, E, H)),
        "whh_b": nrm(ks[5], (4, H, H)),
        "b_b":   nrm(ks[6], (4, 1, H)),
        "w_tag": nrm(ks[7], (2 * H, T)),
        "b_tag": nrm(ks[8], (1, T)),
        "h0":    nrm(ks[9], (2, 1, H), 1.0),
        "c0":    nrm(ks[10], (2, 1, H), 1.0),
    }
    trans = jax.random.normal(ks[11], (T, T)).astype(jnp.float32)
    trans = trans.at[start_idx, :].set(NEG)
    trans = trans.at[:, stop_idx].set(NEG)
    p["transitions"] = trans
    return p


def pack_params(p, tag_pad, prev_pad, stop_idx, bg):
    E = p["wih_f"].shape[1]
    H = p["wih_f"].shape[2]
    T = p["w_tag"].shape[1]
    # natural per-gate order in p: 0=i, 1=f, 2=g, 3=o (PyTorch convention);
    # packed lane-block order (width H): [i_f,i_b,f_f,f_b,o_f,o_b,g_f,g_b]
    gate_order = (0, 1, 3, 2)

    wihF = jnp.zeros((E, 8 * H), jnp.float32)
    wihB = jnp.zeros((E, 8 * H), jnp.float32)
    b = jnp.zeros((1, 8 * H), jnp.float32)
    whh = jnp.zeros((2 * H, 8 * H), jnp.float32)
    for k, g in enumerate(gate_order):
        fsl = slice((2 * k) * H, (2 * k + 1) * H)
        bsl = slice((2 * k + 1) * H, (2 * k + 2) * H)
        wihF = wihF.at[:, fsl].set(p["wih_f"][g])
        wihB = wihB.at[:, bsl].set(p["wih_b"][g])
        b = b.at[:, fsl].set(p["b_f"][g])
        b = b.at[:, bsl].set(p["b_b"][g])
        whh = whh.at[:H, fsl].set(p["whh_f"][g])
        whh = whh.at[H:, bsl].set(p["whh_b"][g])

    transT = (jnp.full((prev_pad, tag_pad), PAD, jnp.float32)
              .at[:T, :T].set(p["transitions"].T))            # [prev, next]
    t_stop = (jnp.full((1, tag_pad), PAD, jnp.float32)
              .at[0, :T].set(p["transitions"][stop_idx]))
    wtagF = (jnp.zeros((2 * H, tag_pad), jnp.float32)
             .at[:H, :T].set(p["w_tag"][:H]))
    wtagB = (jnp.zeros((2 * H, tag_pad), jnp.float32)
             .at[H:, :T].set(p["w_tag"][H:]))
    btag = (jnp.full((1, tag_pad), PAD, jnp.float32)
            .at[:, :T].set(p["b_tag"]))

    h0 = jnp.tile(jnp.concatenate([p["h0"][0], p["h0"][1]], axis=1), (bg, 1))
    c0 = jnp.tile(jnp.concatenate([p["c0"][0], p["c0"][1]], axis=1), (bg, 1))
    return {"wihF": wihF, "wihB": wihB, "b": b, "whh": whh,
            "wtagF": wtagF, "wtagB": wtagB, "btag": btag,
            "transT": transT, "t_stop": t_stop, "h0": h0, "c0": c0}


# --------------------------------------------------------------------------
# Pure-numpy references (correctness check only)
# --------------------------------------------------------------------------
def ref_lstm_feats(x, p):
    x = np.asarray(x, np.float32)
    S = x.shape[0]

    def sig(z):
        return 1.0 / (1.0 + np.exp(-z))

    def run_dir(wih, whh, b, h, c, reverse):
        wih, whh, b = np.asarray(wih), np.asarray(whh), np.asarray(b)
        h, c = np.asarray(h).copy(), np.asarray(c).copy()
        out = [None] * S
        order = range(S - 1, -1, -1) if reverse else range(S)
        for t in order:
            xt = x[t:t + 1]
            i = sig(xt @ wih[0] + h @ whh[0] + b[0])
            f = sig(xt @ wih[1] + h @ whh[1] + b[1])
            g = np.tanh(xt @ wih[2] + h @ whh[2] + b[2])
            o = sig(xt @ wih[3] + h @ whh[3] + b[3])
            c = f * c + i * g
            h = o * np.tanh(c)
            out[t] = h
        return np.concatenate(out, axis=0)

    hf = run_dir(p["wih_f"], p["whh_f"], p["b_f"], p["h0"][0], p["c0"][0], False)
    hb = run_dir(p["wih_b"], p["whh_b"], p["b_b"], p["h0"][1], p["c0"][1], True)
    hcat = np.concatenate([hf, hb], axis=1)
    return hcat @ np.asarray(p["w_tag"]) + np.asarray(p["b_tag"])


def ref_viterbi(feats, trans, start_idx, stop_idx):
    feats = np.asarray(feats)
    trans = np.asarray(trans)
    T = trans.shape[0]
    fv = np.full((T,), NEG, np.float32)
    fv[start_idx] = 0.0
    bps = []
    for feat in feats:
        ntv = fv[None, :] + trans                    # [next, prev]
        bps.append(ntv.argmax(axis=1))
        fv = ntv.max(axis=1) + feat
    term = fv + trans[stop_idx]
    best = int(term.argmax())
    score = float(term[best])
    path = [best]
    for bp in reversed(bps):
        best = int(bp[best])
        path.append(best)
    start = path.pop()
    assert start == start_idx
    path.reverse()
    return score, path


# --------------------------------------------------------------------------
if __name__ == "__main__":
    tag_to_ix = {"B": 0, "I": 1, "O": 2, START_TAG: 3, STOP_TAG: 4}
    VOCAB, E, HIDDEN = 16, 16, 32          # embedding_dim=16, hidden_dim=32
    H = HIDDEN // 2                        # per-direction hidden size
    T = len(tag_to_ix)
    Tp, Pp = 128, 8                        # padded "next" lanes / "prev" sublanes
    S = 8                                  # sentence length
    BG, G = 8, 2                           # sentences per grid step, batch groups
    B = BG * G
    START_IDX, STOP_IDX = tag_to_ix[START_TAG], tag_to_ix[STOP_TAG]

    key = jax.random.PRNGKey(0)
    pkey, skey = jax.random.split(key)
    params = make_params(pkey, VOCAB, E, H, T, START_IDX, STOP_IDX)
    kp = pack_params(params, tag_pad=Tp, prev_pad=Pp, stop_idx=STOP_IDX, bg=BG)
    sentences = jax.random.randint(skey, (B, S), 0, VOCAB, dtype=jnp.int32)

    score, path, feats = jax.block_until_ready(
        bilstm_crf_forward(sentences, params["embedding"], kp,
                           hid=H, seq=S, bg=BG, groups=G,
                           start_idx=START_IDX))

    # correctness check (per sentence) against pure-numpy references
    emb = np.asarray(params["embedding"])
    sent_np = np.asarray(sentences)
    feats_np = np.asarray(feats)
    path_np = np.asarray(path)
    score_np = np.asarray(score)
    for bi in range(B):
        f_ref = ref_lstm_feats(emb[sent_np[bi]], params)
        np.testing.assert_allclose(feats_np[bi, :, :T], f_ref,
                                   rtol=2e-3, atol=2e-3)
        r_score, r_path = ref_viterbi(f_ref, params["transitions"],
                                      START_IDX, STOP_IDX)
        assert [int(v) for v in path_np[bi]] == r_path, (bi, path_np[bi], r_path)
        assert abs(float(score_np[bi]) - r_score) < 1e-2, (
            bi, float(score_np[bi]), r_score)

    print("KERNEL_OK")
</pallas_src>

<mosaic_0001>
module attributes {stable_mosaic.version = 11 : i64} {
  func.func @bilstm_crf_kernel(%arg0: i32, %arg1: memref<64x16xf32, #tpu.memory_space<vmem>>, %arg2: memref<64x16xf32, #tpu.memory_space<vmem>>, %arg3: memref<16x128xf32, #tpu.memory_space<vmem>>, %arg4: memref<16x128xf32, #tpu.memory_space<vmem>>, %arg5: memref<1x128xf32, #tpu.memory_space<vmem>>, %arg6: memref<32x128xf32, #tpu.memory_space<vmem>>, %arg7: memref<32x128xf32, #tpu.memory_space<vmem>>, %arg8: memref<32x128xf32, #tpu.memory_space<vmem>>, %arg9: memref<1x128xf32, #tpu.memory_space<vmem>>, %arg10: memref<8x128xf32, #tpu.memory_space<vmem>>, %arg11: memref<1x128xf32, #tpu.memory_space<vmem>>, %arg12: memref<8x32xf32, #tpu.memory_space<vmem>>, %arg13: memref<8x32xf32, #tpu.memory_space<vmem>>, %arg14: memref<64x128xf32, #tpu.memory_space<vmem>>, %arg15: memref<64x128xi32, #tpu.memory_space<vmem>>, %arg16: memref<8x128xf32, #tpu.memory_space<vmem>>, %arg17: memref<64x128xf32, #tpu.memory_space<vmem>>, %arg18: memref<64x32xf32, #tpu.memory_space<vmem>>, %arg19: memref<64x128xf32, #tpu.memory_space<vmem>>, %arg20: memref<64x128xi32, #tpu.memory_space<vmem>>) attributes {dimension_semantics = [#tpu.dimension_semantics<parallel>], iteration_bounds = array<i64: 2>, scalar_prefetch = 0 : i64, scratch_operands = 4 : i64, tpu.core_type = #tpu.core_type<tc>, window_params = [{transform_indices = @transform_0, window_bounds = array<i64: 64, 16>}, {transform_indices = @transform_1, window_bounds = array<i64: 64, 16>}, {pipeline_mode = #tpu.pipeline_mode<synchronous>, transform_indices = @transform_2, window_bounds = array<i64: 16, 128>}, {pipeline_mode = #tpu.pipeline_mode<synchronous>, transform_indices = @transform_3, window_bounds = array<i64: 16, 128>}, {pipeline_mode = #tpu.pipeline_mode<synchronous>, transform_indices = @transform_4, window_bounds = array<i64: 1, 128>}, {pipeline_mode = #tpu.pipeline_mode<synchronous>, transform_indices = @transform_5, window_bounds = array<i64: 32, 128>}, {pipeline_mode = #tpu.pipeline_mode<synchronous>, transform_indices = @transform_6, window_bounds = array<i64: 32, 128>}, {pipeline_mode = #tpu.pipeline_mode<synchronous>, transform_indices = @transform_7, window_bounds = array<i64: 32, 128>}, {pipeline_mode = #tpu.pipeline_mode<synchronous>, transform_indices = @transform_8, window_bounds = array<i64: 1, 128>}, {pipeline_mode = #tpu.pipeline_mode<synchronous>, transform_indices = @transform_9, window_bounds = array<i64: 8, 128>}, {pipeline_mode = #tpu.pipeline_mode<synchronous>, transform_indices = @transform_10, window_bounds = array<i64: 1, 128>}, {pipeline_mode = #tpu.pipeline_mode<synchronous>, transform_indices = @transform_11, window_bounds = array<i64: 8, 32>}, {pipeline_mode = #tpu.pipeline_mode<synchronous>, transform_indices = @transform_12, window_bounds = array<i64: 8, 32>}, {transform_indices = @transform_13, window_bounds = array<i64: 64, 128>}, {transform_indices = @transform_14, window_bounds = array<i64: 64, 128>}, {transform_indices = @transform_15, window_bounds = array<i64: 8, 128>}]} {
    %c0 = arith.constant 0 : index
    %c0_0 = arith.constant 0 : index
    %0 = vector.load %arg1[%c0, %c0_0] : memref<64x16xf32, #tpu.memory_space<vmem>>, vector<64x16xf32>
    %c0_1 = arith.constant 0 : index
    %c0_2 = arith.constant 0 : index
    %1 = vector.load %arg3[%c0_1, %c0_2] : memref<16x128xf32, #tpu.memory_space<vmem>>, vector<16x128xf32>
    %cst = arith.constant dense<0.000000e+00> : vector<64x128xf32>
    %2 = tpu.matmul %0, %1, %cst {dimension_numbers = #tpu.dot_dimension_numbers<[1], [0], [0], [1], [0, 0, 1, 1], [], []>} : vector<64x16xf32>, vector<16x128xf32>, vector<64x128xf32> -> vector<64x128xf32>
    %c0_3 = arith.constant 0 : index
    %c0_4 = arith.constant 0 : index
    %3 = vector.load %arg2[%c0_3, %c0_4] : memref<64x16xf32, #tpu.memory_space<vmem>>, vector<64x16xf32>
    %c0_5 = arith.constant 0 : index
    %c0_6 = arith.constant 0 : index
    %4 = vector.load %arg4[%c0_5, %c0_6] : memref<16x128xf32, #tpu.memory_space<vmem>>, vector<16x128xf32>
    %cst_7 = arith.constant dense<0.000000e+00> : vector<64x128xf32>
    %5 = tpu.matmul %3, %4, %cst_7 {dimension_numbers = #tpu.dot_dimension_numbers<[1], [0], [0], [1], [0, 0, 1, 1], [], []>} : vector<64x16xf32>, vector<16x128xf32>, vector<64x128xf32> -> vector<64x128xf32>
    %6 = arith.addf %2, %5 : vector<64x128xf32>
    %c0_8 = arith.constant 0 : index
    %c0_9 = arith.constant 0 : index
    %7 = vector.load %arg5[%c0_8, %c0_9] : memref<1x128xf32, #tpu.memory_space<vmem>>, vector<1x128xf32>
    %8 = vector.broadcast %7 : vector<1x128xf32> to vector<64x128xf32>
    %9 = arith.addf %6, %8 : vector<64x128xf32>
    %c0_10 = arith.constant 0 : index
    %c0_11 = arith.constant 0 : index
    %10 = vector.load %arg17[%c0_10, %c0_11] : memref<64x128xf32, #tpu.memory_space<vmem>>, vector<64x128xf32>
    tpu.vector_store %arg17[%c0_10, %c0_11], %9 {strides = array<i32>} : memref<64x128xf32, #tpu.memory_space<vmem>>, vector<64x128xf32>,
    %c0_12 = arith.constant 0 : index
    %c0_13 = arith.constant 0 : index
    %11 = vector.load %arg12[%c0_12, %c0_13] : memref<8x32xf32, #tpu.memory_space<vmem>>, vector<8x32xf32>
    %c0_14 = arith.constant 0 : index
    %c0_15 = arith.constant 0 : index
    %12 = vector.load %arg13[%c0_14, %c0_15] : memref<8x32xf32, #tpu.memory_space<vmem>>, vector<8x32xf32>
    %c0_i32 = arith.constant 0 : i32
    %c8_i32 = arith.constant 8 : i32
    %13 = arith.muli %c0_i32, %c8_i32 : i32
    %14 = tpu.assume_multiple %13, 8 : i32
    %15 = arith.index_cast %14 : i32 to index
    %c0_16 = arith.constant 0 : index
    %16 = vector.load %arg17[%15, %c0_16] : memref<64x128xf32, #tpu.memory_space<vmem>>, vector<8x128xf32>
    %c0_17 = arith.constant 0 : index
    %c0_18 = arith.constant 0 : index
    %17 = vector.load %arg6[%c0_17, %c0_18] : memref<32x128xf32, #tpu.memory_space<vmem>>, vector<32x128xf32>
    %cst_19 = arith.constant dense<0.000000e+00> : vector<8x128xf32>
    %18 = tpu.matmul %11, %17, %cst_19 {dimension_numbers = #tpu.dot_dimension_numbers<[1], [0], [0], [1], [0, 0, 1, 1], [], []>} : vector<8x32xf32>, vector<32x128xf32>, vector<8x128xf32> -> vector<8x128xf32>
    %19 = arith.addf %16, %18 : vector<8x128xf32>
    %20 = vector.extract_strided_slice %19 {offsets = [0, 0], sizes = [8, 96], strides = [1, 1]} : vector<8x128xf32> to vector<8x96xf32>
    %21 = arith.negf %20 : vector<8x96xf32>
    %22 = math.exp %21 : vector<8x96xf32>
    %cst_20 = arith.constant 1.000000e+00 : f32
    %23 = vector.broadcast %cst_20 : f32 to vector<8x96xf32>
    %24 = arith.addf %23, %22 : vector<8x96xf32>
    %25 = arith.divf %23, %24 : vector<8x96xf32>
    %26 = vector.extract_strided_slice %19 {offsets = [0, 96], sizes = [8, 32], strides = [1, 1]} : vector<8x128xf32> to vector<8x32xf32>
    %27 = math.tanh %26 : vector<8x32xf32>
    %28 = vector.extract_strided_slice %25 {offsets = [0, 0], sizes = [8, 32], strides = [1, 1]} : vector<8x96xf32> to vector<8x32xf32>
    %29 = vector.extract_strided_slice %25 {offsets = [0, 32], sizes = [8, 32], strides = [1, 1]} : vector<8x96xf32> to vector<8x32xf32>
    %30 = vector.extract_strided_slice %25 {offsets = [0, 64], sizes = [8, 32], strides = [1, 1]} : vector<8x96xf32> to vector<8x32xf32>
    %31 = arith.mulf %29, %12 : vector<8x32xf32>
    %32 = arith.mulf %28, %27 : vector<8x32xf32>
    %33 = arith.addf %31, %32 : vector<8x32xf32>
    %34 = math.tanh %33 : vector<8x32xf32>
    %35 = arith.mulf %30, %34 : vector<8x32xf32>
    %36 = arith.index_cast %14 : i32 to index
    %c0_21 = arith.constant 0 : index
    %37 = vector.load %arg18[%36, %c0_21] : memref<64x32xf32, #tpu.memory_space<vmem>>, vector<8x32xf32>
    tpu.vector_store %arg18[%36, %c0_21], %35 {strides = array<i32>} : memref<64x32xf32, #tpu.memory_space<vmem>>, vector<8x32xf32>,
    %c1_i32 = arith.constant 1 : i32
    %c8_i32_22 = arith.constant 8 : i32
    %38 = arith.muli %c1_i32, %c8_i32_22 : i32
    %39 = tpu.assume_multiple %38, 8 : i32
    %40 = arith.index_cast %39 : i32 to index
    %c0_23 = arith.constant 0 : index
    %41 = vector.load %arg17[%40, %c0_23] : memref<64x128xf32, #tpu.memory_space<vmem>>, vector<8x128xf32>
    %c0_24 = arith.constant 0 : index
    %c0_25 = arith.constant 0 : index
    %42 = vector.load %arg6[%c0_24, %c0_25] : memref<32x128xf32, #tpu.memory_space<vmem>>, vector<32x128xf32>
    %cst_26 = arith.constant dense<0.000000e+00> : vector<8x128xf32>
    %43 = tpu.matmul %35, %42, %cst_26 {dimension_numbers = #tpu.dot_dimension_numbers<[1], [0], [0], [1], [0, 0, 1, 1], [], []>} : vector<8x32xf32>, vector<32x128xf32>, vector<8x128xf32> -> vector<8x128xf32>
    %44 = arith.addf %41, %43 : vector<8x128xf32>
    %45 = vector.extract_strided_slice %44 {offsets = [0, 0], sizes = [8, 96], strides = [1, 1]} : vector<8x128xf32> to vector<8x96xf32>
    %46 = arith.negf %45 : vector<8x96xf32>
    %47 = math.exp %46 : vector<8x96xf32>
    %cst_27 = arith.constant 1.000000e+00 : f32
    %48 = vector.broadcast %cst_27 : f32 to vector<8x96xf32>
    %49 = arith.addf %48, %47 : vector<8x96xf32>
    %50 = arith.divf %48, %49 : vector<8x96xf32>
    %51 = vector.extract_strided_slice %44 {offsets = [0, 96], sizes = [8, 32], strides = [1, 1]} : vector<8x128xf32> to vector<8x32xf32>
    %52 = math.tanh %51 : vector<8x32xf32>
    %53 = vector.extract_strided_slice %50 {offsets = [0, 0], sizes = [8, 32], strides = [1, 1]} : vector<8x96xf32> to vector<8x32xf32>
    %54 = vector.extract_strided_slice %50 {offsets = [0, 32], sizes = [8, 32], strides = [1, 1]} : vector<8x96xf32> to vector<8x32xf32>
    %55 = vector.extract_strided_slice %50 {offsets = [0, 64], sizes = [8, 32], strides = [1, 1]} : vector<8x96xf32> to vector<8x32xf32>
    %56 = arith.mulf %54, %33 : vector<8x32xf32>
    %57 = arith.mulf %53, %52 : vector<8x32xf32>
    %58 = arith.addf %56, %57 : vector<8x32xf32>
    %59 = math.tanh %58 : vector<8x32xf32>
    %60 = arith.mulf %55, %59 : vector<8x32xf32>
    %61 = arith.index_cast %39 : i32 to index
    %c0_28 = arith.constant 0 : index
    %62 = vector.load %arg18[%61, %c0_28] : memref<64x32xf32, #tpu.memory_space<vmem>>, vector<8x32xf32>
    tpu.vector_store %arg18[%61, %c0_28], %60 {strides = array<i32>} : memref<64x32xf32, #tpu.memory_space<vmem>>, vector<8x32xf32>,
    %c2_i32 = arith.constant 2 : i32
    %c8_i32_29 = arith.constant 8 : i32
    %63 = arith.muli %c2_i32, %c8_i32_29 : i32
    %64 = tpu.assume_multiple %63, 8 : i32
    %65 = arith.index_cast %64 : i32 to index
    %c0_30 = arith.constant 0 : index
    %66 = vector.load %arg17[%65, %c0_30] : memref<64x128xf32, #tpu.memory_space<vmem>>, vector<8x128xf32>
    %c0_31 = arith.constant 0 : index
    %c0_32 = arith.constant 0 : index
    %67 = vector.load %arg6[%c0_31, %c0_32] : memref<32x128xf32, #tpu.memory_space<vmem>>, vector<32x128xf32>
    %cst_33 = arith.constant dense<0.000000e+00> : vector<8x128xf32>
    %68 = tpu.matmul %60, %67, %cst_33 {dimension_numbers = #tpu.dot_dimension_numbers<[1], [0], [0], [1], [0, 0, 1, 1], [], []>} : vector<8x32xf32>, vector<32x128xf32>, vector<8x128xf32> -> vector<8x128xf32>
    %69 = arith.addf %66, %68 : vector<8x128xf32>
    %70 = vector.extract_strided_slice %69 {offsets = [0, 0], sizes = [8, 96], strides = [1, 1]} : vector<8x128xf32> to vector<8x96xf32>
    %71 = arith.negf %70 : vector<8x96xf32>
    %72 = math.exp %71 : vector<8x96xf32>
    %cst_34 = arith.constant 1.000000e+00 : f32
    %73 = vector.broadcast %cst_34 : f32 to vector<8x96xf32>
    %74 = arith.addf %73, %72 : vector<8x96xf32>
    %75 = arith.divf %73, %74 : vector<8x96xf32>
    %76 = vector.extract_strided_slice %69 {offsets = [0, 96], sizes = [8, 32], strides = [1, 1]} : vector<8x128xf32> to vector<8x32xf32>
    %77 = math.tanh %76 : vector<8x32xf32>
    %78 = vector.extract_strided_slice %75 {offsets = [0, 0], sizes = [8, 32], strides = [1, 1]} : vector<8x96xf32> to vector<8x32xf32>
    %79 = vector.extract_strided_slice %75 {offsets = [0, 32], sizes = [8, 32], strides = [1, 1]} : vector<8x96xf32> to vector<8x32xf32>
    %80 = vector.extract_strided_slice %75 {offsets = [0, 64], sizes = [8, 32], strides = [1, 1]} : vector<8x96xf32> to vector<8x32xf32>
    %81 = arith.mulf %79, %58 : vector<8x32xf32>
    %82 = arith.mulf %78, %77 : vector<8x32xf32>
    %83 = arith.addf %81, %82 : vector<8x32xf32>
    %84 = math.tanh %83 : vector<8x32xf32>
    %85 = arith.mulf %80, %84 : vector<8x32xf32>
    %86 = arith.index_cast %64 : i32 to index
    %c0_35 = arith.constant 0 : index
    %87 = vector.load %arg18[%86, %c0_35] : memref<64x32xf32, #tpu.memory_space<vmem>>, vector<8x32xf32>
    tpu.vector_store %arg18[%86, %c0_35], %85 {strides = array<i32>} : memref<64x32xf32, #tpu.memory_space<vmem>>, vector<8x32xf32>,
    %c3_i32 = arith.constant 3 : i32
    %c8_i32_36 = arith.constant 8 : i32
    %88 = arith.muli %c3_i32, %c8_i32_36 : i32
    %89 = tpu.assume_multiple %88, 8 : i32
    %90 = arith.index_cast %89 : i32 to index
    %c0_37 = arith.constant 0 : index
    %91 = vector.load %arg17[%90, %c0_37] : memref<64x128xf32, #tpu.memory_space<vmem>>, vector<8x128xf32>
    %c0_38 = arith.constant 0 : index
    %c0_39 = arith.constant 0 : index
    %92 = vector.load %arg6[%c0_38, %c0_39] : memref<32x128xf32, #tpu.memory_space<vmem>>, vector<32x128xf32>
    %cst_40 = arith.constant dense<0.000000e+00> : vector<8x128xf32>
    %93 = tpu.matmul %85, %92, %cst_40 {dimension_numbers = #tpu.dot_dimension_numbers<[1], [0], [0], [1], [0, 0, 1, 1], [], []>} : vector<8x32xf32>, vector<32x128xf32>, vector<8x128xf32> -> vector<8x128xf32>
    %94 = arith.addf %91, %93 : vector<8x128xf32>
    %95 = vector.extract_strided_slice %94 {offsets = [0, 0], sizes = [8, 96], strides = [1, 1]} : vector<8x128xf32> to vector<8x96xf32>
    %96 = arith.negf %95 : vector<8x96xf32>
    %97 = math.exp %96 : vector<8x96xf32>
    %cst_41 = arith.constant 1.000000e+00 : f32
    %98 = vector.broadcast %cst_41 : f32 to vector<8x96xf32>
    %99 = arith.addf %98, %97 : vector<8x96xf32>
    %100 = arith.divf %98, %99 : vector<8x96xf32>
    %101 = vector.extract_strided_slice %94 {offsets = [0, 96], sizes = [8, 32], strides = [1, 1]} : vector<8x128xf32> to vector<8x32xf32>
    %102 = math.tanh %101 : vector<8x32xf32>
    %103 = vector.extract_strided_slice %100 {offsets = [0, 0], sizes = [8, 32], strides = [1, 1]} : vector<8x96xf32> to vector<8x32xf32>
    %104 = vector.extract_strided_slice %100 {offsets = [0, 32], sizes = [8, 32], strides = [1, 1]} : vector<8x96xf32> to vector<8x32xf32>
    %105 = vector.extract_strided_slice %100 {offsets = [0, 64], sizes = [8, 32], strides = [1, 1]} : vector<8x96xf32> to vector<8x32xf32>
    %106 = arith.mulf %104, %83 : vector<8x32xf32>
    %107 = arith.mulf %103, %102 : vector<8x32xf32>
    %108 = arith.addf %106, %107 : vector<8x32xf32>
    %109 = math.tanh %108 : vector<8x32xf32>
    %110 = arith.mulf %105, %109 : vector<8x32xf32>
    %111 = arith.index_cast %89 : i32 to index
    %c0_42 = arith.constant 0 : index
    %112 = vector.load %arg18[%111, %c0_42] : memref<64x32xf32, #tpu.memory_space<vmem>>, vector<8x32xf32>
    tpu.vector_store %arg18[%111, %c0_42], %110 {strides = array<i32>} : memref<64x32xf32, #tpu.memory_space<vmem>>, vector<8x32xf32>,
    %c4_i32 = arith.constant 4 : i32
    %c8_i32_43 = arith.constant 8 : i32
    %113 = arith.muli %c4_i32, %c8_i32_43 : i32
    %114 = tpu.assume_multiple %113, 8 : i32
    %115 = arith.index_cast %114 : i32 to index
    %c0_44 = arith.constant 0 : index
    %116 = vector.load %arg17[%115, %c0_44] : memref<64x128xf32, #tpu.memory_space<vmem>>, vector<8x128xf32>
    %c0_45 = arith.constant 0 : index
    %c0_46 = arith.constant 0 : index
    %117 = vector.load %arg6[%c0_45, %c0_46] : memref<32x128xf32, #tpu.memory_space<vmem>>, vector<32x128xf32>
    %cst_47 = arith.constant dense<0.000000e+00> : vector<8x128xf32>
    %118 = tpu.matmul %110, %117, %cst_47 {dimension_numbers = #tpu.dot_dimension_numbers<[1], [0], [0], [1], [0, 0, 1, 1], [], []>} : vector<8x32xf32>, vector<32x128xf32>, vector<8x128xf32> -> vector<8x128xf32>
    %119 = arith.addf %116, %118 : vector<8x128xf32>
    %120 = vector.extract_strided_slice %119 {offsets = [0, 0], sizes = [8, 96], strides = [1, 1]} : vector<8x128xf32> to vector<8x96xf32>
    %121 = arith.negf %120 : vector<8x96xf32>
    %122 = math.exp %121 : vector<8x96xf32>
    %cst_48 = arith.constant 1.000000e+00 : f32
    %123 = vector.broadcast %cst_48 : f32 to vector<8x96xf32>
    %124 = arith.addf %123, %122 : vector<8x96xf32>
    %125 = arith.divf %123, %124 : vector<8x96xf32>
    %126 = vector.extract_strided_slice %119 {offsets = [0, 96], sizes = [8, 32], strides = [1, 1]} : vector<8x128xf32> to vector<8x32xf32>
    %127 = math.tanh %126 : vector<8x32xf32>
    %128 = vector.extract_strided_slice %125 {offsets = [0, 0], sizes = [8, 32], strides = [1, 1]} : vector<8x96xf32> to vector<8x32xf32>
    %129 = vector.extract_strided_slice %125 {offsets = [0, 32], sizes = [8, 32], strides = [1, 1]} : vector<8x96xf32> to vector<8x32xf32>
    %130 = vector.extract_strided_slice %125 {offsets = [0, 64], sizes = [8, 32], strides = [1, 1]} : vector<8x96xf32> to vector<8x32xf32>
    %131 = arith.mulf %129, %108 : vector<8x32xf32>
    %132 = arith.mulf %128, %127 : vector<8x32xf32>
    %133 = arith.addf %131, %132 : vector<8x32xf32>
    %134 = math.tanh %133 : vector<8x32xf32>
    %135 = arith.mulf %130, %134 : vector<8x32xf32>
    %136 = arith.index_cast %114 : i32 to index
    %c0_49 = arith.constant 0 : index
    %137 = vector.load %arg18[%136, %c0_49] : memref<64x32xf32, #tpu.memory_space<vmem>>, vector<8x32xf32>
    tpu.vector_store %arg18[%136, %c0_49], %135 {strides = array<i32>} : memref<64x32xf32, #tpu.memory_space<vmem>>, vector<8x32xf32>,
    %c5_i32 = arith.constant 5 : i32
    %c8_i32_50 = arith.constant 8 : i32
    %138 = arith.muli %c5_i32, %c8_i32_50 : i32
    %139 = tpu.assume_multiple %138, 8 : i32
    %140 = arith.index_cast %139 : i32 to index
    %c0_51 = arith.constant 0 : index
    %141 = vector.load %arg17[%140, %c0_51] : memref<64x128xf32, #tpu.memory_space<vmem>>, vector<8x128xf32>
    %c0_52 = arith.constant 0 : index
    %c0_53 = arith.constant 0 : index
    %142 = vector.load %arg6[%c0_52, %c0_53] : memref<32x128xf32, #tpu.memory_space<vmem>>, vector<32x128xf32>
    %cst_54 = arith.constant dense<0.000000e+00> : vector<8x128xf32>
    %143 = tpu.matmul %135, %142, %cst_54 {dimension_numbers = #tpu.dot_dimension_numbers<[1], [0], [0], [1], [0, 0, 1, 1], [], []>} : vector<8x32xf32>, vector<32x128xf32>, vector<8x128xf32> -> vector<8x128xf32>
    %144 = arith.addf %141, %143 : vector<8x128xf32>
    %145 = vector.extract_strided_slice %144 {offsets = [0, 0], sizes = [8, 96], strides = [1, 1]} : vector<8x128xf32> to vector<8x96xf32>
    %146 = arith.negf %145 : vector<8x96xf32>
    %147 = math.exp %146 : vector<8x96xf32>
    %cst_55 = arith.constant 1.000000e+00 : f32
    %148 = vector.broadcast %cst_55 : f32 to vector<8x96xf32>
    %149 = arith.addf %148, %147 : vector<8x96xf32>
    %150 = arith.divf %148, %149 : vector<8x96xf32>
    %151 = vector.extract_strided_slice %144 {offsets = [0, 96], sizes = [8, 32], strides = [1, 1]} : vector<8x128xf32> to vector<8x32xf32>
    %152 = math.tanh %151 : vector<8x32xf32>
    %153 = vector.extract_strided_slice %150 {offsets = [0, 0], sizes = [8, 32], strides = [1, 1]} : vector<8x96xf32> to vector<8x32xf32>
    %154 = vector.extract_strided_slice %150 {offsets = [0, 32], sizes = [8, 32], strides = [1, 1]} : vector<8x96xf32> to vector<8x32xf32>
    %155 = vector.extract_strided_slice %150 {offsets = [0, 64], sizes = [8, 32], strides = [1, 1]} : vector<8x96xf32> to vector<8x32xf32>
    %156 = arith.mulf %154, %133 : vector<8x32xf32>
    %157 = arith.mulf %153, %152 : vector<8x32xf32>
    %158 = arith.addf %156, %157 : vector<8x32xf32>
    %159 = math.tanh %158 : vector<8x32xf32>
    %160 = arith.mulf %155, %159 : vector<8x32xf32>
    %161 = arith.index_cast %139 : i32 to index
    %c0_56 = arith.constant 0 : index
    %162 = vector.load %arg18[%161, %c0_56] : memref<64x32xf32, #tpu.memory_space<vmem>>, vector<8x32xf32>
    tpu.vector_store %arg18[%161, %c0_56], %160 {strides = array<i32>} : memref<64x32xf32, #tpu.memory_space<vmem>>, vector<8x32xf32>,
    %c6_i32 = arith.constant 6 : i32
    %c8_i32_57 = arith.constant 8 : i32
    %163 = arith.muli %c6_i32, %c8_i32_57 : i32
    %164 = tpu.assume_multiple %163, 8 : i32
    %165 = arith.index_cast %164 : i32 to index
    %c0_58 = arith.constant 0 : index
    %166 = vector.load %arg17[%165, %c0_58] : memref<64x128xf32, #tpu.memory_space<vmem>>, vector<8x128xf32>
    %c0_59 = arith.constant 0 : index
    %c0_60 = arith.constant 0 : index
    %167 = vector.load %arg6[%c0_59, %c0_60] : memref<32x128xf32, #tpu.memory_space<vmem>>, vector<32x128xf32>
    %cst_61 = arith.constant dense<0.000000e+00> : vector<8x128xf32>
    %168 = tpu.matmul %160, %167, %cst_61 {dimension_numbers = #tpu.dot_dimension_numbers<[1], [0], [0], [1], [0, 0, 1, 1], [], []>} : vector<8x32xf32>, vector<32x128xf32>, vector<8x128xf32> -> vector<8x128xf32>
    %169 = arith.addf %166, %168 : vector<8x128xf32>
    %170 = vector.extract_strided_slice %169 {offsets = [0, 0], sizes = [8, 96], strides = [1, 1]} : vector<8x128xf32> to vector<8x96xf32>
    %171 = arith.negf %170 : vector<8x96xf32>
    %172 = math.exp %171 : vector<8x96xf32>
    %cst_62 = arith.constant 1.000000e+00 : f32
    %173 = vector.broadcast %cst_62 : f32 to vector<8x96xf32>
    %174 = arith.addf %173, %172 : vector<8x96xf32>
    %175 = arith.divf %173, %174 : vector<8x96xf32>
    %176 = vector.extract_strided_slice %169 {offsets = [0, 96], sizes = [8, 32], strides = [1, 1]} : vector<8x128xf32> to vector<8x32xf32>
    %177 = math.tanh %176 : vector<8x32xf32>
    %178 = vector.extract_strided_slice %175 {offsets = [0, 0], sizes = [8, 32], strides = [1, 1]} : vector<8x96xf32> to vector<8x32xf32>
    %179 = vector.extract_strided_slice %175 {offsets = [0, 32], sizes = [8, 32], strides = [1, 1]} : vector<8x96xf32> to vector<8x32xf32>
    %180 = vector.extract_strided_slice %175 {offsets = [0, 64], sizes = [8, 32], strides = [1, 1]} : vector<8x96xf32> to vector<8x32xf32>
    %181 = arith.mulf %179, %158 : vector<8x32xf32>
    %182 = arith.mulf %178, %177 : vector<8x32xf32>
    %183 = arith.addf %181, %182 : vector<8x32xf32>
    %184 = math.tanh %183 : vector<8x32xf32>
    %185 = arith.mulf %180, %184 : vector<8x32xf32>
    %186 = arith.index_cast %164 : i32 to index
    %c0_63 = arith.constant 0 : index
    %187 = vector.load %arg18[%186, %c0_63] : memref<64x32xf32, #tpu.memory_space<vmem>>, vector<8x32xf32>
    tpu.vector_store %arg18[%186, %c0_63], %185 {strides = array<i32>} : memref<64x32xf32, #tpu.memory_space<vmem>>, vector<8x32xf32>,
    %c7_i32 = arith.constant 7 : i32
    %c8_i32_64 = arith.constant 8 : i32
    %188 = arith.muli %c7_i32, %c8_i32_64 : i32
    %189 = tpu.assume_multiple %188, 8 : i32
    %190 = arith.index_cast %189 : i32 to index
    %c0_65 = arith.constant 0 : index
    %191 = vector.load %arg17[%190, %c0_65] : memref<64x128xf32, #tpu.memory_space<vmem>>, vector<8x128xf32>
    %c0_66 = arith.constant 0 : index
    %c0_67 = arith.constant 0 : index
    %192 = vector.load %arg6[%c0_66, %c0_67] : memref<32x128xf32, #tpu.memory_space<vmem>>, vector<32x128xf32>
    %cst_68 = arith.constant dense<0.000000e+00> : vector<8x128xf32>
    %193 = tpu.matmul %185, %192, %cst_68 {dimension_numbers = #tpu.dot_dimension_numbers<[1], [0], [0], [1], [0, 0, 1, 1], [], []>} : vector<8x32xf32>, vector<32x128xf32>, vector<8x128xf32> -> vector<8x128xf32>
    %194 = arith.addf %191, %193 : vector<8x128xf32>
    %195 = vector.extract_strided_slice %194 {offsets = [0, 0], sizes = [8, 96], strides = [1, 1]} : vector<8x128xf32> to vector<8x96xf32>
    %196 = arith.negf %195 : vector<8x96xf32>
    %197 = math.exp %196 : vector<8x96xf32>
    %cst_69 = arith.constant 1.000000e+00 : f32
    %198 = vector.broadcast %cst_69 : f32 to vector<8x96xf32>
    %199 = arith.addf %198, %197 : vector<8x96xf32>
    %200 = arith.divf %198, %199 : vector<8x96xf32>
    %201 = vector.extract_strided_slice %194 {offsets = [0, 96], sizes = [8, 32], strides = [1, 1]} : vector<8x128xf32> to vector<8x32xf32>
    %202 = math.tanh %201 : vector<8x32xf32>
    %203 = vector.extract_strided_slice %200 {offsets = [0, 0], sizes = [8, 32], strides = [1, 1]} : vector<8x96xf32> to vector<8x32xf32>
    %204 = vector.extract_strided_slice %200 {offsets = [0, 32], sizes = [8, 32], strides = [1, 1]} : vector<8x96xf32> to vector<8x32xf32>
    %205 = vector.extract_strided_slice %200 {offsets = [0, 64], sizes = [8, 32], strides = [1, 1]} : vector<8x96xf32> to vector<8x32xf32>
    %206 = arith.mulf %204, %183 : vector<8x32xf32>
    %207 = arith.mulf %203, %202 : vector<8x32xf32>
    %208 = arith.addf %206, %207 : vector<8x32xf32>
    %209 = math.tanh %208 : vector<8x32xf32>
    %210 = arith.mulf %205, %209 : vector<8x32xf32>
    %211 = arith.index_cast %189 : i32 to index
    %c0_70 = arith.constant 0 : index
    %212 = vector.load %arg18[%211, %c0_70] : memref<64x32xf32, #tpu.memory_space<vmem>>, vector<8x32xf32>
    tpu.vector_store %arg18[%211, %c0_70], %210 {strides = array<i32>} : memref<64x32xf32, #tpu.memory_space<vmem>>, vector<8x32xf32>,
    %c8_i32_71 = arith.constant 8 : i32
    %c0_72 = arith.constant 0 : index
    %c0_73 = arith.constant 0 : index
    %213 = vector.load %arg18[%c0_72, %c0_73] : memref<64x32xf32, #tpu.memory_space<vmem>>, vector<64x32xf32>
    %c0_74 = arith.constant 0 : index
    %c0_75 = arith.constant 0 : index
    %214 = vector.load %arg7[%c0_74, %c0_75] : memref<32x128xf32, #tpu.memory_space<vmem>>, vector<32x128xf32>
    %cst_76 = arith.constant dense<0.000000e+00> : vector<64x128xf32>
    %215 = tpu.matmul %213, %214, %cst_76 {dimension_numbers = #tpu.dot_dimension_numbers<[1], [0], [0], [1], [0, 0, 1, 1], [], []>} : vector<64x32xf32>, vector<32x128xf32>, vector<64x128xf32> -> vector<64x128xf32>
    %c0_77 = arith.constant 0 : index
    %c0_78 = arith.constant 0 : index
    %216 = vector.load %arg9[%c0_77, %c0_78] : memref<1x128xf32, #tpu.memory_space<vmem>>, vector<1x128xf32>
    %217 = vector.broadcast %216 : vector<1x128xf32> to vector<64x128xf32>
    %218 = arith.addf %215, %217 : vector<64x128xf32>
    %c0_79 = arith.constant 0 : index
    %c0_80 = arith.constant 0 : index
    %219 = vector.load %arg14[%c0_79, %c0_80] : memref<64x128xf32, #tpu.memory_space<vmem>>, vector<64x128xf32>
    tpu.vector_store %arg14[%c0_79, %c0_80], %218 {strides = array<i32>} : memref<64x128xf32, #tpu.memory_space<vmem>>, vector<64x128xf32>,
    %c0_81 = arith.constant 0 : index
    %c0_82 = arith.constant 0 : index
    %220 = vector.load %arg18[%c0_81, %c0_82] : memref<64x32xf32, #tpu.memory_space<vmem>>, vector<64x32xf32>
    %c0_83 = arith.constant 0 : index
    %c0_84 = arith.constant 0 : index
    %221 = vector.load %arg8[%c0_83, %c0_84] : memref<32x128xf32, #tpu.memory_space<vmem>>, vector<32x128xf32>
    %cst_85 = arith.constant dense<0.000000e+00> : vector<64x128xf32>
    %222 = tpu.matmul %220, %221, %cst_85 {dimension_numbers = #tpu.dot_dimension_numbers<[1], [0], [0], [1], [0, 0, 1, 1], [], []>} : vector<64x32xf32>, vector<32x128xf32>, vector<64x128xf32> -> vector<64x128xf32>
    %c0_86 = arith.constant 0 : index
    %c0_87 = arith.constant 0 : index
    %223 = vector.load %arg19[%c0_86, %c0_87] : memref<64x128xf32, #tpu.memory_space<vmem>>, vector<64x128xf32>
    tpu.vector_store %arg19[%c0_86, %c0_87], %222 {strides = array<i32>} : memref<64x128xf32, #tpu.memory_space<vmem>>, vector<64x128xf32>,
    %c0_i32_88 = arith.constant 0 : i32
    %c8_i32_89 = arith.constant 8 : i32
    %224 = arith.muli %c0_i32_88, %c8_i32_89 : i32
    %225 = tpu.assume_multiple %224, 8 : i32
    %c7_i32_90 = arith.constant 7 : i32
    %226 = arith.subi %c7_i32_90, %c0_i32_88 : i32
    %c8_i32_91 = arith.constant 8 : i32
    %227 = arith.muli %226, %c8_i32_91 : i32
    %228 = tpu.assume_multiple %227, 8 : i32
    %229 = arith.index_cast %225 : i32 to index
    %c0_92 = arith.constant 0 : index
    %230 = vector.load %arg14[%229, %c0_92] : memref<64x128xf32, #tpu.memory_space<vmem>>, vector<8x128xf32>
    %231 = arith.index_cast %228 : i32 to index
    %c0_93 = arith.constant 0 : index
    %232 = vector.load %arg19[%231, %c0_93] : memref<64x128xf32, #tpu.memory_space<vmem>>, vector<8x128xf32>
    %233 = arith.addf %230, %232 : vector<8x128xf32>
    %234 = arith.index_cast %225 : i32 to index
    %c0_94 = arith.constant 0 : index
    %235 = vector.load %arg14[%234, %c0_94] : memref<64x128xf32, #tpu.memory_space<vmem>>, vector<8x128xf32>
    tpu.vector_store %arg14[%234, %c0_94], %233 {strides = array<i32>} : memref<64x128xf32, #tpu.memory_space<vmem>>, vector<8x128xf32>,
    %c1_i32_95 = arith.constant 1 : i32
    %c8_i32_96 = arith.constant 8 : i32
    %236 = arith.muli %c1_i32_95, %c8_i32_96 : i32
    %237 = tpu.assume_multiple %236, 8 : i32
    %c7_i32_97 = arith.constant 7 : i32
    %238 = arith.subi %c7_i32_97, %c1_i32_95 : i32
    %c8_i32_98 = arith.constant 8 : i32
    %239 = arith.muli %238, %c8_i32_98 : i32
    %240 = tpu.assume_multiple %239, 8 : i32
    %241 = arith.index_cast %237 : i32 to index
    %c0_99 = arith.constant 0 : index
    %242 = vector.load %arg14[%241, %c0_99] : memref<64x128xf32, #tpu.memory_space<vmem>>, vector<8x128xf32>
    %243 = arith.index_cast %240 : i32 to index
    %c0_100 = arith.constant 0 : index
    %244 = vector.load %arg19[%243, %c0_100] : memref<64x128xf32, #tpu.memory_space<vmem>>, vector<8x128xf32>
    %245 = arith.addf %242, %244 : vector<8x128xf32>
    %246 = arith.index_cast %237 : i32 to index
    %c0_101 = arith.constant 0 : index
    %247 = vector.load %arg14[%246, %c0_101] : memref<64x128xf32, #tpu.memory_space<vmem>>, vector<8x128xf32>
    tpu.vector_store %arg14[%246, %c0_101], %245 {strides = array<i32>} : memref<64x128xf32, #tpu.memory_space<vmem>>, vector<8x128xf32>,
    %c2_i32_102 = arith.constant 2 : i32
    %c8_i32_103 = arith.constant 8 : i32
    %248 = arith.muli %c2_i32_102, %c8_i32_103 : i32
    %249 = tpu.assume_multiple %248, 8 : i32
    %c7_i32_104 = arith.constant 7 : i32
    %250 = arith.subi %c7_i32_104, %c2_i32_102 : i32
    %c8_i32_105 = arith.constant 8 : i32
    %251 = arith.muli %250, %c8_i32_105 : i32
    %252 = tpu.assume_multiple %251, 8 : i32
    %253 = arith.index_cast %249 : i32 to index
    %c0_106 = arith.constant 0 : index
    %254 = vector.load %arg14[%253, %c0_106] : memref<64x128xf32, #tpu.memory_space<vmem>>, vector<8x128xf32>
    %255 = arith.index_cast %252 : i32 to index
    %c0_107 = arith.constant 0 : index
    %256 = vector.load %arg19[%255, %c0_107] : memref<64x128xf32, #tpu.memory_space<vmem>>, vector<8x128xf32>
    %257 = arith.addf %254, %256 : vector<8x128xf32>
    %258 = arith.index_cast %249 : i32 to index
    %c0_108 = arith.constant 0 : index
    %259 = vector.load %arg14[%258, %c0_108] : memref<64x128xf32, #tpu.memory_space<vmem>>, vector<8x128xf32>
    tpu.vector_store %arg14[%258, %c0_108], %257 {strides = array<i32>} : memref<64x128xf32, #tpu.memory_space<vmem>>, vector<8x128xf32>,
    %c3_i32_109 = arith.constant 3 : i32
    %c8_i32_110 = arith.constant 8 : i32
    %260 = arith.muli %c3_i32_109, %c8_i32_110 : i32
    %261 = tpu.assume_multiple %260, 8 : i32
    %c7_i32_111 = arith.constant 7 : i32
    %262 = arith.subi %c7_i32_111, %c3_i32_109 : i32
    %c8_i32_112 = arith.constant 8 : i32
    %263 = arith.muli %262, %c8_i32_112 : i32
    %264 = tpu.assume_multiple %263, 8 : i32
    %265 = arith.index_cast %261 : i32 to index
    %c0_113 = arith.constant 0 : index
    %266 = vector.load %arg14[%265, %c0_113] : memref<64x128xf32, #tpu.memory_space<vmem>>, vector<8x128xf32>
    %267 = arith.index_cast %264 : i32 to index
    %c0_114 = arith.constant 0 : index
    %268 = vector.load %arg19[%267, %c0_114] : memref<64x128xf32, #tpu.memory_space<vmem>>, vector<8x128xf32>
    %269 = arith.addf %266, %268 : vector<8x128xf32>
    %270 = arith.index_cast %261 : i32 to index
    %c0_115 = arith.constant 0 : index
    %271 = vector.load %arg14[%270, %c0_115] : memref<64x128xf32, #tpu.memory_space<vmem>>, vector<8x128xf32>
    tpu.vector_store %arg14[%270, %c0_115], %269 {strides = array<i32>} : memref<64x128xf32, #tpu.memory_space<vmem>>, vector<8x128xf32>,
    %c4_i32_116 = arith.constant 4 : i32
    %c8_i32_117 = arith.constant 8 : i32
    %272 = arith.muli %c4_i32_116, %c8_i32_117 : i32
    %273 = tpu.assume_multiple %272, 8 : i32
    %c7_i32_118 = arith.constant 7 : i32
    %274 = arith.subi %c7_i32_118, %c4_i32_116 : i32
    %c8_i32_119 = arith.constant 8 : i32
    %275 = arith.muli %274, %c8_i32_119 : i32
    %276 = tpu.assume_multiple %275, 8 : i32
    %277 = arith.index_cast %273 : i32 to index
    %c0_120 = arith.constant 0 : index
    %278 = vector.load %arg14[%277, %c0_120] : memref<64x128xf32, #tpu.memory_space<vmem>>, vector<8x128xf32>
    %279 = arith.index_cast %276 : i32 to index
    %c0_121 = arith.constant 0 : index
    %280 = vector.load %arg19[%279, %c0_121] : memref<64x128xf32, #tpu.memory_space<vmem>>, vector<8x128xf32>
    %281 = arith.addf %278, %280 : vector<8x128xf32>
    %282 = arith.index_cast %273 : i32 to index
    %c0_122 = arith.constant 0 : index
    %283 = vector.load %arg14[%282, %c0_122] : memref<64x128xf32, #tpu.memory_space<vmem>>, vector<8x128xf32>
    tpu.vector_store %arg14[%282, %c0_122], %281 {strides = array<i32>} : memref<64x128xf32, #tpu.memory_space<vmem>>, vector<8x128xf32>,
    %c5_i32_123 = arith.constant 5 : i32
    %c8_i32_124 = arith.constant 8 : i32
    %284 = arith.muli %c5_i32_123, %c8_i32_124 : i32
    %285 = tpu.assume_multiple %284, 8 : i32
    %c7_i32_125 = arith.constant 7 : i32
    %286 = arith.subi %c7_i32_125, %c5_i32_123 : i32
    %c8_i32_126 = arith.constant 8 : i32
    %287 = arith.muli %286, %c8_i32_126 : i32
    %288 = tpu.assume_multiple %287, 8 : i32
    %289 = arith.index_cast %285 : i32 to index
    %c0_127 = arith.constant 0 : index
    %290 = vector.load %arg14[%289, %c0_127] : memref<64x128xf32, #tpu.memory_space<vmem>>, vector<8x128xf32>
    %291 = arith.index_cast %288 : i32 to index
    %c0_128 = arith.constant 0 : index
    %292 = vector.load %arg19[%291, %c0_128] : memref<64x128xf32, #tpu.memory_space<vmem>>, vector<8x128xf32>
    %293 = arith.addf %290, %292 : vector<8x128xf32>
    %294 = arith.index_cast %285 : i32 to index
    %c0_129 = arith.constant 0 : index
    %295 = vector.load %arg14[%294, %c0_129] : memref<64x128xf32, #tpu.memory_space<vmem>>, vector<8x128xf32>
    tpu.vector_store %arg14[%294, %c0_129], %293 {strides = array<i32>} : memref<64x128xf32, #tpu.memory_space<vmem>>, vector<8x128xf32>,
    %c6_i32_130 = arith.constant 6 : i32
    %c8_i32_131 = arith.constant 8 : i32
    %296 = arith.muli %c6_i32_130, %c8_i32_131 : i32
    %297 = tpu.assume_multiple %296, 8 : i32
    %c7_i32_132 = arith.constant 7 : i32
    %298 = arith.subi %c7_i32_132, %c6_i32_130 : i32
    %c8_i32_133 = arith.constant 8 : i32
    %299 = arith.muli %298, %c8_i32_133 : i32
    %300 = tpu.assume_multiple %299, 8 : i32
    %301 = arith.index_cast %297 : i32 to index
    %c0_134 = arith.constant 0 : index
    %302 = vector.load %arg14[%301, %c0_134] : memref<64x128xf32, #tpu.memory_space<vmem>>, vector<8x128xf32>
    %303 = arith.index_cast %300 : i32 to index
    %c0_135 = arith.constant 0 : index
    %304 = vector.load %arg19[%303, %c0_135] : memref<64x128xf32, #tpu.memory_space<vmem>>, vector<8x128xf32>
    %305 = arith.addf %302, %304 : vector<8x128xf32>
    %306 = arith.index_cast %297 : i32 to index
    %c0_136 = arith.constant 0 : index
    %307 = vector.load %arg14[%306, %c0_136] : memref<64x128xf32, #tpu.memory_space<vmem>>, vector<8x128xf32>
    tpu.vector_store %arg14[%306, %c0_136], %305 {strides = array<i32>} : memref<64x128xf32, #tpu.memory_space<vmem>>, vector<8x128xf32>,
    %c7_i32_137 = arith.constant 7 : i32
    %c8_i32_138 = arith.constant 8 : i32
    %308 = arith.muli %c7_i32_137, %c8_i32_138 : i32
    %309 = tpu.assume_multiple %308, 8 : i32
    %c7_i32_139 = arith.constant 7 : i32
    %310 = arith.subi %c7_i32_139, %c7_i32_137 : i32
    %c8_i32_140 = arith.constant 8 : i32
    %311 = arith.muli %310, %c8_i32_140 : i32
    %312 = tpu.assume_multiple %311, 8 : i32
    %313 = arith.index_cast %309 : i32 to index
    %c0_141 = arith.constant 0 : index
    %314 = vector.load %arg14[%313, %c0_141] : memref<64x128xf32, #tpu.memory_space<vmem>>, vector<8x128xf32>
    %315 = arith.index_cast %312 : i32 to index
    %c0_142 = arith.constant 0 : index
    %316 = vector.load %arg19[%315, %c0_142] : memref<64x128xf32, #tpu.memory_space<vmem>>, vector<8x128xf32>
    %317 = arith.addf %314, %316 : vector<8x128xf32>
    %318 = arith.index_cast %309 : i32 to index
    %c0_143 = arith.constant 0 : index
    %319 = vector.load %arg14[%318, %c0_143] : memref<64x128xf32, #tpu.memory_space<vmem>>, vector<8x128xf32>
    tpu.vector_store %arg14[%318, %c0_143], %317 {strides = array<i32>} : memref<64x128xf32, #tpu.memory_space<vmem>>, vector<8x128xf32>,
    %c8_i32_144 = arith.constant 8 : i32
    %320 = tpu.iota {dimensions = array<i32: 1>} : vector<1x8x128xi32>
    %321 = tpu.iota {dimensions = array<i32: 2>} : vector<1x8x128xi32>
    %322 = arith.cmpi eq, %320, %321 : vector<1x8x128xi32>
    %323 = tpu.iota {dimensions = array<i32: 1>} : vector<1x128xi32>
    %324 = tpu.iota {dimensions = array<i32: 1>} : vector<1x8x1xi32>
    %c0_145 = arith.constant 0 : index
    %c0_146 = arith.constant 0 : index
    %325 = vector.load %arg10[%c0_145, %c0_146] : memref<8x128xf32, #tpu.memory_space<vmem>>, vector<8x128xf32>
    %c3_i32_147 = arith.constant 3 : i32
    %326 = vector.broadcast %c3_i32_147 : i32 to vector<1x8x1xi32>
    %327 = arith.cmpi eq, %324, %326 : vector<1x8x1xi32>
    %cst_148 = arith.constant 0.000000e+00 : f32
    %cst_149 = arith.constant -1.000000e+04 : f32
    %328 = vector.broadcast %cst_148 : f32 to vector<1x8x1xf32>
    %329 = vector.broadcast %cst_149 : f32 to vector<1x8x1xf32>
    %330 = arith.select %327, %328, %329 : vector<1x8x1xi1>, vector<1x8x1xf32>
    %331 = vector.shape_cast %330 : vector<1x8x1xf32> to vector<1x8x1xf32>
    %332 = vector.broadcast %331 : vector<1x8x1xf32> to vector<8x8x1xf32>
    %c128_i32 = arith.constant 128 : i32
    %cst_150 = arith.constant -1.000000e+30 : f32
    %c0_i32_151 = arith.constant 0 : i32
    %c8_i32_152 = arith.constant 8 : i32
    %333 = arith.muli %c0_i32_151, %c8_i32_152 : i32
    %334 = tpu.assume_multiple %333, 8 : i32
    %335 = vector.shape_cast %325 : vector<8x128xf32> to vector<1x8x128xf32>
    %336 = vector.broadcast %335 : vector<1x8x128xf32> to vector<8x8x128xf32>
    %337 = vector.broadcast %332 : vector<8x8x1xf32> to vector<8x8x128xf32>
    %338 = arith.addf %336, %337 : vector<8x8x128xf32>
    %cst_153 = arith.constant dense<0xFF800000> : vector<8x128xf32>
    %339 = vector.multi_reduction <maximumf>, %338, %cst_153 [1] : vector<8x8x128xf32> to vector<8x128xf32>
    %340 = vector.shape_cast %339 : vector<8x128xf32> to vector<8x1x128xf32>
    %341 = vector.broadcast %340 : vector<8x1x128xf32> to vector<8x8x128xf32>
    %342 = arith.cmpf oge, %338, %341 : vector<8x8x128xf32>
    %343 = vector.shape_cast %320 : vector<1x8x128xi32> to vector<1x8x128xi32>
    %344 = vector.broadcast %343 : vector<1x8x128xi32> to vector<8x8x128xi32>
    %345 = vector.broadcast %c128_i32 : i32 to vector<8x8x128xi32>
    %346 = arith.select %342, %344, %345 : vector<8x8x128xi1>, vector<8x8x128xi32>
    %cst_154 = arith.constant dense<2147483647> : vector<8x128xi32>
    %347 = vector.multi_reduction <minsi>, %346, %cst_154 [1] : vector<8x8x128xi32> to vector<8x128xi32>
    %348 = arith.index_cast %334 : i32 to index
    %c0_155 = arith.constant 0 : index
    %349 = vector.load %arg20[%348, %c0_155] : memref<64x128xi32, #tpu.memory_space<vmem>>, vector<8x128xi32>
    tpu.vector_store %arg20[%348, %c0_155], %347 {strides = array<i32>} : memref<64x128xi32, #tpu.memory_space<vmem>>, vector<8x128xi32>,
    %350 = arith.index_cast %334 : i32 to index
    %c0_156 = arith.constant 0 : index
    %351 = vector.load %arg14[%350, %c0_156] : memref<64x128xf32, #tpu.memory_space<vmem>>, vector<8x128xf32>
    %352 = arith.addf %339, %351 : vector<8x128xf32>
    %353 = vector.shape_cast %352 : vector<8x128xf32> to vector<8x1x128xf32>
    %354 = vector.shape_cast %322 : vector<1x8x128xi1> to vector<1x8x128xi1>
    %355 = vector.broadcast %354 : vector<1x8x128xi1> to vector<8x8x128xi1>
    %356 = vector.shape_cast %353 : vector<8x1x128xf32> to vector<8x1x128xf32>
    %357 = vector.broadcast %356 : vector<8x1x128xf32> to vector<8x8x128xf32>
    %358 = vector.broadcast %cst_150 : f32 to vector<8x8x128xf32>
    %359 = arith.select %355, %357, %358 : vector<8x8x128xi1>, vector<8x8x128xf32>
    %cst_157 = arith.constant dense<0xFF800000> : vector<8x8xf32>
    %360 = vector.multi_reduction <maximumf>, %359, %cst_157 [2] : vector<8x8x128xf32> to vector<8x8xf32>
    %361 = vector.shape_cast %360 : vector<8x8xf32> to vector<8x8x1xf32>
    %c1_i32_158 = arith.constant 1 : i32
    %c8_i32_159 = arith.constant 8 : i32
    %362 = arith.muli %c1_i32_158, %c8_i32_159 : i32
    %363 = tpu.assume_multiple %362, 8 : i32
    %364 = vector.shape_cast %325 : vector<8x128xf32> to vector<1x8x128xf32>
    %365 = vector.broadcast %364 : vector<1x8x128xf32> to vector<8x8x128xf32>
    %366 = vector.broadcast %361 : vector<8x8x1xf32> to vector<8x8x128xf32>
    %367 = arith.addf %365, %366 : vector<8x8x128xf32>
    %cst_160 = arith.constant dense<0xFF800000> : vector<8x128xf32>
    %368 = vector.multi_reduction <maximumf>, %367, %cst_160 [1] : vector<8x8x128xf32> to vector<8x128xf32>
    %369 = vector.shape_cast %368 : vector<8x128xf32> to vector<8x1x128xf32>
    %370 = vector.broadcast %369 : vector<8x1x128xf32> to vector<8x8x128xf32>
    %371 = arith.cmpf oge, %367, %370 : vector<8x8x128xf32>
    %372 = vector.shape_cast %320 : vector<1x8x128xi32> to vector<1x8x128xi32>
    %373 = vector.broadcast %372 : vector<1x8x128xi32> to vector<8x8x128xi32>
    %374 = vector.broadcast %c128_i32 : i32 to vector<8x8x128xi32>
    %375 = arith.select %371, %373, %374 : vector<8x8x128xi1>, vector<8x8x128xi32>
    %cst_161 = arith.constant dense<2147483647> : vector<8x128xi32>
    %376 = vector.multi_reduction <minsi>, %375, %cst_161 [1] : vector<8x8x128xi32> to vector<8x128xi32>
    %377 = arith.index_cast %363 : i32 to index
    %c0_162 = arith.constant 0 : index
    %378 = vector.load %arg20[%377, %c0_162] : memref<64x128xi32, #tpu.memory_space<vmem>>, vector<8x128xi32>
    tpu.vector_store %arg20[%377, %c0_162], %376 {strides = array<i32>} : memref<64x128xi32, #tpu.memory_space<vmem>>, vector<8x128xi32>,
    %379 = arith.index_cast %363 : i32 to index
    %c0_163 = arith.constant 0 : index
    %380 = vector.load %arg14[%379, %c0_163] : memref<64x128xf32, #tpu.memory_space<vmem>>, vector<8x128xf32>
    %381 = arith.addf %368, %380 : vector<8x128xf32>
    %382 = vector.shape_cast %381 : vector<8x128xf32> to vector<8x1x128xf32>
    %383 = vector.shape_cast %322 : vector<1x8x128xi1> to vector<1x8x128xi1>
    %384 = vector.broadcast %383 : vector<1x8x128xi1> to vector<8x8x128xi1>
    %385 = vector.shape_cast %382 : vector<8x1x128xf32> to vector<8x1x128xf32>
    %386 = vector.broadcast %385 : vector<8x1x128xf32> to vector<8x8x128xf32>
    %387 = vector.broadcast %cst_150 : f32 to vector<8x8x128xf32>
    %388 = arith.select %384, %386, %387 : vector<8x8x128xi1>, vector<8x8x128xf32>
    %cst_164 = arith.constant dense<0xFF800000> : vector<8x8xf32>
    %389 = vector.multi_reduction <maximumf>, %388, %cst_164 [2] : vector<8x8x128xf32> to vector<8x8xf32>
    %390 = vector.shape_cast %389 : vector<8x8xf32> to vector<8x8x1xf32>
    %c2_i32_165 = arith.constant 2 : i32
    %c8_i32_166 = arith.constant 8 : i32
    %391 = arith.muli %c2_i32_165, %c8_i32_166 : i32
    %392 = tpu.assume_multiple %391, 8 : i32
    %393 = vector.shape_cast %325 : vector<8x128xf32> to vector<1x8x128xf32>
    %394 = vector.broadcast %393 : vector<1x8x128xf32> to vector<8x8x128xf32>
    %395 = vector.broadcast %390 : vector<8x8x1xf32> to vector<8x8x128xf32>
    %396 = arith.addf %394, %395 : vector<8x8x128xf32>
    %cst_167 = arith.constant dense<0xFF800000> : vector<8x128xf32>
    %397 = vector.multi_reduction <maximumf>, %396, %cst_167 [1] : vector<8x8x128xf32> to vector<8x128xf32>
    %398 = vector.shape_cast %397 : vector<8x128xf32> to vector<8x1x128xf32>
    %399 = vector.broadcast %398 : vector<8x1x128xf32> to vector<8x8x128xf32>
    %400 = arith.cmpf oge, %396, %399 : vector<8x8x128xf32>
    %401 = vector.shape_cast %320 : vector<1x8x128xi32> to vector<1x8x128xi32>
    %402 = vector.broadcast %401 : vector<1x8x128xi32> to vector<8x8x128xi32>
    %403 = vector.broadcast %c128_i32 : i32 to vector<8x8x128xi32>
    %404 = arith.select %400, %402, %403 : vector<8x8x128xi1>, vector<8x8x128xi32>
    %cst_168 = arith.constant dense<2147483647> : vector<8x128xi32>
    %405 = vector.multi_reduction <minsi>, %404, %cst_168 [1] : vector<8x8x128xi32> to vector<8x128xi32>
    %406 = arith.index_cast %392 : i32 to index
    %c0_169 = arith.constant 0 : index
    %407 = vector.load %arg20[%406, %c0_169] : memref<64x128xi32, #tpu.memory_space<vmem>>, vector<8x128xi32>
    tpu.vector_store %arg20[%406, %c0_169], %405 {strides = array<i32>} : memref<64x128xi32, #tpu.memory_space<vmem>>, vector<8x128xi32>,
    %408 = arith.index_cast %392 : i32 to index
    %c0_170 = arith.constant 0 : index
    %409 = vector.load %arg14[%408, %c0_170] : memref<64x128xf32, #tpu.memory_space<vmem>>, vector<8x128xf32>
    %410 = arith.addf %397, %409 : vector<8x128xf32>
    %411 = vector.shape_cast %410 : vector<8x128xf32> to vector<8x1x128xf32>
    %412 = vector.shape_cast %322 : vector<1x8x128xi1> to vector<1x8x128xi1>
    %413 = vector.broadcast %412 : vector<1x8x128xi1> to vector<8x8x128xi1>
    %414 = vector.shape_cast %411 : vector<8x1x128xf32> to vector<8x1x128xf32>
    %415 = vector.broadcast %414 : vector<8x1x128xf32> to vector<8x8x128xf32>
    %416 = vector.broadcast %cst_150 : f32 to vector<8x8x128xf32>
    %417 = arith.select %413, %415, %416 : vector<8x8x128xi1>, vector<8x8x128xf32>
    %cst_171 = arith.constant dense<0xFF800000> : vector<8x8xf32>
    %418 = vector.multi_reduction <maximumf>, %417, %cst_171 [2] : vector<8x8x128xf32> to vector<8x8xf32>
    %419 = vector.shape_cast %418 : vector<8x8xf32> to vector<8x8x1xf32>
    %c3_i32_172 = arith.constant 3 : i32
    %c8_i32_173 = arith.constant 8 : i32
    %420 = arith.muli %c3_i32_172, %c8_i32_173 : i32
    %421 = tpu.assume_multiple %420, 8 : i32
    %422 = vector.shape_cast %325 : vector<8x128xf32> to vector<1x8x128xf32>
    %423 = vector.broadcast %422 : vector<1x8x128xf32> to vector<8x8x128xf32>
    %424 = vector.broadcast %419 : vector<8x8x1xf32> to vector<8x8x128xf32>
    %425 = arith.addf %423, %424 : vector<8x8x128xf32>
    %cst_174 = arith.constant dense<0xFF800000> : vector<8x128xf32>
    %426 = vector.multi_reduction <maximumf>, %425, %cst_174 [1] : vector<8x8x128xf32> to vector<8x128xf32>
    %427 = vector.shape_cast %426 : vector<8x128xf32> to vector<8x1x128xf32>
    %428 = vector.broadcast %427 : vector<8x1x128xf32> to vector<8x8x128xf32>
    %429 = arith.cmpf oge, %425, %428 : vector<8x8x128xf32>
    %430 = vector.shape_cast %320 : vector<1x8x128xi32> to vector<1x8x128xi32>
    %431 = vector.broadcast %430 : vector<1x8x128xi32> to vector<8x8x128xi32>
    %432 = vector.broadcast %c128_i32 : i32 to vector<8x8x128xi32>
    %433 = arith.select %429, %431, %432 : vector<8x8x128xi1>, vector<8x8x128xi32>
    %cst_175 = arith.constant dense<2147483647> : vector<8x128xi32>
    %434 = vector.multi_reduction <minsi>, %433, %cst_175 [1] : vector<8x8x128xi32> to vector<8x128xi32>
    %435 = arith.index_cast %421 : i32 to index
    %c0_176 = arith.constant 0 : index
    %436 = vector.load %arg20[%435, %c0_176] : memref<64x128xi32, #tpu.memory_space<vmem>>, vector<8x128xi32>
    tpu.vector_store %arg20[%435, %c0_176], %434 {strides = array<i32>} : memref<64x128xi32, #tpu.memory_space<vmem>>, vector<8x128xi32>,
    %437 = arith.index_cast %421 : i32 to index
    %c0_177 = arith.constant 0 : index
    %438 = vector.load %arg14[%437, %c0_177] : memref<64x128xf32, #tpu.memory_space<vmem>>, vector<8x128xf32>
    %439 = arith.addf %426, %438 : vector<8x128xf32>
    %440 = vector.shape_cast %439 : vector<8x128xf32> to vector<8x1x128xf32>
    %441 = vector.shape_cast %322 : vector<1x8x128xi1> to vector<1x8x128xi1>
    %442 = vector.broadcast %441 : vector<1x8x128xi1> to vector<8x8x128xi1>
    %443 = vector.shape_cast %440 : vector<8x1x128xf32> to vector<8x1x128xf32>
    %444 = vector.broadcast %443 : vector<8x1x128xf32> to vector<8x8x128xf32>
    %445 = vector.broadcast %cst_150 : f32 to vector<8x8x128xf32>
    %446 = arith.select %442, %444, %445 : vector<8x8x128xi1>, vector<8x8x128xf32>
    %cst_178 = arith.constant dense<0xFF800000> : vector<8x8xf32>
    %447 = vector.multi_reduction <maximumf>, %446, %cst_178 [2] : vector<8x8x128xf32> to vector<8x8xf32>
    %448 = vector.shape_cast %447 : vector<8x8xf32> to vector<8x8x1xf32>
    %c4_i32_179 = arith.constant 4 : i32
    %c8_i32_180 = arith.constant 8 : i32
    %449 = arith.muli %c4_i32_179, %c8_i32_180 : i32
    %450 = tpu.assume_multiple %449, 8 : i32
    %451 = vector.shape_cast %325 : vector<8x128xf32> to vector<1x8x128xf32>
    %452 = vector.broadcast %451 : vector<1x8x128xf32> to vector<8x8x128xf32>
    %453 = vector.broadcast %448 : vector<8x8x1xf32> to vector<8x8x128xf32>
    %454 = arith.addf %452, %453 : vector<8x8x128xf32>
    %cst_181 = arith.constant dense<0xFF800000> : vector<8x128xf32>
    %455 = vector.multi_reduction <maximumf>, %454, %cst_181 [1] : vector<8x8x128xf32> to vector<8x128xf32>
    %456 = vector.shape_cast %455 : vector<8x128xf32> to vector<8x1x128xf32>
    %457 = vector.broadcast %456 : vector<8x1x128xf32> to vector<8x8x128xf32>
    %458 = arith.cmpf oge, %454, %457 : vector<8x8x128xf32>
    %459 = vector.shape_cast %320 : vector<1x8x128xi32> to vector<1x8x128xi32>
    %460 = vector.broadcast %459 : vector<1x8x128xi32> to vector<8x8x128xi32>
    %461 = vector.broadcast %c128_i32 : i32 to vector<8x8x128xi32>
    %462 = arith.select %458, %460, %461 : vector<8x8x128xi1>, vector<8x8x128xi32>
    %cst_182 = arith.constant dense<2147483647> : vector<8x128xi32>
    %463 = vector.multi_reduction <minsi>, %462, %cst_182 [1] : vector<8x8x128xi32> to vector<8x128xi32>
    %464 = arith.index_cast %450 : i32 to index
    %c0_183 = arith.constant 0 : index
    %465 = vector.load %arg20[%464, %c0_183] : memref<64x128xi32, #tpu.memory_space<vmem>>, vector<8x128xi32>
    tpu.vector_store %arg20[%464, %c0_183], %463 {strides = array<i32>} : memref<64x128xi32, #tpu.memory_space<vmem>>, vector<8x128xi32>,
    %466 = arith.index_cast %450 : i32 to index
    %c0_184 = arith.constant 0 : index
    %467 = vector.load %arg14[%466, %c0_184] : memref<64x128xf32, #tpu.memory_space<vmem>>, vector<8x128xf32>
    %468 = arith.addf %455, %467 : vector<8x128xf32>
    %469 = vector.shape_cast %468 : vector<8x128xf32> to vector<8x1x128xf32>
    %470 = vector.shape_cast %322 : vector<1x8x128xi1> to vector<1x8x128xi1>
    %471 = vector.broadcast %470 : vector<1x8x128xi1> to vector<8x8x128xi1>
    %472 = vector.shape_cast %469 : vector<8x1x128xf32> to vector<8x1x128xf32>
    %473 = vector.broadcast %472 : vector<8x1x128xf32> to vector<8x8x128xf32>
    %474 = vector.broadcast %cst_150 : f32 to vector<8x8x128xf32>
    %475 = arith.select %471, %473, %474 : vector<8x8x128xi1>, vector<8x8x128xf32>
    %cst_185 = arith.constant dense<0xFF800000> : vector<8x8xf32>
    %476 = vector.multi_reduction <maximumf>, %475, %cst_185 [2] : vector<8x8x128xf32> to vector<8x8xf32>
    %477 = vector.shape_cast %476 : vector<8x8xf32> to vector<8x8x1xf32>
    %c5_i32_186 = arith.constant 5 : i32
    %c8_i32_187 = arith.constant 8 : i32
    %478 = arith.muli %c5_i32_186, %c8_i32_187 : i32
    %479 = tpu.assume_multiple %478, 8 : i32
    %480 = vector.shape_cast %325 : vector<8x128xf32> to vector<1x8x128xf32>
    %481 = vector.broadcast %480 : vector<1x8x128xf32> to vector<8x8x128xf32>
    %482 = vector.broadcast %477 : vector<8x8x1xf32> to vector<8x8x128xf32>
    %483 = arith.addf %481, %482 : vector<8x8x128xf32>
    %cst_188 = arith.constant dense<0xFF800000> : vector<8x128xf32>
    %484 = vector.multi_reduction <maximumf>, %483, %cst_188 [1] : vector<8x8x128xf32> to vector<8x128xf32>
    %485 = vector.shape_cast %484 : vector<8x128xf32> to vector<8x1x128xf32>
    %486 = vector.broadcast %485 : vector<8x1x128xf32> to vector<8x8x128xf32>
    %487 = arith.cmpf oge, %483, %486 : vector<8x8x128xf32>
    %488 = vector.shape_cast %320 : vector<1x8x128xi32> to vector<1x8x128xi32>
    %489 = vector.broadcast %488 : vector<1x8x128xi32> to vector<8x8x128xi32>
    %490 = vector.broadcast %c128_i32 : i32 to vector<8x8x128xi32>
    %491 = arith.select %487, %489, %490 : vector<8x8x128xi1>, vector<8x8x128xi32>
    %cst_189 = arith.constant dense<2147483647> : vector<8x128xi32>
    %492 = vector.multi_reduction <minsi>, %491, %cst_189 [1] : vector<8x8x128xi32> to vector<8x128xi32>
    %493 = arith.index_cast %479 : i32 to index
    %c0_190 = arith.constant 0 : index
    %494 = vector.load %arg20[%493, %c0_190] : memref<64x128xi32, #tpu.memory_space<vmem>>, vector<8x128xi32>
    tpu.vector_store %arg20[%493, %c0_190], %492 {strides = array<i32>} : memref<64x128xi32, #tpu.memory_space<vmem>>, vector<8x128xi32>,
    %495 = arith.index_cast %479 : i32 to index
    %c0_191 = arith.constant 0 : index
    %496 = vector.load %arg14[%495, %c0_191] : memref<64x128xf32, #tpu.memory_space<vmem>>, vector<8x128xf32>
    %497 = arith.addf %484, %496 : vector<8x128xf32>
    %498 = vector.shape_cast %497 : vector<8x128xf32> to vector<8x1x128xf32>
    %499 = vector.shape_cast %322 : vector<1x8x128xi1> to vector<1x8x128xi1>
    %500 = vector.broadcast %499 : vector<1x8x128xi1> to vector<8x8x128xi1>
    %501 = vector.shape_cast %498 : vector<8x1x128xf32> to vector<8x1x128xf32>
    %502 = vector.broadcast %501 : vector<8x1x128xf32> to vector<8x8x128xf32>
    %503 = vector.broadcast %cst_150 : f32 to vector<8x8x128xf32>
    %504 = arith.select %500, %502, %503 : vector<8x8x128xi1>, vector<8x8x128xf32>
    %cst_192 = arith.constant dense<0xFF800000> : vector<8x8xf32>
    %505 = vector.multi_reduction <maximumf>, %504, %cst_192 [2] : vector<8x8x128xf32> to vector<8x8xf32>
    %506 = vector.shape_cast %505 : vector<8x8xf32> to vector<8x8x1xf32>
    %c6_i32_193 = arith.constant 6 : i32
    %c8_i32_194 = arith.constant 8 : i32
    %507 = arith.muli %c6_i32_193, %c8_i32_194 : i32
    %508 = tpu.assume_multiple %507, 8 : i32
    %509 = vector.shape_cast %325 : vector<8x128xf32> to vector<1x8x128xf32>
    %510 = vector.broadcast %509 : vector<1x8x128xf32> to vector<8x8x128xf32>
    %511 = vector.broadcast %506 : vector<8x8x1xf32> to vector<8x8x128xf32>
    %512 = arith.addf %510, %511 : vector<8x8x128xf32>
    %cst_195 = arith.constant dense<0xFF800000> : vector<8x128xf32>
    %513 = vector.multi_reduction <maximumf>, %512, %cst_195 [1] : vector<8x8x128xf32> to vector<8x128xf32>
    %514 = vector.shape_cast %513 : vector<8x128xf32> to vector<8x1x128xf32>
    %515 = vector.broadcast %514 : vector<8x1x128xf32> to vector<8x8x128xf32>
    %516 = arith.cmpf oge, %512, %515 : vector<8x8x128xf32>
    %517 = vector.shape_cast %320 : vector<1x8x128xi32> to vector<1x8x128xi32>
    %518 = vector.broadcast %517 : vector<1x8x128xi32> to vector<8x8x128xi32>
    %519 = vector.broadcast %c128_i32 : i32 to vector<8x8x128xi32>
    %520 = arith.select %516, %518, %519 : vector<8x8x128xi1>, vector<8x8x128xi32>
    %cst_196 = arith.constant dense<2147483647> : vector<8x128xi32>
    %521 = vector.multi_reduction <minsi>, %520, %cst_196 [1] : vector<8x8x128xi32> to vector<8x128xi32>
    %522 = arith.index_cast %508 : i32 to index
    %c0_197 = arith.constant 0 : index
    %523 = vector.load %arg20[%522, %c0_197] : memref<64x128xi32, #tpu.memory_space<vmem>>, vector<8x128xi32>
    tpu.vector_store %arg20[%522, %c0_197], %521 {strides = array<i32>} : memref<64x128xi32, #tpu.memory_space<vmem>>, vector<8x128xi32>,
    %524 = arith.index_cast %508 : i32 to index
    %c0_198 = arith.constant 0 : index
    %525 = vector.load %arg14[%524, %c0_198] : memref<64x128xf32, #tpu.memory_space<vmem>>, vector<8x128xf32>
    %526 = arith.addf %513, %525 : vector<8x128xf32>
    %527 = vector.shape_cast %526 : vector<8x128xf32> to vector<8x1x128xf32>
    %528 = vector.shape_cast %322 : vector<1x8x128xi1> to vector<1x8x128xi1>
    %529 = vector.broadcast %528 : vector<1x8x128xi1> to vector<8x8x128xi1>
    %530 = vector.shape_cast %527 : vector<8x1x128xf32> to vector<8x1x128xf32>
    %531 = vector.broadcast %530 : vector<8x1x128xf32> to vector<8x8x128xf32>
    %532 = vector.broadcast %cst_150 : f32 to vector<8x8x128xf32>
    %533 = arith.select %529, %531, %532 : vector<8x8x128xi1>, vector<8x8x128xf32>
    %cst_199 = arith.constant dense<0xFF800000> : vector<8x8xf32>
    %534 = vector.multi_reduction <maximumf>, %533, %cst_199 [2] : vector<8x8x128xf32> to vector<8x8xf32>
    %535 = vector.shape_cast %534 : vector<8x8xf32> to vector<8x8x1xf32>
    %c7_i32_200 = arith.constant 7 : i32
    %c8_i32_201 = arith.constant 8 : i32
    %536 = arith.muli %c7_i32_200, %c8_i32_201 : i32
    %537 = tpu.assume_multiple %536, 8 : i32
    %538 = vector.shape_cast %325 : vector<8x128xf32> to vector<1x8x128xf32>
    %539 = vector.broadcast %538 : vector<1x8x128xf32> to vector<8x8x128xf32>
    %540 = vector.broadcast %535 : vector<8x8x1xf32> to vector<8x8x128xf32>
    %541 = arith.addf %539, %540 : vector<8x8x128xf32>
    %cst_202 = arith.constant dense<0xFF800000> : vector<8x128xf32>
    %542 = vector.multi_reduction <maximumf>, %541, %cst_202 [1] : vector<8x8x128xf32> to vector<8x128xf32>
    %543 = vector.shape_cast %542 : vector<8x128xf32> to vector<8x1x128xf32>
    %544 = vector.broadcast %543 : vector<8x1x128xf32> to vector<8x8x128xf32>
    %545 = arith.cmpf oge, %541, %544 : vector<8x8x128xf32>
    %546 = vector.shape_cast %320 : vector<1x8x128xi32> to vector<1x8x128xi32>
    %547 = vector.broadcast %546 : vector<1x8x128xi32> to vector<8x8x128xi32>
    %548 = vector.broadcast %c128_i32 : i32 to vector<8x8x128xi32>
    %549 = arith.select %545, %547, %548 : vector<8x8x128xi1>, vector<8x8x128xi32>
    %cst_203 = arith.constant dense<2147483647> : vector<8x128xi32>
    %550 = vector.multi_reduction <minsi>, %549, %cst_203 [1] : vector<8x8x128xi32> to vector<8x128xi32>
    %551 = arith.index_cast %537 : i32 to index
    %c0_204 = arith.constant 0 : index
    %552 = vector.load %arg20[%551, %c0_204] : memref<64x128xi32, #tpu.memory_space<vmem>>, vector<8x128xi32>
    tpu.vector_store %arg20[%551, %c0_204], %550 {strides = array<i32>} : memref<64x128xi32, #tpu.memory_space<vmem>>, vector<8x128xi32>,
    %553 = arith.index_cast %537 : i32 to index
    %c0_205 = arith.constant 0 : index
    %554 = vector.load %arg14[%553, %c0_205] : memref<64x128xf32, #tpu.memory_space<vmem>>, vector<8x128xf32>
    %555 = arith.addf %542, %554 : vector<8x128xf32>
    %556 = vector.shape_cast %555 : vector<8x128xf32> to vector<8x1x128xf32>
    %557 = vector.shape_cast %322 : vector<1x8x128xi1> to vector<1x8x128xi1>
    %558 = vector.broadcast %557 : vector<1x8x128xi1> to vector<8x8x128xi1>
    %559 = vector.shape_cast %556 : vector<8x1x128xf32> to vector<8x1x128xf32>
    %560 = vector.broadcast %559 : vector<8x1x128xf32> to vector<8x8x128xf32>
    %561 = vector.broadcast %cst_150 : f32 to vector<8x8x128xf32>
    %562 = arith.select %558, %560, %561 : vector<8x8x128xi1>, vector<8x8x128xf32>
    %cst_206 = arith.constant dense<0xFF800000> : vector<8x8xf32>
    %563 = vector.multi_reduction <maximumf>, %562, %cst_206 [2] : vector<8x8x128xf32> to vector<8x8xf32>
    %564 = vector.shape_cast %563 : vector<8x8xf32> to vector<8x8x1xf32>
    %c8_i32_207 = arith.constant 8 : i32
    %cst_208 = arith.constant -1.000000e+30 : f32
    %565 = vector.shape_cast %322 : vector<1x8x128xi1> to vector<1x8x128xi1>
    %566 = vector.broadcast %565 : vector<1x8x128xi1> to vector<8x8x128xi1>
    %567 = vector.shape_cast %564 : vector<8x8x1xf32> to vector<8x8x1xf32>
    %568 = vector.broadcast %567 : vector<8x8x1xf32> to vector<8x8x128xf32>
    %569 = vector.broadcast %cst_208 : f32 to vector<8x8x128xf32>
    %570 = arith.select %566, %568, %569 : vector<8x8x128xi1>, vector<8x8x128xf32>
    %cst_209 = arith.constant dense<0xFF800000> : vector<8x128xf32>
    %571 = vector.multi_reduction <maximumf>, %570, %cst_209 [1] : vector<8x8x128xf32> to vector<8x128xf32>
    %c0_210 = arith.constant 0 : index
    %c0_211 = arith.constant 0 : index
    %572 = vector.load %arg11[%c0_210, %c0_211] : memref<1x128xf32, #tpu.memory_space<vmem>>, vector<1x128xf32>
    %573 = vector.broadcast %572 : vector<1x128xf32> to vector<8x128xf32>
    %574 = arith.addf %571, %573 : vector<8x128xf32>
    %cst_212 = arith.constant dense<0xFF800000> : vector<8xf32>
    %575 = vector.multi_reduction <maximumf>, %574, %cst_212 [1] : vector<8x128xf32> to vector<8xf32>
    %576 = vector.shape_cast %575 : vector<8xf32> to vector<8x1xf32>
    %577 = vector.broadcast %576 : vector<8x1xf32> to vector<8x128xf32>
    %578 = arith.cmpf oge, %574, %577 : vector<8x128xf32>
    %c128_i32_213 = arith.constant 128 : i32
    %579 = vector.shape_cast %323 : vector<1x128xi32> to vector<1x128xi32>
    %580 = vector.broadcast %579 : vector<1x128xi32> to vector<8x128xi32>
    %581 = vector.broadcast %c128_i32_213 : i32 to vector<8x128xi32>
    %582 = arith.select %578, %580, %581 : vector<8x128xi1>, vector<8x128xi32>
    %cst_214 = arith.constant dense<2147483647> : vector<8xi32>
    %583 = vector.multi_reduction <minsi>, %582, %cst_214 [1] : vector<8x128xi32> to vector<8xi32>
    %584 = vector.shape_cast %583 : vector<8xi32> to vector<8x1xi32>
    %585 = vector.shape_cast %576 : vector<8x1xf32> to vector<8x1xf32>
    %586 = vector.broadcast %585 : vector<8x1xf32> to vector<8x128xf32>
    %c0_215 = arith.constant 0 : index
    %c0_216 = arith.constant 0 : index
    %587 = vector.load %arg16[%c0_215, %c0_216] : memref<8x128xf32, #tpu.memory_space<vmem>>, vector<8x128xf32>
    tpu.vector_store %arg16[%c0_215, %c0_216], %586 {strides = array<i32>} : memref<8x128xf32, #tpu.memory_space<vmem>>, vector<8x128xf32>,
    %588 = vector.shape_cast %584 : vector<8x1xi32> to vector<8x1xi32>
    %589 = vector.broadcast %588 : vector<8x1xi32> to vector<8x128xi32>
    %c56 = arith.constant 56 : index
    %c0_217 = arith.constant 0 : index
    %590 = vector.load %arg15[%c56, %c0_217] : memref<64x128xi32, #tpu.memory_space<vmem>>, vector<8x128xi32>
    tpu.vector_store %arg15[%c56, %c0_217], %589 {strides = array<i32>} : memref<64x128xi32, #tpu.memory_space<vmem>>, vector<8x128xi32>,
    %c0_i32_218 = arith.constant 0 : i32
    %c7_i32_219 = arith.constant 7 : i32
    %591 = arith.subi %c7_i32_219, %c0_i32_218 : i32
    %c8_i32_220 = arith.constant 8 : i32
    %592 = arith.muli %591, %c8_i32_220 : i32
    %593 = tpu.assume_multiple %592, 8 : i32
    %594 = arith.index_cast %593 : i32 to index
    %c0_221 = arith.constant 0 : index
    %595 = vector.load %arg20[%594, %c0_221] : memref<64x128xi32, #tpu.memory_space<vmem>>, vector<8x128xi32>
    %596 = vector.broadcast %323 : vector<1x128xi32> to vector<8x128xi32>
    %597 = vector.broadcast %584 : vector<8x1xi32> to vector<8x128xi32>
    %598 = arith.cmpi eq, %596, %597 : vector<8x128xi32>
    %c-1_i32 = arith.constant -1 : i32
    %599 = vector.broadcast %c-1_i32 : i32 to vector<8x128xi32>
    %600 = arith.select %598, %595, %599 : vector<8x128xi1>, vector<8x128xi32>
    %cst_222 = arith.constant dense<-2147483648> : vector<8xi32>
    %601 = vector.multi_reduction <maxsi>, %600, %cst_222 [1] : vector<8x128xi32> to vector<8xi32>
    %602 = vector.shape_cast %601 : vector<8xi32> to vector<8x1xi32>
    %c1_i32_223 = arith.constant 1 : i32
    %603 = arith.subi %591, %c1_i32_223 : i32
    %c8_i32_224 = arith.constant 8 : i32
    %604 = arith.muli %603, %c8_i32_224 : i32
    %605 = tpu.assume_multiple %604, 8 : i32
    %606 = vector.shape_cast %602 : vector<8x1xi32> to vector<8x1xi32>
    %607 = vector.broadcast %606 : vector<8x1xi32> to vector<8x128xi32>
    %608 = arith.index_cast %605 : i32 to index
    %c0_225 = arith.constant 0 : index
    %609 = vector.load %arg15[%608, %c0_225] : memref<64x128xi32, #tpu.memory_space<vmem>>, vector<8x128xi32>
    tpu.vector_store %arg15[%608, %c0_225], %607 {strides = array<i32>} : memref<64x128xi32, #tpu.memory_space<vmem>>, vector<8x128xi32>,
    %c1_i32_226 = arith.constant 1 : i32
    %c7_i32_227 = arith.constant 7 : i32
    %610 = arith.subi %c7_i32_227, %c1_i32_226 : i32
    %c8_i32_228 = arith.constant 8 : i32
    %611 = arith.muli %610, %c8_i32_228 : i32
    %612 = tpu.assume_multiple %611, 8 : i32
    %613 = arith.index_cast %612 : i32 to index
    %c0_229 = arith.constant 0 : index
    %614 = vector.load %arg20[%613, %c0_229] : memref<64x128xi32, #tpu.memory_space<vmem>>, vector<8x128xi32>
    %615 = vector.broadcast %323 : vector<1x128xi32> to vector<8x128xi32>
    %616 = vector.broadcast %602 : vector<8x1xi32> to vector<8x128xi32>
    %617 = arith.cmpi eq, %615, %616 : vector<8x128xi32>
    %c-1_i32_230 = arith.constant -1 : i32
    %618 = vector.broadcast %c-1_i32_230 : i32 to vector<8x128xi32>
    %619 = arith.select %617, %614, %618 : vector<8x128xi1>, vector<8x128xi32>
    %cst_231 = arith.constant dense<-2147483648> : vector<8xi32>
    %620 = vector.multi_reduction <maxsi>, %619, %cst_231 [1] : vector<8x128xi32> to vector<8xi32>
    %621 = vector.shape_cast %620 : vector<8xi32> to vector<8x1xi32>
    %c1_i32_232 = arith.constant 1 : i32
    %622 = arith.subi %610, %c1_i32_232 : i32
    %c8_i32_233 = arith.constant 8 : i32
    %623 = arith.muli %622, %c8_i32_233 : i32
    %624 = tpu.assume_multiple %623, 8 : i32
    %625 = vector.shape_cast %621 : vector<8x1xi32> to vector<8x1xi32>
    %626 = vector.broadcast %625 : vector<8x1xi32> to vector<8x128xi32>
    %627 = arith.index_cast %624 : i32 to index
    %c0_234 = arith.constant 0 : index
    %628 = vector.load %arg15[%627, %c0_234] : memref<64x128xi32, #tpu.memory_space<vmem>>, vector<8x128xi32>
    tpu.vector_store %arg15[%627, %c0_234], %626 {strides = array<i32>} : memref<64x128xi32, #tpu.memory_space<vmem>>, vector<8x128xi32>,
    %c2_i32_235 = arith.constant 2 : i32
    %c7_i32_236 = arith.constant 7 : i32
    %629 = arith.subi %c7_i32_236, %c2_i32_235 : i32
    %c8_i32_237 = arith.constant 8 : i32
    %630 = arith.muli %629, %c8_i32_237 : i32
    %631 = tpu.assume_multiple %630, 8 : i32
    %632 = arith.index_cast %631 : i32 to index
    %c0_238 = arith.constant 0 : index
    %633 = vector.load %arg20[%632, %c0_238] : memref<64x128xi32, #tpu.memory_space<vmem>>, vector<8x128xi32>
    %634 = vector.broadcast %323 : vector<1x128xi32> to vector<8x128xi32>
    %635 = vector.broadcast %621 : vector<8x1xi32> to vector<8x128xi32>
    %636 = arith.cmpi eq, %634, %635 : vector<8x128xi32>
    %c-1_i32_239 = arith.constant -1 : i32
    %637 = vector.broadcast %c-1_i32_239 : i32 to vector<8x128xi32>
    %638 = arith.select %636, %633, %637 : vector<8x128xi1>, vector<8x128xi32>
    %cst_240 = arith.constant dense<-2147483648> : vector<8xi32>
    %639 = vector.multi_reduction <maxsi>, %638, %cst_240 [1] : vector<8x128xi32> to vector<8xi32>
    %640 = vector.shape_cast %639 : vector<8xi32> to vector<8x1xi32>
    %c1_i32_241 = arith.constant 1 : i32
    %641 = arith.subi %629, %c1_i32_241 : i32
    %c8_i32_242 = arith.constant 8 : i32
    %642 = arith.muli %641, %c8_i32_242 : i32
    %643 = tpu.assume_multiple %642, 8 : i32
    %644 = vector.shape_cast %640 : vector<8x1xi32> to vector<8x1xi32>
    %645 = vector.broadcast %644 : vector<8x1xi32> to vector<8x128xi32>
    %646 = arith.index_cast %643 : i32 to index
    %c0_243 = arith.constant 0 : index
    %647 = vector.load %arg15[%646, %c0_243] : memref<64x128xi32, #tpu.memory_space<vmem>>, vector<8x128xi32>
    tpu.vector_store %arg15[%646, %c0_243], %645 {strides = array<i32>} : memref<64x128xi32, #tpu.memory_space<vmem>>, vector<8x128xi32>,
    %c3_i32_244 = arith.constant 3 : i32
    %c7_i32_245 = arith.constant 7 : i32
    %648 = arith.subi %c7_i32_245, %c3_i32_244 : i32
    %c8_i32_246 = arith.constant 8 : i32
    %649 = arith.muli %648, %c8_i32_246 : i32
    %650 = tpu.assume_multiple %649, 8 : i32
    %651 = arith.index_cast %650 : i32 to index
    %c0_247 = arith.constant 0 : index
    %652 = vector.load %arg20[%651, %c0_247] : memref<64x128xi32, #tpu.memory_space<vmem>>, vector<8x128xi32>
    %653 = vector.broadcast %323 : vector<1x128xi32> to vector<8x128xi32>
    %654 = vector.broadcast %640 : vector<8x1xi32> to vector<8x128xi32>
    %655 = arith.cmpi eq, %653, %654 : vector<8x128xi32>
    %c-1_i32_248 = arith.constant -1 : i32
    %656 = vector.broadcast %c-1_i32_248 : i32 to vector<8x128xi32>
    %657 = arith.select %655, %652, %656 : vector<8x128xi1>, vector<8x128xi32>
    %cst_249 = arith.constant dense<-2147483648> : vector<8xi32>
    %658 = vector.multi_reduction <maxsi>, %657, %cst_249 [1] : vector<8x128xi32> to vector<8xi32>
    %659 = vector.shape_cast %658 : vector<8xi32> to vector<8x1xi32>
    %c1_i32_250 = arith.constant 1 : i32
    %660 = arith.subi %648, %c1_i32_250 : i32
    %c8_i32_251 = arith.constant 8 : i32
    %661 = arith.muli %660, %c8_i32_251 : i32
    %662 = tpu.assume_multiple %661, 8 : i32
    %663 = vector.shape_cast %659 : vector<8x1xi32> to vector<8x1xi32>
    %664 = vector.broadcast %663 : vector<8x1xi32> to vector<8x128xi32>
    %665 = arith.index_cast %662 : i32 to index
    %c0_252 = arith.constant 0 : index
    %666 = vector.load %arg15[%665, %c0_252] : memref<64x128xi32, #tpu.memory_space<vmem>>, vector<8x128xi32>
    tpu.vector_store %arg15[%665, %c0_252], %664 {strides = array<i32>} : memref<64x128xi32, #tpu.memory_space<vmem>>, vector<8x128xi32>,
    %c4_i32_253 = arith.constant 4 : i32
    %c7_i32_254 = arith.constant 7 : i32
    %667 = arith.subi %c7_i32_254, %c4_i32_253 : i32
    %c8_i32_255 = arith.constant 8 : i32
    %668 = arith.muli %667, %c8_i32_255 : i32
    %669 = tpu.assume_multiple %668, 8 : i32
    %670 = arith.index_cast %669 : i32 to index
    %c0_256 = arith.constant 0 : index
    %671 = vector.load %arg20[%670, %c0_256] : memref<64x128xi32, #tpu.memory_space<vmem>>, vector<8x128xi32>
    %672 = vector.broadcast %323 : vector<1x128xi32> to vector<8x128xi32>
    %673 = vector.broadcast %659 : vector<8x1xi32> to vector<8x128xi32>
    %674 = arith.cmpi eq, %672, %673 : vector<8x128xi32>
    %c-1_i32_257 = arith.constant -1 : i32
    %675 = vector.broadcast %c-1_i32_257 : i32 to vector<8x128xi32>
    %676 = arith.select %674, %671, %675 : vector<8x128xi1>, vector<8x128xi32>
    %cst_258 = arith.constant dense<-2147483648> : vector<8xi32>
    %677 = vector.multi_reduction <maxsi>, %676, %cst_258 [1] : vector<8x128xi32> to vector<8xi32>
    %678 = vector.shape_cast %677 : vector<8xi32> to vector<8x1xi32>
    %c1_i32_259 = arith.constant 1 : i32
    %679 = arith.subi %667, %c1_i32_259 : i32
    %c8_i32_260 = arith.constant 8 : i32
    %680 = arith.muli %679, %c8_i32_260 : i32
    %681 = tpu.assume_multiple %680, 8 : i32
    %682 = vector.shape_cast %678 : vector<8x1xi32> to vector<8x1xi32>
    %683 = vector.broadcast %682 : vector<8x1xi32> to vector<8x128xi32>
    %684 = arith.index_cast %681 : i32 to index
    %c0_261 = arith.constant 0 : index
    %685 = vector.load %arg15[%684, %c0_261] : memref<64x128xi32, #tpu.memory_space<vmem>>, vector<8x128xi32>
    tpu.vector_store %arg15[%684, %c0_261], %683 {strides = array<i32>} : memref<64x128xi32, #tpu.memory_space<vmem>>, vector<8x128xi32>,
    %c5_i32_262 = arith.constant 5 : i32
    %c7_i32_263 = arith.constant 7 : i32
    %686 = arith.subi %c7_i32_263, %c5_i32_262 : i32
    %c8_i32_264 = arith.constant 8 : i32
    %687 = arith.muli %686, %c8_i32_264 : i32
    %688 = tpu.assume_multiple %687, 8 : i32
    %689 = arith.index_cast %688 : i32 to index
    %c0_265 = arith.constant 0 : index
    %690 = vector.load %arg20[%689, %c0_265] : memref<64x128xi32, #tpu.memory_space<vmem>>, vector<8x128xi32>
    %691 = vector.broadcast %323 : vector<1x128xi32> to vector<8x128xi32>
    %692 = vector.broadcast %678 : vector<8x1xi32> to vector<8x128xi32>
    %693 = arith.cmpi eq, %691, %692 : vector<8x128xi32>
    %c-1_i32_266 = arith.constant -1 : i32
    %694 = vector.broadcast %c-1_i32_266 : i32 to vector<8x128xi32>
    %695 = arith.select %693, %690, %694 : vector<8x128xi1>, vector<8x128xi32>
    %cst_267 = arith.constant dense<-2147483648> : vector<8xi32>
    %696 = vector.multi_reduction <maxsi>, %695, %cst_267 [1] : vector<8x128xi32> to vector<8xi32>
    %697 = vector.shape_cast %696 : vector<8xi32> to vector<8x1xi32>
    %c1_i32_268 = arith.constant 1 : i32
    %698 = arith.subi %686, %c1_i32_268 : i32
    %c8_i32_269 = arith.constant 8 : i32
    %699 = arith.muli %698, %c8_i32_269 : i32
    %700 = tpu.assume_multiple %699, 8 : i32
    %701 = vector.shape_cast %697 : vector<8x1xi32> to vector<8x1xi32>
    %702 = vector.broadcast %701 : vector<8x1xi32> to vector<8x128xi32>
    %703 = arith.index_cast %700 : i32 to index
    %c0_270 = arith.constant 0 : index
    %704 = vector.load %arg15[%703, %c0_270] : memref<64x128xi32, #tpu.memory_space<vmem>>, vector<8x128xi32>
    tpu.vector_store %arg15[%703, %c0_270], %702 {strides = array<i32>} : memref<64x128xi32, #tpu.memory_space<vmem>>, vector<8x128xi32>,
    %c6_i32_271 = arith.constant 6 : i32
    %c7_i32_272 = arith.constant 7 : i32
    %705 = arith.subi %c7_i32_272, %c6_i32_271 : i32
    %c8_i32_273 = arith.constant 8 : i32
    %706 = arith.muli %705, %c8_i32_273 : i32
    %707 = tpu.assume_multiple %706, 8 : i32
    %708 = arith.index_cast %707 : i32 to index
    %c0_274 = arith.constant 0 : index
    %709 = vector.load %arg20[%708, %c0_274] : memref<64x128xi32, #tpu.memory_space<vmem>>, vector<8x128xi32>
    %710 = vector.broadcast %323 : vector<1x128xi32> to vector<8x128xi32>
    %711 = vector.broadcast %697 : vector<8x1xi32> to vector<8x128xi32>
    %712 = arith.cmpi eq, %710, %711 : vector<8x128xi32>
    %c-1_i32_275 = arith.constant -1 : i32
    %713 = vector.broadcast %c-1_i32_275 : i32 to vector<8x128xi32>
    %714 = arith.select %712, %709, %713 : vector<8x128xi1>, vector<8x128xi32>
    %cst_276 = arith.constant dense<-2147483648> : vector<8xi32>
    %715 = vector.multi_reduction <maxsi>, %714, %cst_276 [1] : vector<8x128xi32> to vector<8xi32>
    %716 = vector.shape_cast %715 : vector<8xi32> to vector<8x1xi32>
    %c1_i32_277 = arith.constant 1 : i32
    %717 = arith.subi %705, %c1_i32_277 : i32
    %c8_i32_278 = arith.constant 8 : i32
    %718 = arith.muli %717, %c8_i32_278 : i32
    %719 = tpu.assume_multiple %718, 8 : i32
    %720 = vector.shape_cast %716 : vector<8x1xi32> to vector<8x1xi32>
    %721 = vector.broadcast %720 : vector<8x1xi32> to vector<8x128xi32>
    %722 = arith.index_cast %719 : i32 to index
    %c0_279 = arith.constant 0 : index
    %723 = vector.load %arg15[%722, %c0_279] : memref<64x128xi32, #tpu.memory_space<vmem>>, vector<8x128xi32>
    tpu.vector_store %arg15[%722, %c0_279], %721 {strides = array<i32>} : memref<64x128xi32, #tpu.memory_space<vmem>>, vector<8x128xi32>,
    %c7_i32_280 = arith.constant 7 : i32
    return
  }
  func.func @transform_0(%arg0: i32) -> (i32, i32) {
    %c0_i32 = arith.constant 0 : i32
    %c0_i32_0 = arith.constant 0 : i32
    return %arg0, %c0_i32 : i32, i32
  }
  func.func @transform_1(%arg0: i32) -> (i32, i32) {
    %c0_i32 = arith.constant 0 : i32
    %c0_i32_0 = arith.constant 0 : i32
    return %arg0, %c0_i32 : i32, i32
  }
  func.func @transform_2(%arg0: i32) -> (i32, i32) {
    %c0_i32 = arith.constant 0 : i32
    %c0_i32_0 = arith.constant 0 : i32
    %c0_i32_1 = arith.constant 0 : i32
    return %c0_i32, %c0_i32_0 : i32, i32
  }
  func.func @transform_3(%arg0: i32) -> (i32, i32) {
    %c0_i32 = arith.constant 0 : i32
    %c0_i32_0 = arith.constant 0 : i32
    %c0_i32_1 = arith.constant 0 : i32
    return %c0_i32, %c0_i32_0 : i32, i32
  }
  func.func @transform_4(%arg0: i32) -> (i32, i32) {
    %c0_i32 = arith.constant 0 : i32
    %c0_i32_0 = arith.constant 0 : i32
    %c0_i32_1 = arith.constant 0 : i32
    return %c0_i32, %c0_i32_0 : i32, i32
  }
  func.func @transform_5(%arg0: i32) -> (i32, i32) {
    %c0_i32 = arith.constant 0 : i32
    %c0_i32_0 = arith.constant 0 : i32
    %c0_i32_1 = arith.constant 0 : i32
    return %c0_i32, %c0_i32_0 : i32, i32
  }
  func.func @transform_6(%arg0: i32) -> (i32, i32) {
    %c0_i32 = arith.constant 0 : i32
    %c0_i32_0 = arith.constant 0 : i32
    %c0_i32_1 = arith.constant 0 : i32
    return %c0_i32, %c0_i32_0 : i32, i32
  }
  func.func @transform_7(%arg0: i32) -> (i32, i32) {
    %c0_i32 = arith.constant 0 : i32
    %c0_i32_0 = arith.constant 0 : i32
    %c0_i32_1 = arith.constant 0 : i32
    return %c0_i32, %c0_i32_0 : i32, i32
  }
  func.func @transform_8(%arg0: i32) -> (i32, i32) {
    %c0_i32 = arith.constant 0 : i32
    %c0_i32_0 = arith.constant 0 : i32
    %c0_i32_1 = arith.constant 0 : i32
    return %c0_i32, %c0_i32_0 : i32, i32
  }
  func.func @transform_9(%arg0: i32) -> (i32, i32) {
    %c0_i32 = arith.constant 0 : i32
    %c0_i32_0 = arith.constant 0 : i32
    %c0_i32_1 = arith.constant 0 : i32
    return %c0_i32, %c0_i32_0 : i32, i32
  }
  func.func @transform_10(%arg0: i32) -> (i32, i32) {
    %c0_i32 = arith.constant 0 : i32
    %c0_i32_0 = arith.constant 0 : i32
    %c0_i32_1 = arith.constant 0 : i32
    return %c0_i32, %c0_i32_0 : i32, i32
  }
  func.func @transform_11(%arg0: i32) -> (i32, i32) {
    %c0_i32 = arith.constant 0 : i32
    %c0_i32_0 = arith.constant 0 : i32
    %c0_i32_1 = arith.constant 0 : i32
    return %c0_i32, %c0_i32_0 : i32, i32
  }
  func.func @transform_12(%arg0: i32) -> (i32, i32) {
    %c0_i32 = arith.constant 0 : i32
    %c0_i32_0 = arith.constant 0 : i32
    %c0_i32_1 = arith.constant 0 : i32
    return %c0_i32, %c0_i32_0 : i32, i32
  }
  func.func @transform_13(%arg0: i32) -> (i32, i32) {
    %c0_i32 = arith.constant 0 : i32
    %c0_i32_0 = arith.constant 0 : i32
    return %arg0, %c0_i32 : i32, i32
  }
  func.func @transform_14(%arg0: i32) -> (i32, i32) {
    %c0_i32 = arith.constant 0 : i32
    %c0_i32_0 = arith.constant 0 : i32
    return %arg0, %c0_i32 : i32, i32
  }
  func.func @transform_15(%arg0: i32) -> (i32, i32) {
    %c0_i32 = arith.constant 0 : i32
    %c0_i32_0 = arith.constant 0 : i32
    return %arg0, %c0_i32 : i32, i32
  }
}

</mosaic_0001>

<llo_original>
// kernel: squeeze.2
$region0: #{squeeze.2}
  %s0 = inlined_call_operand.vmem [shape: s32[128], index: 0, kind: input, shape index: {}]
  %s1 = inlined_call_operand.vmem [shape: s32[2,8,8], index: 1, kind: output, shape index: {}]
  $region1: #{squeeze.2} parent=0
    #allocation0 [shape = 'u8[4096]{0}', space=vmem, size = 0x1000, scoped, tag = 'scoped mem for input reshape']
    %s3 = sshllo.u32 0, 1
    %v4 = vld [vmem:[%s0] sm:%s3]
    %5 = vst [vmem:[#allocation0] sm:%s3] %v4
    %v6 = vld [vmem:[#allocation0] sm:$0x1]
    %vm7 = vcmask 64512
    %8 = vst.msk [vmem:[%s1] sm:$0x1] %vm7, %v6
    %v9 = vld [vmem:[#allocation0] sm:$0x1]
    %10 = vrot.lane.b32.xlu0 %v9, 120
    %v11 = vpop.permute.xlu0 %10
    %vm12 = vcmask 64512
    %s13 = scalar_lea.vmem %s1, 1
    %14 = vst.msk [vmem:[%s13] sm:$0x1] %vm12, %v11
    %v15 = vld [vmem:[#allocation0] sm:$0x1]
    %16 = vrot.lane.b32.xlu0 %v15, 112
    %v17 = vpop.permute.xlu0 %16
    %vm18 = vcmask 64512
    %s19 = scalar_lea.vmem %s1, 2
    %20 = vst.msk [vmem:[%s19] sm:$0x1] %vm18, %v17
    %v21 = vld [vmem:[#allocation0] sm:$0x1]
    %22 = vrot.lane.b32.xlu0 %v21, 104
    %v23 = vpop.permute.xlu0 %22
    %vm24 = vcmask 64512
    %s25 = scalar_lea.vmem %s1, 3
    %26 = vst.msk [vmem:[%s25] sm:$0x1] %vm24, %v23
    %v27 = vld [vmem:[#allocation0] sm:$0x1]
    %28 = vrot.lane.b32.xlu0 %v27, 96
    %v29 = vpop.permute.xlu0 %28
    %vm30 = vcmask 64512
    %s31 = scalar_lea.vmem %s1, 4
    %32 = vst.msk [vmem:[%s31] sm:$0x1] %vm30, %v29
    %v33 = vld [vmem:[#allocation0] sm:$0x1]
    %34 = vrot.lane.b32.xlu0 %v33, 88
    %v35 = vpop.permute.xlu0 %34
    %vm36 = vcmask 64512
    %s37 = scalar_lea.vmem %s1, 5
    %38 = vst.msk [vmem:[%s37] sm:$0x1] %vm36, %v35
    %v39 = vld [vmem:[#allocation0] sm:$0x1]
    %40 = vrot.lane.b32.xlu0 %v39, 80
    %v41 = vpop.permute.xlu0 %40
    %vm42 = vcmask 64512
    %s43 = scalar_lea.vmem %s1, 6
    %44 = vst.msk [vmem:[%s43] sm:$0x1] %vm42, %v41
    %v45 = vld [vmem:[#allocation0] sm:$0x1]
    %46 = vrot.lane.b32.xlu0 %v45, 72
    %v47 = vpop.permute.xlu0 %46
    %vm48 = vcmask 64512
    %s49 = scalar_lea.vmem %s1, 7
    %50 = vst.msk [vmem:[%s49] sm:$0x1] %vm48, %v47
    %v51 = vld [vmem:[#allocation0] sm:$0x1]
    %52 = vrot.lane.b32.xlu0 %v51, 64
    %v53 = vpop.permute.xlu0 %52
    %vm54 = vcmask 64512
    %s55 = scalar_lea.vmem %s1, 8
    %56 = vst.msk [vmem:[%s55] sm:$0x1] %vm54, %v53
    %v57 = vld [vmem:[#allocation0] sm:$0x1]
    %58 = vrot.lane.b32.xlu0 %v57, 56
    %v59 = vpop.permute.xlu0 %58
    %vm60 = vcmask 64512
    %s61 = scalar_lea.vmem %s1, 9
    %62 = vst.msk [vmem:[%s61] sm:$0x1] %vm60, %v59
    %v63 = vld [vmem:[#allocation0] sm:$0x1]
    %64 = vrot.lane.b32.xlu0 %v63, 48
    %v65 = vpop.permute.xlu0 %64
    %vm66 = vcmask 64512
    %s67 = scalar_lea.vmem %s1, 10
    %68 = vst.msk [vmem:[%s67] sm:$0x1] %vm66, %v65
    %v69 = vld [vmem:[#allocation0] sm:$0x1]
    %70 = vrot.lane.b32.xlu0 %v69, 40
    %v71 = vpop.permute.xlu0 %70
    %vm72 = vcmask 64512
    %s73 = scalar_lea.vmem %s1, 11
    %74 = vst.msk [vmem:[%s73] sm:$0x1] %vm72, %v71
    %v75 = vld [vmem:[#allocation0] sm:$0x1]
    %76 = vrot.lane.b32.xlu0 %v75, 32
    %v77 = vpop.permute.xlu0 %76
    %vm78 = vcmask 64512
    %s79 = scalar_lea.vmem %s1, 12
    %80 = vst.msk [vmem:[%s79] sm:$0x1] %vm78, %v77
    %v81 = vld [vmem:[#allocation0] sm:$0x1]
    %82 = vrot.lane.b32.xlu0 %v81, 24
    %v83 = vpop.permute.xlu0 %82
    %vm84 = vcmask 64512
    %s85 = scalar_lea.vmem %s1, 13
    %86 = vst.msk [vmem:[%s85] sm:$0x1] %vm84, %v83
    %v87 = vld [vmem:[#allocation0] sm:$0x1]
    %88 = vrot.lane.b32.xlu0 %v87, 16
    %v89 = vpop.permute.xlu0 %88
    %vm90 = vcmask 64512
    %s91 = scalar_lea.vmem %s1, 14
    %92 = vst.msk [vmem:[%s91] sm:$0x1] %vm90, %v89
    %v93 = vld [vmem:[#allocation0] sm:$0x1]
    %94 = vrot.lane.b32.xlu0 %v93, 8
    %v95 = vpop.permute.xlu0 %94
    %vm96 = vcmask 64512
    %s97 = scalar_lea.vmem %s1, 15
    %98 = vst.msk [vmem:[%s97] sm:$0x1] %vm96, %v95

// kernel: bilstm_crf_forward.1
$region0: #{bilstm_crf_forward.1}
  #allocation0 [shape = 'u32[]', space=smem, size = 0x4, offset = 0x4, fixed_abs, tag = 'smem constant byte address 0x4 - core index']
  #allocation1 [shape = 'u32[144,128]{1,0:T(1,128)}', space=vmem, size = 0x12000, scoped, tag = 'internal scratch']
  #allocation2 [shape = 'f32[64,128]{1,0:T(8,128)}', space=vmem, size = 0x8000, scoped, tag = 'scratch operand']
  #allocation3 [shape = 'f32[64,32]{1,0:T(8,128)}', space=vmem, size = 0x8000, scoped, tag = 'scratch operand']
  #allocation4 [shape = 'f32[64,128]{1,0:T(8,128)}', space=vmem, size = 0x8000, scoped, tag = 'scratch operand']
  #allocation5 [shape = 's32[64,128]{1,0:T(8,128)}', space=vmem, size = 0x8000, scoped, tag = 'scratch operand']
  %s0 = inlined_call_operand.vmem [shape: f32[128,16], index: 0, kind: input, shape index: {}]
  %s1 = inlined_call_operand.vmem [shape: f32[128,16], index: 1, kind: input, shape index: {}]
  %s2 = inlined_call_operand.vmem [shape: f32[16,128], index: 2, kind: input, shape index: {}]
  %s3 = inlined_call_operand.vmem [shape: f32[16,128], index: 3, kind: input, shape index: {}]
  %s4 = inlined_call_operand.vmem [shape: f32[1,128], index: 4, kind: input, shape index: {}]
  %s5 = inlined_call_operand.vmem [shape: f32[32,128], index: 5, kind: input, shape index: {}]
  %s6 = inlined_call_operand.vmem [shape: f32[32,128], index: 6, kind: input, shape index: {}]
  %s7 = inlined_call_operand.vmem [shape: f32[32,128], index: 7, kind: input, shape index: {}]
  %s8 = inlined_call_operand.vmem [shape: f32[1,128], index: 8, kind: input, shape index: {}]
  %s9 = inlined_call_operand.vmem [shape: f32[8,128], index: 9, kind: input, shape index: {}]
  %s10 = inlined_call_operand.vmem [shape: f32[1,128], index: 10, kind: input, shape index: {}]
  %s11 = inlined_call_operand.vmem [shape: f32[8,32], index: 11, kind: input, shape index: {}]
  %s12 = inlined_call_operand.vmem [shape: f32[8,32], index: 12, kind: input, shape index: {}]
  %s13 = inlined_call_operand.vmem [shape: f32[128,128], index: 13, kind: output, shape index: {0}]
  %s14 = inlined_call_operand.vmem [shape: s32[128,128], index: 14, kind: output, shape index: {1}]
  %s15 = inlined_call_operand.vmem [shape: f32[16,128], index: 15, kind: output, shape index: {2}]
  %16 = xla_tuple %s13, %s14, %s15
  %s17 = sld [smem:[#allocation0]]
  $region101: #{bilstm_crf_forward.1} parent=0
    _
  %s19 = ssub.s32 1, %s17
  %s20 = scalar_select 0, %s19, %s17
  loop: start=0, step=1, limit=4
  $region2: #{bilstm_crf_forward.1} parent=0 // loop_pre_header
    _
  $region3: #{bilstm_crf_forward.1} parent=0 // loop_header
    %s22 = sphi 0, %s26
    %p23 = scmp.ge.s32.totalorder %s22, 4
    %s32 = sphi 0, %s34
    %s35 = sphi 0, %s32
    %s36 = sphi 0, %s35
    %s52 = sphi 0, %s36
    %s58 = sphi 0, %s60
    %s61 = sphi 0, %s58
    %s62 = sphi 0, %s61
    %s78 = sphi 0, %s62
    %s82 = sphi 0, %s82
    %s84 = sphi 0, %s82
    %s85 = sphi 0, %s84
    %s99 = sphi 0, %s85
    %s103 = sphi 0, %s103
    %s105 = sphi 0, %s103
    %s106 = sphi 0, %s105
    %s120 = sphi 0, %s106
    %s124 = sphi 0, %s124
    %s126 = sphi 0, %s124
    %s127 = sphi 0, %s126
    %s141 = sphi 0, %s127
    %s145 = sphi 0, %s145
    %s147 = sphi 0, %s145
    %s148 = sphi 0, %s147
    %s162 = sphi 0, %s148
    %s166 = sphi 0, %s166
    %s168 = sphi 0, %s166
    %s169 = sphi 0, %s168
    %s183 = sphi 0, %s169
    %s187 = sphi 0, %s187
    %s189 = sphi 0, %s187
    %s190 = sphi 0, %s189
    %s204 = sphi 0, %s190
    %s208 = sphi 0, %s208
    %s210 = sphi 0, %s208
    %s211 = sphi 0, %s210
    %s225 = sphi 0, %s211
    %s229 = sphi 0, %s229
    %s231 = sphi 0, %s229
    %s232 = sphi 0, %s231
    %s246 = sphi 0, %s232
    %s250 = sphi 0, %s250
    %s252 = sphi 0, %s250
    %s253 = sphi 0, %s252
    %s267 = sphi 0, %s253
    %s271 = sphi 0, %s271
    %s273 = sphi 0, %s271
    %s274 = sphi 0, %s273
    %s288 = sphi 0, %s274
    %s292 = sphi 0, %s292
    %s294 = sphi 0, %s292
    %s295 = sphi 0, %s294
    %s309 = sphi 0, %s295
    %s315 = sphi 0, %s317
    %s318 = sphi 0, %s315
    %s319 = sphi 0, %s318
    %s335 = sphi 0, %s319
    %s341 = sphi 0, %s343
    %s344 = sphi 0, %s341
    %s345 = sphi 0, %s344
    %s361 = sphi 0, %s345
    %s367 = sphi 0, %s369
    %s370 = sphi 0, %s367
    %s371 = sphi 0, %s370
    %s387 = sphi 0, %s371
  $region4: #{bilstm_crf_forward.1} parent=0 // loop_header_branch
    %25 = sbr.rel (%p23) target = $region8
  $region5: #{bilstm_crf_forward.1} parent=0 // loop_body
    %s27 = ssub.s32 %s22, 1
    %s28 = ssub.s32 %s22, 2
    %s29 = sadd.s32 %s22, 1
    %s30 = ssub.s32 %s22, %s29
    %p31 = scmp.eq.s32.totalorder %s30, 0
    %s33 = sadd.s32 %s32, 1
    %s34 = scalar_select %p31, %s32, %s33
    %p37 = pneg %p31
    %p38 = scmp.eq.s32.totalorder %s22, 1
    %p39 = por %p37, %p38
    %p40 = scmp.ne.s32.totalorder %s32, %s35
    %p41 = scmp.eq.s32.totalorder %s22, 0
    %p42 = por %p40, %p41
    %p43 = scmp.ne.s32.totalorder %s32, %s35
    %p44 = scmp.eq.s32.totalorder %s27, 1
    %p45 = por %p43, %p44
    %p46 = scmp.ne.s32.totalorder %s35, %s36
    %p47 = scmp.eq.s32.totalorder %s27, 0
    %p48 = por %p46, %p47
    %p49 = scmp.ne.s32.totalorder %s35, %s36
    %p50 = scmp.eq.s32.totalorder %s28, 1
    %p51 = por %p49, %p50
    %p53 = scmp.ne.s32.totalorder %s36, %s52
    %p54 = scmp.eq.s32.totalorder %s28, 0
    %p55 = por %p53, %p54
    %s56 = ssub.s32 %s22, %s29
    %p57 = scmp.eq.s32.totalorder %s56, 0
    %s59 = sadd.s32 %s58, 1
    %s60 = scalar_select %p57, %s58, %s59
    %p63 = pneg %p57
    %p64 = scmp.eq.s32.totalorder %s22, 1
    %p65 = por %p63, %p64
    %p66 = scmp.ne.s32.totalorder %s58, %s61
    %p67 = scmp.eq.s32.totalorder %s22, 0
    %p68 = por %p66, %p67
    %p69 = scmp.ne.s32.totalorder %s58, %s61
    %p70 = scmp.eq.s32.totalorder %s27, 1
    %p71 = por %p69, %p70
    %p72 = scmp.ne.s32.totalorder %s61, %s62
    %p73 = scmp.eq.s32.totalorder %s27, 0
    %p74 = por %p72, %p73
    %p75 = scmp.ne.s32.totalorder %s61, %s62
    %p76 = scmp.eq.s32.totalorder %s28, 1
    %p77 = por %p75, %p76
    %p79 = scmp.ne.s32.totalorder %s62, %s78
    %p80 = scmp.eq.s32.totalorder %s28, 0
    %p81 = por %p79, %p80
    %s83 = sadd.s32 %s82, 1
    %p86 = scmp.eq.s32.totalorder %s22, 1
    %p87 = scmp.ne.s32.totalorder %s82, %s84
    %p88 = scmp.eq.s32.totalorder %s22, 0
    %p89 = por %p87, %p88
    %p90 = scmp.ne.s32.totalorder %s82, %s84
    %p91 = scmp.eq.s32.totalorder %s27, 1
    %p92 = por %p90, %p91
    %p93 = scmp.ne.s32.totalorder %s84, %s85
    %p94 = scmp.eq.s32.totalorder %s27, 0
    %p95 = por %p93, %p94
    %p96 = scmp.ne.s32.totalorder %s84, %s85
    %p97 = scmp.eq.s32.totalorder %s28, 1
    %p98 = por %p96, %p97
    %p100 = scmp.ne.s32.totalorder %s85, %s99
    %p101 = scmp.eq.s32.totalorder %s28, 0
    %p102 = por %p100, %p101
    %s104 = sadd.s32 %s103, 1
    %p107 = scmp.eq.s32.totalorder %s22, 1
    %p108 = scmp.ne.s32.totalorder %s103, %s105
    %p109 = scmp.eq.s32.totalorder %s22, 0
    %p110 = por %p108, %p109
    %p111 = scmp.ne.s32.totalorder %s103, %s105
    %p112 = scmp.eq.s32.totalorder %s27, 1
    %p113 = por %p111, %p112
    %p114 = scmp.ne.s32.totalorder %s105, %s106
    %p115 = scmp.eq.s32.totalorder %s27, 0
    %p116 = por %p114, %p115
    %p117 = scmp.ne.s32.totalorder %s105, %s106
    %p118 = scmp.eq.s32.totalorder %s28, 1
    %p119 = por %p117, %p118
    %p121 = scmp.ne.s32.totalorder %s106, %s120
    %p122 = scmp.eq.s32.totalorder %s28, 0
    %p123 = por %p121, %p122
    %s125 = sadd.s32 %s124, 1
    %p128 = scmp.eq.s32.totalorder %s22, 1
    %p129 = scmp.ne.s32.totalorder %s124, %s126
    %p130 = scmp.eq.s32.totalorder %s22, 0
    %p131 = por %p129, %p130
    %p132 = scmp.ne.s32.totalorder %s124, %s126
    %p133 = scmp.eq.s32.totalorder %s27, 1
    %p134 = por %p132, %p133
    %p135 = scmp.ne.s32.totalorder %s126, %s127
    %p136 = scmp.eq.s32.totalorder %s27, 0
    %p137 = por %p135, %p136
    %p138 = scmp.ne.s32.totalorder %s126, %s127
    %p139 = scmp.eq.s32.totalorder %s28, 1
    %p140 = por %p138, %p139
    %p142 = scmp.ne.s32.totalorder %s127, %s141
    %p143 = scmp.eq.s32.totalorder %s28, 0
    %p144 = por %p142, %p143
    %s146 = sadd.s32 %s145, 1
    %p149 = scmp.eq.s32.totalorder %s22, 1
    %p150 = scmp.ne.s32.totalorder %s145, %s147
    %p151 = scmp.eq.s32.totalorder %s22, 0
    %p152 = por %p150, %p151
    %p153 = scmp.ne.s32.totalorder %s145, %s147
    %p154 = scmp.eq.s32.totalorder %s27, 1
    %p155 = por %p153, %p154
    %p156 = scmp.ne.s32.totalorder %s147, %s148
    %p157 = scmp.eq.s32.totalorder %s27, 0
    %p158 = por %p156, %p157
    %p159 = scmp.ne.s32.totalorder %s147, %s148
    %p160 = scmp.eq.s32.totalorder %s28, 1
    %p161 = por %p159, %p160
    %p163 = scmp.ne.s32.totalorder %s148, %s162
    %p164 = scmp.eq.s32.totalorder %s28, 0
    %p165 = por %p163, %p164
    %s167 = sadd.s32 %s166, 1
    %p170 = scmp.eq.s32.totalorder %s22, 1
    %p171 = scmp.ne.s32.totalorder %s166, %s168
    %p172 = scmp.eq.s32.totalorder %s22, 0
    %p173 = por %p171, %p172
    %p174 = scmp.ne.s32.totalorder %s166, %s168
    %p175 = scmp.eq.s32.totalorder %s27, 1
    %p176 = por %p174, %p175
    %p177 = scmp.ne.s32.totalorder %s168, %s169
    %p178 = scmp.eq.s32.totalorder %s27, 0
    %p179 = por %p177, %p178
    %p180 = scmp.ne.s32.totalorder %s168, %s169
    %p181 = scmp.eq.s32.totalorder %s28, 1
    %p182 = por %p180, %p181
    %p184 = scmp.ne.s32.totalorder %s169, %s183
    %p185 = scmp.eq.s32.totalorder %s28, 0
    %p186 = por %p184, %p185
    %s188 = sadd.s32 %s187, 1
    %p191 = scmp.eq.s32.totalorder %s22, 1
    %p192 = scmp.ne.s32.totalorder %s187, %s189
    %p193 = scmp.eq.s32.totalorder %s22, 0
    %p194 = por %p192, %p193
    %p195 = scmp.ne.s32.totalorder %s187, %s189
    %p196 = scmp.eq.s32.totalorder %s27, 1
    %p197 = por %p195, %p196
    %p198 = scmp.ne.s32.totalorder %s189, %s190
    %p199 = scmp.eq.s32.totalorder %s27, 0
    %p200 = por %p198, %p199
    %p201 = scmp.ne.s32.totalorder %s189, %s190
    %p202 = scmp.eq.s32.totalorder %s28, 1
    %p203 = por %p201, %p202
    %p205 = scmp.ne.s32.totalorder %s190, %s204
    %p206 = scmp.eq.s32.totalorder %s28, 0
    %p207 = por %p205, %p206
    %s209 = sadd.s32 %s208, 1
    %p212 = scmp.eq.s32.totalorder %s22, 1
    %p213 = scmp.ne.s32.totalorder %s208, %s210
    %p214 = scmp.eq.s32.totalorder %s22, 0
    %p215 = por %p213, %p214
    %p216 = scmp.ne.s32.totalorder %s208, %s210
    %p217 = scmp.eq.s32.totalorder %s27, 1
    %p218 = por %p216, %p217
    %p219 = scmp.ne.s32.totalorder %s210, %s211
    %p220 = scmp.eq.s32.totalorder %s27, 0
    %p221 = por %p219, %p220
    %p222 = scmp.ne.s32.totalorder %s210, %s211
    %p223 = scmp.eq.s32.totalorder %s28, 1
    %p224 = por %p222, %p223
    %p226 = scmp.ne.s32.totalorder %s211, %s225
    %p227 = scmp.eq.s32.totalorder %s28, 0
    %p228 = por %p226, %p227
    %s230 = sadd.s32 %s229, 1
    %p233 = scmp.eq.s32.totalorder %s22, 1
    %p234 = scmp.ne.s32.totalorder %s229, %s231
    %p235 = scmp.eq.s32.totalorder %s22, 0
    %p236 = por %p234, %p235
    %p237 = scmp.ne.s32.totalorder %s229, %s231
    %p238 = scmp.eq.s32.totalorder %s27, 1
    %p239 = por %p237, %p238
    %p240 = scmp.ne.s32.totalorder %s231, %s232
    %p241 = scmp.eq.s32.totalorder %s27, 0
    %p242 = por %p240, %p241
    %p243 = scmp.ne.s32.totalorder %s231, %s232
    %p244 = scmp.eq.s32.totalorder %s28, 1
    %p245 = por %p243, %p244
    %p247 = scmp.ne.s32.totalorder %s232, %s246
    %p248 = scmp.eq.s32.totalorder %s28, 0
    %p249 = por %p247, %p248
    %s251 = sadd.s32 %s250, 1
    %p254 = scmp.eq.s32.totalorder %s22, 1
    %p255 = scmp.ne.s32.totalorder %s250, %s252
    %p256 = scmp.eq.s32.totalorder %s22, 0
    %p257 = por %p255, %p256
    %p258 = scmp.ne.s32.totalorder %s250, %s252
    %p259 = scmp.eq.s32.totalorder %s27, 1
    %p260 = por %p258, %p259
    %p261 = scmp.ne.s32.totalorder %s252, %s253
    %p262 = scmp.eq.s32.totalorder %s27, 0
    %p263 = por %p261, %p262
    %p264 = scmp.ne.s32.totalorder %s252, %s253
    %p265 = scmp.eq.s32.totalorder %s28, 1
    %p266 = por %p264, %p265
    %p268 = scmp.ne.s32.totalorder %s253, %s267
    %p269 = scmp.eq.s32.totalorder %s28, 0
    %p270 = por %p268, %p269
    %s272 = sadd.s32 %s271, 1
    %p275 = scmp.eq.s32.totalorder %s22, 1
    %p276 = scmp.ne.s32.totalorder %s271, %s273
    %p277 = scmp.eq.s32.totalorder %s22, 0
    %p278 = por %p276, %p277
    %p279 = scmp.ne.s32.totalorder %s271, %s273
    %p280 = scmp.eq.s32.totalorder %s27, 1
    %p281 = por %p279, %p280
    %p282 = scmp.ne.s32.totalorder %s273, %s274
    %p283 = scmp.eq.s32.totalorder %s27, 0
    %p284 = por %p282, %p283
    %p285 = scmp.ne.s32.totalorder %s273, %s274
    %p286 = scmp.eq.s32.totalorder %s28, 1
    %p287 = por %p285, %p286
    %p289 = scmp.ne.s32.totalorder %s274, %s288
    %p290 = scmp.eq.s32.totalorder %s28, 0
    %p291 = por %p289, %p290
    %s293 = sadd.s32 %s292, 1
    %p296 = scmp.eq.s32.totalorder %s22, 1
    %p297 = scmp.ne.s32.totalorder %s292, %s294
    %p298 = scmp.eq.s32.totalorder %s22, 0
    %p299 = por %p297, %p298
    %p300 = scmp.ne.s32.totalorder %s292, %s294
    %p301 = scmp.eq.s32.totalorder %s27, 1
    %p302 = por %p300, %p301
    %p303 = scmp.ne.s32.totalorder %s294, %s295
    %p304 = scmp.eq.s32.totalorder %s27, 0
    %p305 = por %p303, %p304
    %p306 = scmp.ne.s32.totalorder %s294, %s295
    %p307 = scmp.eq.s32.totalorder %s28, 1
    %p308 = por %p306, %p307
    %p310 = scmp.ne.s32.totalorder %s295, %s309
    %p311 = scmp.eq.s32.totalorder %s28, 0
    %p312 = por %p310, %p311
    %s313 = ssub.s32 %s22, %s29
    %p314 = scmp.eq.s32.totalorder %s313, 0
    %s316 = sadd.s32 %s315, 1
    %s317 = scalar_select %p314, %s315, %s316
    %p320 = pneg %p314
    %p321 = scmp.eq.s32.totalorder %s22, 1
    %p322 = por %p320, %p321
    %p323 = scmp.ne.s32.totalorder %s315, %s318
    %p324 = scmp.eq.s32.totalorder %s22, 0
    %p325 = por %p323, %p324
    %p326 = scmp.ne.s32.totalorder %s315, %s318
    %p327 = scmp.eq.s32.totalorder %s27, 1
    %p328 = por %p326, %p327
    %p329 = scmp.ne.s32.totalorder %s318, %s319
    %p330 = scmp.eq.s32.totalorder %s27, 0
    %p331 = por %p329, %p330
    %p332 = scmp.ne.s32.totalorder %s318, %s319
    %p333 = scmp.eq.s32.totalorder %s28, 1
    %p334 = por %p332, %p333
    %p336 = scmp.ne.s32.totalorder %s319, %s335
    %p337 = scmp.eq.s32.totalorder %s28, 0
    %p338 = por %p336, %p337
    %s339 = ssub.s32 %s22, %s29
    %p340 = scmp.eq.s32.totalorder %s339, 0
    %s342 = sadd.s32 %s341, 1
    %s343 = scalar_select %p340, %s341, %s342
    %p346 = pneg %p340
    %p347 = scmp.eq.s32.totalorder %s22, 1
    %p348 = por %p346, %p347
    %p349 = scmp.ne.s32.totalorder %s341, %s344
    %p350 = scmp.eq.s32.totalorder %s22, 0
    %p351 = por %p349, %p350
    %p352 = scmp.ne.s32.totalorder %s341, %s344
    %p353 = scmp.eq.s32.totalorder %s27, 1
    %p354 = por %p352, %p353
    %p355 = scmp.ne.s32.totalorder %s344, %s345
    %p356 = scmp.eq.s32.totalorder %s27, 0
    %p357 = por %p355, %p356
    %p358 = scmp.ne.s32.totalorder %s344, %s345
    %p359 = scmp.eq.s32.totalorder %s28, 1
    %p360 = por %p358, %p359
    %p362 = scmp.ne.s32.totalorder %s345, %s361
    %p363 = scmp.eq.s32.totalorder %s28, 0
    %p364 = por %p362, %p363
    %s365 = ssub.s32 %s22, %s29
    %p366 = scmp.eq.s32.totalorder %s365, 0
    %s368 = sadd.s32 %s367, 1
    %s369 = scalar_select %p366, %s367, %s368
    %p372 = pneg %p366
    %p373 = scmp.eq.s32.totalorder %s22, 1
    %p374 = por %p372, %p373
    %p375 = scmp.ne.s32.totalorder %s367, %s370
    %p376 = scmp.eq.s32.totalorder %s22, 0
    %p377 = por %p375, %p376
    %p378 = scmp.ne.s32.totalorder %s367, %s370
    %p379 = scmp.eq.s32.totalorder %s27, 1
    %p380 = por %p378, %p379
    %p381 = scmp.ne.s32.totalorder %s370, %s371
    %p382 = scmp.eq.s32.totalorder %s27, 0
    %p383 = por %p381, %p382
    %p384 = scmp.ne.s32.totalorder %s370, %s371
    %p385 = scmp.eq.s32.totalorder %s28, 1
    %p386 = por %p384, %p385
    %p388 = scmp.ne.s32.totalorder %s371, %s387
    %p389 = scmp.eq.s32.totalorder %s28, 0
    %p390 = por %p388, %p389
    %p391 = scmp.le.s32.totalorder 1, %s22
    %p392 = scmp.lt.s32.totalorder %s22, 3
    %p393 = pnand %p391, %p392
    %p394 = pneg %p393
    // Predicated region
    $region9: #{bilstm_crf_forward.1} parent=5 // pred_check
      _
    $region10: #{bilstm_crf_forward.1} parent=5 // pred_check_branch
      %396 = sbr.rel (%p393) target = $region12
    $region11: #{bilstm_crf_forward.1} parent=5 // pred_region
      %s397 = ssub.s32 %s22, 1
      // Predicated region
      $region13: #{bilstm_crf_forward.1} parent=11 // pred_check
        %p398 = pneg %p95
      $region14: #{bilstm_crf_forward.1} parent=11 // pred_check_branch
        %400 = sbr.rel (%p398) target = $region16
      $region15: #{bilstm_crf_forward.1} parent=11 // pred_region
        _
      $region16: #{bilstm_crf_forward.1} parent=11 // pred_fallthru
        _
      // Predicated region
      $region17: #{bilstm_crf_forward.1} parent=11 // pred_check
        %p401 = pneg %p116
      $region18: #{bilstm_crf_forward.1} parent=11 // pred_check_branch
        %403 = sbr.rel (%p401) target = $region20
      $region19: #{bilstm_crf_forward.1} parent=11 // pred_region
        _
      $region20: #{bilstm_crf_forward.1} parent=11 // pred_fallthru
        _
      // Predicated region
      $region21: #{bilstm_crf_forward.1} parent=11 // pred_check
        %p404 = pneg %p137
      $region22: #{bilstm_crf_forward.1} parent=11 // pred_check_branch
        %406 = sbr.rel (%p404) target = $region24
      $region23: #{bilstm_crf_forward.1} parent=11 // pred_region
        _
      $region24: #{bilstm_crf_forward.1} parent=11 // pred_fallthru
        _
      // Predicated region
      $region25: #{bilstm_crf_forward.1} parent=11 // pred_check
        %p407 = pneg %p158
      $region26: #{bilstm_crf_forward.1} parent=11 // pred_check_branch
        %409 = sbr.rel (%p407) target = $region28
      $region27: #{bilstm_crf_forward.1} parent=11 // pred_region
        _
      $region28: #{bilstm_crf_forward.1} parent=11 // pred_fallthru
        _
      // Predicated region
      $region29: #{bilstm_crf_forward.1} parent=11 // pred_check
        %p410 = pneg %p179
      $region30: #{bilstm_crf_forward.1} parent=11 // pred_check_branch
        %412 = sbr.rel (%p410) target = $region32
      $region31: #{bilstm_crf_forward.1} parent=11 // pred_region
        _
      $region32: #{bilstm_crf_forward.1} parent=11 // pred_fallthru
        _
      // Predicated region
      $region33: #{bilstm_crf_forward.1} parent=11 // pred_check
        %p413 = pneg %p200
      $region34: #{bilstm_crf_forward.1} parent=11 // pred_check_branch
        %415 = sbr.rel (%p413) target = $region36
      $region35: #{bilstm_crf_forward.1} parent=11 // pred_region
        _
      $region36: #{bilstm_crf_forward.1} parent=11 // pred_fallthru
        _
      // Predicated region
      $region37: #{bilstm_crf_forward.1} parent=11 // pred_check
        %p416 = pneg %p221
      $region38: #{bilstm_crf_forward.1} parent=11 // pred_check_branch
        %418 = sbr.rel (%p416) target = $region40
      $region39: #{bilstm_crf_forward.1} parent=11 // pred_region
        _
      $region40: #{bilstm_crf_forward.1} parent=11 // pred_fallthru
        _
      // Predicated region
      $region41: #{bilstm_crf_forward.1} parent=11 // pred_check
        %p419 = pneg %p242
      $region42: #{bilstm_crf_forward.1} parent=11 // pred_check_branch
        %421 = sbr.rel (%p419) target = $region44
      $region43: #{bilstm_crf_forward.1} parent=11 // pred_region
        _
      $region44: #{bilstm_crf_forward.1} parent=11 // pred_fallthru
        _
      // Predicated region
      $region45: #{bilstm_crf_forward.1} parent=11 // pred_check
        %p422 = pneg %p263
      $region46: #{bilstm_crf_forward.1} parent=11 // pred_check_branch
        %424 = sbr.rel (%p422) target = $region48
      $region47: #{bilstm_crf_forward.1} parent=11 // pred_region
        _
      $region48: #{bilstm_crf_forward.1} parent=11 // pred_fallthru
        _
      // Predicated region
      $region49: #{bilstm_crf_forward.1} parent=11 // pred_check
        %p425 = pneg %p284
      $region50: #{bilstm_crf_forward.1} parent=11 // pred_check_branch
        %427 = sbr.rel (%p425) target = $region52
      $region51: #{bilstm_crf_forward.1} parent=11 // pred_region
        _
      $region52: #{bilstm_crf_forward.1} parent=11 // pred_fallthru
        _
      // Predicated region
      $region53: #{bilstm_crf_forward.1} parent=11 // pred_check
        %p428 = pneg %p305
      $region54: #{bilstm_crf_forward.1} parent=11 // pred_check_branch
        %430 = sbr.rel (%p428) target = $region56
      $region55: #{bilstm_crf_forward.1} parent=11 // pred_region
        _
      $region56: #{bilstm_crf_forward.1} parent=11 // pred_fallthru
        _
    $region12: #{bilstm_crf_forward.1} parent=5 // pred_fallthru
      _
    %p431 = scmp.lt.s32.totalorder %s22, 2
    // Predicated region
    $region57: #{bilstm_crf_forward.1} parent=5 // pred_check
      %p432 = pneg %p431
    $region58: #{bilstm_crf_forward.1} parent=5 // pred_check_branch
      %434 = sbr.rel (%p432) target = $region60
    $region59: #{bilstm_crf_forward.1} parent=5 // pred_region
      // Predicated region
      $region61: #{bilstm_crf_forward.1} parent=59 // pred_check
        %p435 = pneg %p42
      $region62: #{bilstm_crf_forward.1} parent=59 // pred_check_branch
        %437 = sbr.rel (%p435) target = $region64
      $region63: #{bilstm_crf_forward.1} parent=59 // pred_region
        %s438 = smul.u32 8, %s22
        %p439 = scmp.lt.s32.totalorder %s438, 15
        %s440 = scalar_select %p439, %s438, 15
        %s441 = smul.addr %s440, 8
        %s442 = scalar_lea.vmem %s0, %s441
        %s443 = smul.u32 8, %s22
      $region64: #{bilstm_crf_forward.1} parent=59 // pred_fallthru
        _
      // Predicated region
      $region65: #{bilstm_crf_forward.1} parent=59 // pred_check
        %p444 = pneg %p68
      $region66: #{bilstm_crf_forward.1} parent=59 // pred_check_branch
        %446 = sbr.rel (%p444) target = $region68
      $region67: #{bilstm_crf_forward.1} parent=59 // pred_region
        %s447 = smul.u32 8, %s22
        %p448 = scmp.lt.s32.totalorder %s447, 15
        %s449 = scalar_select %p448, %s447, 15
        %s450 = smul.addr %s449, 8
        %s451 = scalar_lea.vmem %s1, %s450
        %s452 = smul.u32 8, %s22
      $region68: #{bilstm_crf_forward.1} parent=59 // pred_fallthru
        _
    $region60: #{bilstm_crf_forward.1} parent=5 // pred_fallthru
      _
    %p453 = scmp.le.s32.totalorder 1, %s22
    %p454 = scmp.lt.s32.totalorder %s22, 3
    %p455 = pnand %p453, %p454
    %p456 = pneg %p455
    // Predicated region
    $region69: #{bilstm_crf_forward.1} parent=5 // pred_check
      _
    $region70: #{bilstm_crf_forward.1} parent=5 // pred_check_branch
      %458 = sbr.rel (%p455) target = $region72
    $region71: #{bilstm_crf_forward.1} parent=5 // pred_region
      %s459 = ssub.s32 %s22, 1
      %s460 = smul.u32 8, %s27
      %p461 = scmp.lt.s32.totalorder %s460, 15
      %s462 = scalar_select %p461, %s460, 15
      %s463 = smul.addr %s462, 8
      %s464 = scalar_lea.vmem %s0, %s463
      %p465 = pneg %p48
      %p466 = pneg %p45
      %s467 = smul.u32 8, %s27
      %p468 = scmp.lt.s32.totalorder %s467, 15
      %s469 = scalar_select %p468, %s467, 15
      %s470 = smul.addr %s469, 8
      %s471 = scalar_lea.vmem %s1, %s470
      %p472 = pneg %p74
      %p473 = pneg %p71
      %p474 = pneg %p95
      %p475 = pneg %p92
      %p476 = pneg %p116
      %p477 = pneg %p113
      %p478 = pneg %p137
      %p479 = pneg %p134
      %p480 = pneg %p158
      %p481 = pneg %p155
      %p482 = pneg %p179
      %p483 = pneg %p176
      %p484 = pneg %p200
      %p485 = pneg %p197
      %p486 = pneg %p221
      %p487 = pneg %p218
      %p488 = pneg %p242
      %p489 = pneg %p239
      %p490 = pneg %p263
      %p491 = pneg %p260
      %p492 = pneg %p284
      %p493 = pneg %p281
      %p494 = pneg %p305
      %p495 = pneg %p302
      %p496 = pneg %p331
      %p497 = pneg %p328
      %s498 = smul.u32 8, %s27
      %p499 = scmp.lt.s32.totalorder %s498, 15
      %s500 = scalar_select %p499, %s498, 15
      %s501 = smul.addr %s500, 8
      %s502 = scalar_lea.vmem %s13, %s501
      %p503 = pneg %p357
      %p504 = pneg %p354
      %s505 = smul.u32 8, %s27
      %p506 = scmp.lt.s32.totalorder %s505, 15
      %s507 = scalar_select %p506, %s505, 15
      %s508 = smul.addr %s507, 8
      %s509 = scalar_lea.vmem %s14, %s508
      %p510 = pneg %p383
      %p511 = pneg %p380
      %p512 = scmp.lt.s32.totalorder %s27, 1
      %s513 = scalar_select %p512, %s27, 1
      %s514 = smul.addr %s513, 8
      %s515 = scalar_lea.vmem %s15, %s514
      %s516 = smul.u32 8, %s27
      %p517 = scmp.lt.s32.totalorder %s516, 15
      %s518 = scalar_select %p517, %s516, 15
      %s519 = smul.addr %s518, 8
      %s520 = scalar_lea.vmem %s0, %s519
      %s521 = smul.u32 8, %s27
      %s522 = smul.u32 8, %s27
      %p523 = scmp.lt.s32.totalorder %s522, 15
      %s524 = scalar_select %p523, %s522, 15
      %s525 = smul.addr %s524, 8
      %s526 = scalar_lea.vmem %s1, %s525
      %s527 = smul.u32 8, %s27
      %s528 = smul.u32 8, %s27
      %p529 = scmp.lt.s32.totalorder %s528, 15
      %s530 = scalar_select %p529, %s528, 15
      %s531 = smul.addr %s530, 8
      %s532 = scalar_lea.vmem %s13, %s531
      %s533 = smul.u32 8, %s27
      %s534 = smul.u32 8, %s27
      %p535 = scmp.lt.s32.totalorder %s534, 15
      %s536 = scalar_select %p535, %s534, 15
      %s537 = smul.addr %s536, 8
      %s538 = scalar_lea.vmem %s14, %s537
      %s539 = smul.u32 8, %s27
      %p540 = scmp.lt.s32.totalorder %s27, 1
      %s541 = scalar_select %p540, %s27, 1
      %s542 = smul.addr %s541, 8
      %s543 = scalar_lea.vmem %s15, %s542
      %v544 = vld [vmem:[%s520] sm:$0xff]
      %v545 = vld [vmem:[%s520 + $0x8] sm:$0xff]
      %v546 = vld [vmem:[%s520 + $0x10] sm:$0xff]
      %v547 = vld [vmem:[%s520 + $0x18] sm:$0xff]
      %v548 = vld [vmem:[%s520 + $0x20] sm:$0xff]
      %v549 = vld [vmem:[%s520 + $0x28] sm:$0xff]
      %v550 = vld [vmem:[%s520 + $0x30] sm:$0xff]
      %v551 = vld [vmem:[%s520 + $0x38] sm:$0xff]
      %v552 = vld [vmem:[%s2] sm:$0xff]
      %v553 = vld [vmem:[%s2 + $0x8] sm:$0xff]
      %v554 = vld [vmem:[%s526] sm:$0xff]
      %v555 = vld [vmem:[%s526 + $0x8] sm:$0xff]
      %v556 = vld [vmem:[%s526 + $0x10] sm:$0xff]
      %v557 = vld [vmem:[%s526 + $0x18] sm:$0xff]
      %v558 = vld [vmem:[%s526 + $0x20] sm:$0xff]
      %v559 = vld [vmem:[%s526 + $0x28] sm:$0xff]
      %v560 = vld [vmem:[%s526 + $0x30] sm:$0xff]
      %v561 = vld [vmem:[%s526 + $0x38] sm:$0xff]
      %v562 = vld [vmem:[%s3] sm:$0xff]
      %v563 = vld [vmem:[%s3 + $0x8] sm:$0xff]
      %vm564 = vcmask 130048
      %v566 = vsel %vm564, %v554, 0
      %v569 = vsel %vm564, %v555, 0
      %v572 = vsel %vm564, %v556, 0
      %v575 = vsel %vm564, %v557, 0
      %v578 = vsel %vm564, %v558, 0
      %v581 = vsel %vm564, %v559, 0
      %v584 = vsel %vm564, %v560, 0
      %v587 = vsel %vm564, %v561, 0
      %589 = vmatprep.subr.mxu0 0.0
      %590 = vmatpush1.msra.mxu0 %v562
      %591 = vmatprep.subr.mxu0 0.0
      %592 = vmatpush1.msra.mxu0 %v563
      %593 = vmatprep.subr.mxu0 0.0
      %594 = vmatpush1.msra.mxu0 0.0
      %595 = vmatprep.subr.mxu0 0.0
      %596 = vmatpush1.msra.mxu0 0.0
      %597 = vmatprep.subr.mxu0 0.0
      %598 = vmatpush1.msra.mxu0 0.0
      %599 = vmatprep.subr.mxu0 0.0
      %600 = vmatpush1.msra.mxu0 0.0
      %601 = vmatprep.subr.mxu0 0.0
      %602 = vmatpush1.msra.mxu0 0.0
      %603 = vmatprep.subr.mxu0 0.0
      %604 = vmatpush1.msra.mxu0 0.0
      %605 = vmatprep.subr.mxu0 0.0
      %606 = vmatpush1.msra.mxu0 0.0
      %607 = vmatprep.subr.mxu0 0.0
      %608 = vmatpush1.msra.mxu0 0.0
      %609 = vmatprep.subr.mxu0 0.0
      %610 = vmatpush1.msra.mxu0 0.0
      %611 = vmatprep.subr.mxu0 0.0
      %612 = vmatpush1.msra.mxu0 0.0
      %613 = vmatprep.subr.mxu0 0.0
      %614 = vmatpush1.msra.mxu0 0.0
      %615 = vmatprep.subr.mxu0 0.0
      %616 = vmatpush1.msra.mxu0 0.0
      %617 = vmatprep.subr.mxu0 0.0
      %618 = vmatpush1.msra.mxu0 0.0
      %619 = vmatprep.subr.mxu0 0.0
      %620 = vmatpush1.msra.mxu0 0.0
      %621 = vmatprep.subr.mxu0 0.0
      %622 = vmatpush1.msra.mxu0 0.0
      %623 = vmatprep.subr.mxu0 0.0
      %624 = vmatpush1.msra.mxu0 0.0
      %625 = vmatprep.subr.mxu0 0.0
      %626 = vmatpush1.msra.mxu0 0.0
      %627 = vmatprep.subr.mxu0 0.0
      %628 = vmatpush1.msra.mxu0 0.0
      %629 = vmatprep.subr.mxu0 0.0
      %630 = vmatpush1.msra.mxu0 0.0
      %631 = vmatprep.subr.mxu0 0.0
      %632 = vmatpush1.msra.mxu0 0.0
      %633 = vmatprep.subr.mxu0 0.0
      %634 = vmatpush1.msra.mxu0 0.0
      %635 = vmatprep.subr.mxu0 0.0
      %636 = vmatpush1.msra.mxu0 0.0
      %637 = vmatprep.subr.mxu0 0.0
      %638 = vmatpush1.msra.mxu0 0.0
      %639 = vmatprep.subr.mxu0 0.0
      %640 = vmatpush1.msra.mxu0 0.0
      %641 = vmatprep.subr.mxu0 0.0
      %642 = vmatpush1.msra.mxu0 0.0
      %643 = vmatprep.subr.mxu0 0.0
      %644 = vmatpush1.msra.mxu0 0.0
      %645 = vmatprep.subr.mxu0 0.0
      %646 = vmatpush1.msra.mxu0 0.0
      %647 = vmatprep.subr.mxu0 0.0
      %648 = vmatpush1.msra.mxu0 0.0
      %649 = vmatprep.subr.mxu0 0.0
      %650 = vmatpush1.msra.mxu0 0.0
      %651 = vmatprep.subr.mxu0 0.0
      %652 = vmatpush1.msra.mxu0 0.0
      %653 = vmatprep.mubr.f32.mxu0 0.0
      %654 = vmatmul.mubr.f32.gmra.mrb[0].mxu0 %v566
      %v655 = vpop.f32.mrb[0].mxu0
      %v656 = vadd.f32 0.0, %v655
      %v657 = vpop.f32.mrb[0].mxu0
      %658 = vmatprep.mubr.f32.mxu0 0.0
      %659 = vmatmul.mubr.f32.gmra.mrb[0].mxu0 %v569
      %v660 = vpop.f32.mrb[0].mxu0
      %v661 = vadd.f32 0.0, %v660
      %v662 = vpop.f32.mrb[0].mxu0
      %663 = vmatprep.mubr.f32.mxu0 0.0
      %664 = vmatmul.mubr.f32.gmra.mrb[0].mxu0 %v572
      %v665 = vpop.f32.mrb[0].mxu0
      %v666 = vadd.f32 0.0, %v665
      %v667 = vpop.f32.mrb[0].mxu0
      %668 = vmatprep.mubr.f32.mxu0 0.0
      %669 = vmatmul.mubr.f32.gmra.mrb[0].mxu0 %v575
      %v670 = vpop.f32.mrb[0].mxu0
      %v671 = vadd.f32 0.0, %v670
      %v672 = vpop.f32.mrb[0].mxu0
      %673 = vmatprep.mubr.f32.mxu0 0.0
      %674 = vmatmul.mubr.f32.gmra.mrb[0].mxu0 %v578
      %v675 = vpop.f32.mrb[0].mxu0
      %v676 = vadd.f32 0.0, %v675
      %v677 = vpop.f32.mrb[0].mxu0
      %678 = vmatprep.mubr.f32.mxu0 0.0
      %679 = vmatmul.mubr.f32.gmra.mrb[0].mxu0 %v581
      %v680 = vpop.f32.mrb[0].mxu0
      %v681 = vadd.f32 0.0, %v680
      %v682 = vpop.f32.mrb[0].mxu0
      %683 = vmatprep.mubr.f32.mxu0 0.0
      %684 = vmatmul.mubr.f32.gmra.mrb[0].mxu0 %v584
      %v685 = vpop.f32.mrb[0].mxu0
      %v686 = vadd.f32 0.0, %v685
      %v687 = vpop.f32.mrb[0].mxu0
      %688 = vmatprep.mubr.f32.mxu0 0.0
      %689 = vmatmul.mubr.f32.gmra.mrb[0].mxu0 %v587
      %v690 = vpop.f32.mrb[0].mxu0
      %v691 = vadd.f32 0.0, %v690
      %v692 = vpop.f32.mrb[0].mxu0
      %693 = vdwg.mxu0
      %v695 = vsel %vm564, %v544, 0
      %v698 = vsel %vm564, %v545, 0
      %v701 = vsel %vm564, %v546, 0
      %v704 = vsel %vm564, %v547, 0
      %v707 = vsel %vm564, %v548, 0
      %v710 = vsel %vm564, %v549, 0
      %v713 = vsel %vm564, %v550, 0
      %v716 = vsel %vm564, %v551, 0
      %718 = vmatprep.subr.mxu0 0.0
      %719 = vmatpush1.msra.mxu0 %v552
      %720 = vmatprep.subr.mxu0 0.0
      %721 = vmatpush1.msra.mxu0 %v553
      %722 = vmatprep.subr.mxu0 0.0
      %723 = vmatpush1.msra.mxu0 0.0
      %724 = vmatprep.subr.mxu0 0.0
      %725 = vmatpush1.msra.mxu0 0.0
      %726 = vmatprep.subr.mxu0 0.0
      %727 = vmatpush1.msra.mxu0 0.0
      %728 = vmatprep.subr.mxu0 0.0
      %729 = vmatpush1.msra.mxu0 0.0
      %730 = vmatprep.subr.mxu0 0.0
      %731 = vmatpush1.msra.mxu0 0.0
      %732 = vmatprep.subr.mxu0 0.0
      %733 = vmatpush1.msra.mxu0 0.0
      %734 = vmatprep.subr.mxu0 0.0
      %735 = vmatpush1.msra.mxu0 0.0
      %736 = vmatprep.subr.mxu0 0.0
      %737 = vmatpush1.msra.mxu0 0.0
      %738 = vmatprep.subr.mxu0 0.0
      %739 = vmatpush1.msra.mxu0 0.0
      %740 = vmatprep.subr.mxu0 0.0
      %741 = vmatpush1.msra.mxu0 0.0
      %742 = vmatprep.subr.mxu0 0.0
      %743 = vmatpush1.msra.mxu0 0.0
      %744 = vmatprep.subr.mxu0 0.0
      %745 = vmatpush1.msra.mxu0 0.0
      %746 = vmatprep.subr.mxu0 0.0
      %747 = vmatpush1.msra.mxu0 0.0
      %748 = vmatprep.subr.mxu0 0.0
      %749 = vmatpush1.msra.mxu0 0.0
      %750 = vmatprep.subr.mxu0 0.0
      %751 = vmatpush1.msra.mxu0 0.0
      %752 = vmatprep.subr.mxu0 0.0
      %753 = vmatpush1.msra.mxu0 0.0
      %754 = vmatprep.subr.mxu0 0.0
      %755 = vmatpush1.msra.mxu0 0.0
      %756 = vmatprep.subr.mxu0 0.0
      %757 = vmatpush1.msra.mxu0 0.0
      %758 = vmatprep.subr.mxu0 0.0
      %759 = vmatpush1.msra.mxu0 0.0
      %760 = vmatprep.subr.mxu0 0.0
      %761 = vmatpush1.msra.mxu0 0.0
      %762 = vmatprep.subr.mxu0 0.0
      %763 = vmatpush1.msra.mxu0 0.0
      %764 = vmatprep.subr.mxu0 0.0
      %765 = vmatpush1.msra.mxu0 0.0
      %766 = vmatprep.subr.mxu0 0.0
      %767 = vmatpush1.msra.mxu0 0.0
      %768 = vmatprep.subr.mxu0 0.0
      %769 = vmatpush1.msra.mxu0 0.0
      %770 = vmatprep.subr.mxu0 0.0
      %771 = vmatpush1.msra.mxu0 0.0
      %772 = vmatprep.subr.mxu0 0.0
      %773 = vmatpush1.msra.mxu0 0.0
      %774 = vmatprep.subr.mxu0 0.0
      %775 = vmatpush1.msra.mxu0 0.0
      %776 = vmatprep.subr.mxu0 0.0
      %777 = vmatpush1.msra.mxu0 0.0
      %778 = vmatprep.subr.mxu0 0.0
      %779 = vmatpush1.msra.mxu0 0.0
      %780 = vmatprep.subr.mxu0 0.0
      %781 = vmatpush1.msra.mxu0 0.0
      %782 = vmatprep.mubr.f32.mxu0 0.0
      %783 = vmatmul.mubr.f32.gmra.mrb[0].mxu0 %v695
      %v784 = vpop.f32.mrb[0].mxu0
      %v785 = vadd.f32 %v656, %v784
      %v786 = vpop.f32.mrb[0].mxu0
      %787 = vmatprep.mubr.f32.mxu0 0.0
      %788 = vmatmul.mubr.f32.gmra.mrb[0].mxu0 %v698
      %v789 = vpop.f32.mrb[0].mxu0
      %v790 = vadd.f32 %v661, %v789
      %v791 = vpop.f32.mrb[0].mxu0
      %792 = vmatprep.mubr.f32.mxu0 0.0
      %793 = vmatmul.mubr.f32.gmra.mrb[0].mxu0 %v701
      %v794 = vpop.f32.mrb[0].mxu0
      %v795 = vadd.f32 %v666, %v794
      %v796 = vpop.f32.mrb[0].mxu0
      %797 = vmatprep.mubr.f32.mxu0 0.0
      %798 = vmatmul.mubr.f32.gmra.mrb[0].mxu0 %v704
      %v799 = vpop.f32.mrb[0].mxu0
      %v800 = vadd.f32 %v671, %v799
      %v801 = vpop.f32.mrb[0].mxu0
      %802 = vmatprep.mubr.f32.mxu0 0.0
      %803 = vmatmul.mubr.f32.gmra.mrb[0].mxu0 %v707
      %v804 = vpop.f32.mrb[0].mxu0
      %v805 = vadd.f32 %v676, %v804
      %v806 = vpop.f32.mrb[0].mxu0
      %807 = vmatprep.mubr.f32.mxu0 0.0
      %808 = vmatmul.mubr.f32.gmra.mrb[0].mxu0 %v710
      %v809 = vpop.f32.mrb[0].mxu0
      %v810 = vadd.f32 %v681, %v809
      %v811 = vpop.f32.mrb[0].mxu0
      %812 = vmatprep.mubr.f32.mxu0 0.0
      %813 = vmatmul.mubr.f32.gmra.mrb[0].mxu0 %v713
      %v814 = vpop.f32.mrb[0].mxu0
      %v815 = vadd.f32 %v686, %v814
      %v816 = vpop.f32.mrb[0].mxu0
      %817 = vmatprep.mubr.f32.mxu0 0.0
      %818 = vmatmul.mubr.f32.gmra.mrb[0].mxu0 %v716
      %v819 = vpop.f32.mrb[0].mxu0
      %v820 = vadd.f32 %v691, %v819
      %v821 = vpop.f32.mrb[0].mxu0
      %822 = vdwg.mxu0
      %v823 = vld [vmem:[%s4] sm:$0x1]
      %v825 = vlaneseq
      %v826 = vshrl.u32 %v825, 7
      %v827 = vsub.s32 0, %v826
      %v828 = vrot.slane %v823, %v827
      %v830 = vadd.f32 %v785, %v828
      %v831 = vadd.f32 %v790, %v828
      %v832 = vadd.f32 %v795, %v828
      %v833 = vadd.f32 %v800, %v828
      %v834 = vadd.f32 %v805, %v828
      %v835 = vadd.f32 %v810, %v828
      %v836 = vadd.f32 %v815, %v828
      %v837 = vadd.f32 %v820, %v828
      %838 = vst [vmem:[#allocation2] sm:$0xff] %v830
      %839 = vst [vmem:[#allocation2 + $0x8] sm:$0xff] %v831
      %840 = vst [vmem:[#allocation2 + $0x10] sm:$0xff] %v832
      %841 = vst [vmem:[#allocation2 + $0x18] sm:$0xff] %v833
      %842 = vst [vmem:[#allocation2 + $0x20] sm:$0xff] %v834
      %843 = vst [vmem:[#allocation2 + $0x28] sm:$0xff] %v835
      %844 = vst [vmem:[#allocation2 + $0x30] sm:$0xff] %v836
      %845 = vst [vmem:[#allocation2 + $0x38] sm:$0xff] %v837
      %v846 = vld [vmem:[%s11] sm:$0xff]
      %v847 = vld [vmem:[%s12] sm:$0xff]
      %v848 = vld [vmem:[#allocation2] sm:$0xff]
      %v849 = vld [vmem:[%s5] sm:$0xff]
      %v850 = vld [vmem:[%s5 + $0x8] sm:$0xff]
      %v851 = vld [vmem:[%s5 + $0x10] sm:$0xff]
      %v852 = vld [vmem:[%s5 + $0x18] sm:$0xff]
      %vm853 = vcmask 261120
      %v855 = vsel %vm853, %v846, 0
      %857 = vmatprep.subr.mxu0 0.0
      %858 = vmatpush1.msra.mxu0 %v849
      %859 = vmatprep.subr.mxu0 0.0
      %860 = vmatpush1.msra.mxu0 %v850
      %861 = vmatprep.subr.mxu0 0.0
      %862 = vmatpush1.msra.mxu0 %v851
      %863 = vmatprep.subr.mxu0 0.0
      %864 = vmatpush1.msra.mxu0 %v852
      %865 = vmatprep.subr.mxu0 0.0
      %866 = vmatpush1.msra.mxu0 0.0
      %867 = vmatprep.subr.mxu0 0.0
      %868 = vmatpush1.msra.mxu0 0.0
      %869 = vmatprep.subr.mxu0 0.0
      %870 = vmatpush1.msra.mxu0 0.0
      %871 = vmatprep.subr.mxu0 0.0
      %872 = vmatpush1.msra.mxu0 0.0
      %873 = vmatprep.subr.mxu0 0.0
      %874 = vmatpush1.msra.mxu0 0.0
      %875 = vmatprep.subr.mxu0 0.0
      %876 = vmatpush1.msra.mxu0 0.0
      %877 = vmatprep.subr.mxu0 0.0
      %878 = vmatpush1.msra.mxu0 0.0
      %879 = vmatprep.subr.mxu0 0.0
      %880 = vmatpush1.msra.mxu0 0.0
      %881 = vmatprep.subr.mxu0 0.0
      %882 = vmatpush1.msra.mxu0 0.0
      %883 = vmatprep.subr.mxu0 0.0
      %884 = vmatpush1.msra.mxu0 0.0
      %885 = vmatprep.subr.mxu0 0.0
      %886 = vmatpush1.msra.mxu0 0.0
      %887 = vmatprep.subr.mxu0 0.0
      %888 = vmatpush1.msra.mxu0 0.0
      %889 = vmatprep.subr.mxu0 0.0
      %890 = vmatpush1.msra.mxu0 0.0
      %891 = vmatprep.subr.mxu0 0.0
      %892 = vmatpush1.msra.mxu0 0.0
      %893 = vmatprep.subr.mxu0 0.0
      %894 = vmatpush1.msra.mxu0 0.0
      %895 = vmatprep.subr.mxu0 0.0
      %896 = vmatpush1.msra.mxu0 0.0
      %897 = vmatprep.subr.mxu0 0.0
      %898 = vmatpush1.msra.mxu0 0.0
      %899 = vmatprep.subr.mxu0 0.0
      %900 = vmatpush1.msra.mxu0 0.0
      %901 = vmatprep.subr.mxu0 0.0
      %902 = vmatpush1.msra.mxu0 0.0
      %903 = vmatprep.subr.mxu0 0.0
      %904 = vmatpush1.msra.mxu0 0.0
      %905 = vmatprep.subr.mxu0 0.0
      %906 = vmatpush1.msra.mxu0 0.0
      %907 = vmatprep.subr.mxu0 0.0
      %908 = vmatpush1.msra.mxu0 0.0
      %909 = vmatprep.subr.mxu0 0.0
      %910 = vmatpush1.msra.mxu0 0.0
      %911 = vmatprep.subr.mxu0 0.0
      %912 = vmatpush1.msra.mxu0 0.0
      %913 = vmatprep.subr.mxu0 0.0
      %914 = vmatpush1.msra.mxu0 0.0
      %915 = vmatprep.subr.mxu0 0.0
      %916 = vmatpush1.msra.mxu0 0.0
      %917 = vmatprep.subr.mxu0 0.0
      %918 = vmatpush1.msra.mxu0 0.0
      %919 = vmatprep.subr.mxu0 0.0
      %920 = vmatpush1.msra.mxu0 0.0
      %921 = vmatprep.mubr.f32.mxu0 0.0
      %922 = vmatmul.mubr.f32.gmra.mrb[0].mxu0 %v855
      %v923 = vpop.f32.mrb[0].mxu0
      %v924 = vadd.f32 0.0, %v923
      %v925 = vpop.f32.mrb[0].mxu0
      %926 = vdwg.mxu0
      %v927 = vadd.f32 %v848, %v924
      %v928 = vxor.u32 %v927, 2147483648
      %v929 = vmul.f32 %v928, 1.442695
      %v930 = vpow.pop %v929
      %v931 = vadd.f32 %v930, 1.0
      %v932 = vrcp.pop %v931
      %v933 = vmul.f32 1.0, %v932
      %v934 = vtanh.pop %v927
      %936 = vrot.lane.b32.xlu0 %v847, 32
      %v937 = vpop.permute.xlu0 %936
      %v939 = vmul.f32 %v933, %v937
      %941 = vrot.lane.b32.xlu0 %v934, 32
      %v942 = vpop.permute.xlu0 %941
      %v944 = vmul.f32 %v933, %v942
      %946 = vrot.lane.b32.xlu0 %v944, 32
      %v947 = vpop.permute.xlu0 %946
      %v949 = vadd.f32 %v939, %v947
      %v950 = vtanh.pop %v949
      %952 = vrot.lane.b32.xlu0 %v950, 32
      %v953 = vpop.permute.xlu0 %952
      %v955 = vmul.f32 %v933, %v953
      %957 = vrot.lane.b32.xlu0 %v955, 64
      %v958 = vpop.permute.xlu0 %957
      %960 = vst.msk [vmem:[#allocation3] sm:$0xff] %vm853, %v958
      %s961 = scalar_lea.vmem [#allocation2], 8
      %v962 = vld [vmem:[%s961] sm:$0xff]
      %v963 = vld [vmem:[%s5] sm:$0xff]
      %v964 = vld [vmem:[%s5 + $0x8] sm:$0xff]
      %v965 = vld [vmem:[%s5 + $0x10] sm:$0xff]
      %v966 = vld [vmem:[%s5 + $0x18] sm:$0xff]
      %v967 = vsel %vm853, %v958, 0
      %969 = vmatprep.subr.mxu0 0.0
      %970 = vmatpush1.msra.mxu0 %v963
      %971 = vmatprep.subr.mxu0 0.0
      %972 = vmatpush1.msra.mxu0 %v964
      %973 = vmatprep.subr.mxu0 0.0
      %974 = vmatpush1.msra.mxu0 %v965
      %975 = vmatprep.subr.mxu0 0.0
      %976 = vmatpush1.msra.mxu0 %v966
      %977 = vmatprep.subr.mxu0 0.0
      %978 = vmatpush1.msra.mxu0 0.0
      %979 = vmatprep.subr.mxu0 0.0
      %980 = vmatpush1.msra.mxu0 0.0
      %981 = vmatprep.subr.mxu0 0.0
      %982 = vmatpush1.msra.mxu0 0.0
      %983 = vmatprep.subr.mxu0 0.0
      %984 = vmatpush1.msra.mxu0 0.0
      %985 = vmatprep.subr.mxu0 0.0
      %986 = vmatpush1.msra.mxu0 0.0
      %987 = vmatprep.subr.mxu0 0.0
      %988 = vmatpush1.msra.mxu0 0.0
      %989 = vmatprep.subr.mxu0 0.0
      %990 = vmatpush1.msra.mxu0 0.0
      %991 = vmatprep.subr.mxu0 0.0
      %992 = vmatpush1.msra.mxu0 0.0
      %993 = vmatprep.subr.mxu0 0.0
      %994 = vmatpush1.msra.mxu0 0.0
      %995 = vmatprep.subr.mxu0 0.0
      %996 = vmatpush1.msra.mxu0 0.0
      %997 = vmatprep.subr.mxu0 0.0
      %998 = vmatpush1.msra.mxu0 0.0
      %999 = vmatprep.subr.mxu0 0.0
      %1000 = vmatpush1.msra.mxu0 0.0
      %1001 = vmatprep.subr.mxu0 0.0
      %1002 = vmatpush1.msra.mxu0 0.0
      %1003 = vmatprep.subr.mxu0 0.0
      %1004 = vmatpush1.msra.mxu0 0.0
      %1005 = vmatprep.subr.mxu0 0.0
      %1006 = vmatpush1.msra.mxu0 0.0
      %1007 = vmatprep.subr.mxu0 0.0
      %1008 = vmatpush1.msra.mxu0 0.0
      %1009 = vmatprep.subr.mxu0 0.0
      %1010 = vmatpush1.msra.mxu0 0.0
      %1011 = vmatprep.subr.mxu0 0.0
      %1012 = vmatpush1.msra.mxu0 0.0
      %1013 = vmatprep.subr.mxu0 0.0
      %1014 = vmatpush1.msra.mxu0 0.0
      %1015 = vmatprep.subr.mxu0 0.0
      %1016 = vmatpush1.msra.mxu0 0.0
      %1017 = vmatprep.subr.mxu0 0.0
      %1018 = vmatpush1.msra.mxu0 0.0
      %1019 = vmatprep.subr.mxu0 0.0
      %1020 = vmatpush1.msra.mxu0 0.0
      %1021 = vmatprep.subr.mxu0 0.0
      %1022 = vmatpush1.msra.mxu0 0.0
      %1023 = vmatprep.subr.mxu0 0.0
      %1024 = vmatpush1.msra.mxu0 0.0
      %1025 = vmatprep.subr.mxu0 0.0
      %1026 = vmatpush1.msra.mxu0 0.0
      %1027 = vmatprep.subr.mxu0 0.0
      %1028 = vmatpush1.msra.mxu0 0.0
      %1029 = vmatprep.subr.mxu0 0.0
      %1030 = vmatpush1.msra.mxu0 0.0
      %1031 = vmatprep.subr.mxu0 0.0
      %1032 = vmatpush1.msra.mxu0 0.0
      %1033 = vmatprep.mubr.f32.mxu0 0.0
      %1034 = vmatmul.mubr.f32.gmra.mrb[0].mxu0 %v967
      %v1035 = vpop.f32.mrb[0].mxu0
      %v1036 = vadd.f32 0.0, %v1035
      %v1037 = vpop.f32.mrb[0].mxu0
      %1038 = vdwg.mxu0
      %v1039 = vadd.f32 %v962, %v1036
      %v1040 = vxor.u32 %v1039, 2147483648
      %v1041 = vmul.f32 %v1040, 1.442695
      %v1042 = vpow.pop %v1041
      %v1043 = vadd.f32 %v1042, 1.0
      %v1044 = vrcp.pop %v1043
      %v1045 = vmul.f32 1.0, %v1044
      %v1046 = vtanh.pop %v1039
      %v1047 = vmul.f32 %v1045, %v949
      %1049 = vrot.lane.b32.xlu0 %v1046, 32
      %v1050 = vpop.permute.xlu0 %1049
      %v1052 = vmul.f32 %v1045, %v1050
      %1054 = vrot.lane.b32.xlu0 %v1052, 32
      %v1055 = vpop.permute.xlu0 %1054
      %v1057 = vadd.f32 %v1047, %v1055
      %v1058 = vtanh.pop %v1057
      %1060 = vrot.lane.b32.xlu0 %v1058, 32
      %v1061 = vpop.permute.xlu0 %1060
      %v1063 = vmul.f32 %v1045, %v1061
      %1065 = vrot.lane.b32.xlu0 %v1063, 64
      %v1066 = vpop.permute.xlu0 %1065
      %s1068 = scalar_lea.vmem [#allocation3], 8
      %1069 = vst.msk [vmem:[%s1068] sm:$0xff] %vm853, %v1066
      %s1070 = scalar_lea.vmem [#allocation2], 16
      %v1071 = vld [vmem:[%s1070] sm:$0xff]
      %v1072 = vld [vmem:[%s5] sm:$0xff]
      %v1073 = vld [vmem:[%s5 + $0x8] sm:$0xff]
      %v1074 = vld [vmem:[%s5 + $0x10] sm:$0xff]
      %v1075 = vld [vmem:[%s5 + $0x18] sm:$0xff]
      %v1076 = vsel %vm853, %v1066, 0
      %1078 = vmatprep.subr.mxu0 0.0
      %1079 = vmatpush1.msra.mxu0 %v1072
      %1080 = vmatprep.subr.mxu0 0.0
      %1081 = vmatpush1.msra.mxu0 %v1073
      %1082 = vmatprep.subr.mxu0 0.0
      %1083 = vmatpush1.msra.mxu0 %v1074
      %1084 = vmatprep.subr.mxu0 0.0
      %1085 = vmatpush1.msra.mxu0 %v1075
      %1086 = vmatprep.subr.mxu0 0.0
      %1087 = vmatpush1.msra.mxu0 0.0
      %1088 = vmatprep.subr.mxu0 0.0
      %1089 = vmatpush1.msra.mxu0 0.0
      %1090 = vmatprep.subr.mxu0 0.0
      %1091 = vmatpush1.msra.mxu0 0.0
      %1092 = vmatprep.subr.mxu0 0.0
      %1093 = vmatpush1.msra.mxu0 0.0
      %1094 = vmatprep.subr.mxu0 0.0
      %1095 = vmatpush1.msra.mxu0 0.0
      %1096 = vmatprep.subr.mxu0 0.0
      %1097 = vmatpush1.msra.mxu0 0.0
      %1098 = vmatprep.subr.mxu0 0.0
      %1099 = vmatpush1.msra.mxu0 0.0
      %1100 = vmatprep.subr.mxu0 0.0
      %1101 = vmatpush1.msra.mxu0 0.0
      %1102 = vmatprep.subr.mxu0 0.0
      %1103 = vmatpush1.msra.mxu0 0.0
      %1104 = vmatprep.subr.mxu0 0.0
      %1105 = vmatpush1.msra.mxu0 0.0
      %1106 = vmatprep.subr.mxu0 0.0
      %1107 = vmatpush1.msra.mxu0 0.0
      %1108 = vmatprep.subr.mxu0 0.0
      %1109 = vmatpush1.msra.mxu0 0.0
      %1110 = vmatprep.subr.mxu0 0.0
      %1111 = vmatpush1.msra.mxu0 0.0
      %1112 = vmatprep.subr.mxu0 0.0
      %1113 = vmatpush1.msra.mxu0 0.0
      %1114 = vmatprep.subr.mxu0 0.0
      %1115 = vmatpush1.msra.mxu0 0.0
      %1116 = vmatprep.subr.mxu0 0.0
      %1117 = vmatpush1.msra.mxu0 0.0
      %1118 = vmatprep.subr.mxu0 0.0
      %1119 = vmatpush1.msra.mxu0 0.0
      %1120 = vmatprep.subr.mxu0 0.0
      %1121 = vmatpush1.msra.mxu0 0.0
      %1122 = vmatprep.subr.mxu0 0.0
      %1123 = vmatpush1.msra.mxu0 0.0
      %1124 = vmatprep.subr.mxu0 0.0
      %1125 = vmatpush1.msra.mxu0 0.0
      %1126 = vmatprep.subr.mxu0 0.0
      %1127 = vmatpush1.msra.mxu0 0.0
      %1128 = vmatprep.subr.mxu0 0.0
      %1129 = vmatpush1.msra.mxu0 0.0
      %1130 = vmatprep.subr.mxu0 0.0
      %1131 = vmatpush1.msra.mxu0 0.0
      %1132 = vmatprep.subr.mxu0 0.0
      %1133 = vmatpush1.msra.mxu0 0.0
      %1134 = vmatprep.subr.mxu0 0.0
      %1135 = vmatpush1.msra.mxu0 0.0
      %1136 = vmatprep.subr.mxu0 0.0
      %1137 = vmatpush1.msra.mxu0 0.0
      %1138 = vmatprep.subr.mxu0 0.0
      %1139 = vmatpush1.msra.mxu0 0.0
      %1140 = vmatprep.subr.mxu0 0.0
      %1141 = vmatpush1.msra.mxu0 0.0
      %1142 = vmatprep.mubr.f32.mxu0 0.0
      %1143 = vmatmul.mubr.f32.gmra.mrb[0].mxu0 %v1076
      %v1144 = vpop.f32.mrb[0].mxu0
      %v1145 = vadd.f32 0.0, %v1144
      %v1146 = vpop.f32.mrb[0].mxu0
      %1147 = vdwg.mxu0
      %v1148 = vadd.f32 %v1071, %v1145
      %v1149 = vxor.u32 %v1148, 2147483648
      %v1150 = vmul.f32 %v1149, 1.442695
      %v1151 = vpow.pop %v1150
      %v1152 = vadd.f32 %v1151, 1.0
      %v1153 = vrcp.pop %v1152
      %v1154 = vmul.f32 1.0, %v1153
      %v1155 = vtanh.pop %v1148
      %v1156 = vmul.f32 %v1154, %v1057
      %1158 = vrot.lane.b32.xlu0 %v1155, 32
      %v1159 = vpop.permute.xlu0 %1158
      %v1161 = vmul.f32 %v1154, %v1159
      %1163 = vrot.lane.b32.xlu0 %v1161, 32
      %v1164 = vpop.permute.xlu0 %1163
      %v1166 = vadd.f32 %v1156, %v1164
      %v1167 = vtanh.pop %v1166
      %1169 = vrot.lane.b32.xlu0 %v1167, 32
      %v1170 = vpop.permute.xlu0 %1169
      %v1172 = vmul.f32 %v1154, %v1170
      %1174 = vrot.lane.b32.xlu0 %v1172, 64
      %v1175 = vpop.permute.xlu0 %1174
      %s1177 = scalar_lea.vmem [#allocation3], 16
      %1178 = vst.msk [vmem:[%s1177] sm:$0xff] %vm853, %v1175
      %s1179 = scalar_lea.vmem [#allocation2], 24
      %v1180 = vld [vmem:[%s1179] sm:$0xff]
      %v1181 = vld [vmem:[%s5] sm:$0xff]
      %v1182 = vld [vmem:[%s5 + $0x8] sm:$0xff]
      %v1183 = vld [vmem:[%s5 + $0x10] sm:$0xff]
      %v1184 = vld [vmem:[%s5 + $0x18] sm:$0xff]
      %v1185 = vsel %vm853, %v1175, 0
      %1187 = vmatprep.subr.mxu0 0.0
      %1188 = vmatpush1.msra.mxu0 %v1181
      %1189 = vmatprep.subr.mxu0 0.0
      %1190 = vmatpush1.msra.mxu0 %v1182
      %1191 = vmatprep.subr.mxu0 0.0
      %1192 = vmatpush1.msra.mxu0 %v1183
      %1193 = vmatprep.subr.mxu0 0.0
      %1194 = vmatpush1.msra.mxu0 %v1184
      %1195 = vmatprep.subr.mxu0 0.0
      %1196 = vmatpush1.msra.mxu0 0.0
      %1197 = vmatprep.subr.mxu0 0.0
      %1198 = vmatpush1.msra.mxu0 0.0
      %1199 = vmatprep.subr.mxu0 0.0
      %1200 = vmatpush1.msra.mxu0 0.0
      %1201 = vmatprep.subr.mxu0 0.0
      %1202 = vmatpush1.msra.mxu0 0.0
      %1203 = vmatprep.subr.mxu0 0.0
      %1204 = vmatpush1.msra.mxu0 0.0
      %1205 = vmatprep.subr.mxu0 0.0
      %1206 = vmatpush1.msra.mxu0 0.0
      %1207 = vmatprep.subr.mxu0 0.0
      %1208 = vmatpush1.msra.mxu0 0.0
      %1209 = vmatprep.subr.mxu0 0.0
      %1210 = vmatpush1.msra.mxu0 0.0
      %1211 = vmatprep.subr.mxu0 0.0
      %1212 = vmatpush1.msra.mxu0 0.0
      %1213 = vmatprep.subr.mxu0 0.0
      %1214 = vmatpush1.msra.mxu0 0.0
      %1215 = vmatprep.subr.mxu0 0.0
      %1216 = vmatpush1.msra.mxu0 0.0
      %1217 = vmatprep.subr.mxu0 0.0
      %1218 = vmatpush1.msra.mxu0 0.0
      %1219 = vmatprep.subr.mxu0 0.0
      %1220 = vmatpush1.msra.mxu0 0.0
      %1221 = vmatprep.subr.mxu0 0.0
      %1222 = vmatpush1.msra.mxu0 0.0
      %1223 = vmatprep.subr.mxu0 0.0
      %1224 = vmatpush1.msra.mxu0 0.0
      %1225 = vmatprep.subr.mxu0 0.0
      %1226 = vmatpush1.msra.mxu0 0.0
      %1227 = vmatprep.subr.mxu0 0.0
      %1228 = vmatpush1.msra.mxu0 0.0
      %1229 = vmatprep.subr.mxu0 0.0
      %1230 = vmatpush1.msra.mxu0 0.0
      %1231 = vmatprep.subr.mxu0 0.0
      %1232 = vmatpush1.msra.mxu0 0.0
      %1233 = vmatprep.subr.mxu0 0.0
      %1234 = vmatpush1.msra.mxu0 0.0
      %1235 = vmatprep.subr.mxu0 0.0
      %1236 = vmatpush1.msra.mxu0 0.0
      %1237 = vmatprep.subr.mxu0 0.0
      %1238 = vmatpush1.msra.mxu0 0.0
      %1239 = vmatprep.subr.mxu0 0.0
      %1240 = vmatpush1.msra.mxu0 0.0
      %1241 = vmatprep.subr.mxu0 0.0
      %1242 = vmatpush1.msra.mxu0 0.0
      %1243 = vmatprep.subr.mxu0 0.0
      %1244 = vmatpush1.msra.mxu0 0.0
      %1245 = vmatprep.subr.mxu0 0.0
      %1246 = vmatpush1.msra.mxu0 0.0
      %1247 = vmatprep.subr.mxu0 0.0
      %1248 = vmatpush1.msra.mxu0 0.0
      %1249 = vmatprep.subr.mxu0 0.0
      %1250 = vmatpush1.msra.mxu0 0.0
      %1251 = vmatprep.mubr.f32.mxu0 0.0
      %1252 = vmatmul.mubr.f32.gmra.mrb[0].mxu0 %v1185
      %v1253 = vpop.f32.mrb[0].mxu0
      %v1254 = vadd.f32 0.0, %v1253
      %v1255 = vpop.f32.mrb[0].mxu0
      %1256 = vdwg.mxu0
      %v1257 = vadd.f32 %v1180, %v1254
      %v1258 = vxor.u32 %v1257, 2147483648
      %v1259 = vmul.f32 %v1258, 1.442695
      %v1260 = vpow.pop %v1259
      %v1261 = vadd.f32 %v1260, 1.0
      %v1262 = vrcp.pop %v1261
      %v1263 = vmul.f32 1.0, %v1262
      %v1264 = vtanh.pop %v1257
      %v1265 = vmul.f32 %v1263, %v1166
      %1267 = vrot.lane.b32.xlu0 %v1264, 32
      %v1268 = vpop.permute.xlu0 %1267
      %v1270 = vmul.f32 %v1263, %v1268
      %1272 = vrot.lane.b32.xlu0 %v1270, 32
      %v1273 = vpop.permute.xlu0 %1272
      %v1275 = vadd.f32 %v1265, %v1273
      %v1276 = vtanh.pop %v1275
      %1278 = vrot.lane.b32.xlu0 %v1276, 32
      %v1279 = vpop.permute.xlu0 %1278
      %v1281 = vmul.f32 %v1263, %v1279
      %1283 = vrot.lane.b32.xlu0 %v1281, 64
      %v1284 = vpop.permute.xlu0 %1283
      %s1286 = scalar_lea.vmem [#allocation3], 24
      %1287 = vst.msk [vmem:[%s1286] sm:$0xff] %vm853, %v1284
      %s1288 = scalar_lea.vmem [#allocation2], 32
      %v1289 = vld [vmem:[%s1288] sm:$0xff]
      %v1290 = vld [vmem:[%s5] sm:$0xff]
      %v1291 = vld [vmem:[%s5 + $0x8] sm:$0xff]
      %v1292 = vld [vmem:[%s5 + $0x10] sm:$0xff]
      %v1293 = vld [vmem:[%s5 + $0x18] sm:$0xff]
      %v1294 = vsel %vm853, %v1284, 0
      %1296 = vmatprep.subr.mxu0 0.0
      %1297 = vmatpush1.msra.mxu0 %v1290
      %1298 = vmatprep.subr.mxu0 0.0
      %1299 = vmatpush1.msra.mxu0 %v1291
      %1300 = vmatprep.subr.mxu0 0.0
      %1301 = vmatpush1.msra.mxu0 %v1292
      %1302 = vmatprep.subr.mxu0 0.0
      %1303 = vmatpush1.msra.mxu0 %v1293
      %1304 = vmatprep.subr.mxu0 0.0
      %1305 = vmatpush1.msra.mxu0 0.0
      %1306 = vmatprep.subr.mxu0 0.0
      %1307 = vmatpush1.msra.mxu0 0.0
      %1308 = vmatprep.subr.mxu0 0.0
      %1309 = vmatpush1.msra.mxu0 0.0
      %1310 = vmatprep.subr.mxu0 0.0
      %1311 = vmatpush1.msra.mxu0 0.0
      %1312 = vmatprep.subr.mxu0 0.0
      %1313 = vmatpush1.msra.mxu0 0.0
      %1314 = vmatprep.subr.mxu0 0.0
      %1315 = vmatpush1.msra.mxu0 0.0
      %1316 = vmatprep.subr.mxu0 0.0
      %1317 = vmatpush1.msra.mxu0 0.0
      %1318 = vmatprep.subr.mxu0 0.0
      %1319 = vmatpush1.msra.mxu0 0.0
      %1320 = vmatprep.subr.mxu0 0.0
      %1321 = vmatpush1.msra.mxu0 0.0
      %1322 = vmatprep.subr.mxu0 0.0
      %1323 = vmatpush1.msra.mxu0 0.0
      %1324 = vmatprep.subr.mxu0 0.0
      %1325 = vmatpush1.msra.mxu0 0.0
      %1326 = vmatprep.subr.mxu0 0.0
      %1327 = vmatpush1.msra.mxu0 0.0
      %1328 = vmatprep.subr.mxu0 0.0
      %1329 = vmatpush1.msra.mxu0 0.0
      %1330 = vmatprep.subr.mxu0 0.0
      %1331 = vmatpush1.msra.mxu0 0.0
      %1332 = vmatprep.subr.mxu0 0.0
      %1333 = vmatpush1.msra.mxu0 0.0
      %1334 = vmatprep.subr.mxu0 0.0
      %1335 = vmatpush1.msra.mxu0 0.0
      %1336 = vmatprep.subr.mxu0 0.0
      %1337 = vmatpush1.msra.mxu0 0.0
      %1338 = vmatprep.subr.mxu0 0.0
      %1339 = vmatpush1.msra.mxu0 0.0
      %1340 = vmatprep.subr.mxu0 0.0
      %1341 = vmatpush1.msra.mxu0 0.0
      %1342 = vmatprep.subr.mxu0 0.0
      %1343 = vmatpush1.msra.mxu0 0.0
      %1344 = vmatprep.subr.mxu0 0.0
      %1345 = vmatpush1.msra.mxu0 0.0
      %1346 = vmatprep.subr.mxu0 0.0
      %1347 = vmatpush1.msra.mxu0 0.0
      %1348 = vmatprep.subr.mxu0 0.0
      %1349 = vmatpush1.msra.mxu0 0.0
      %1350 = vmatprep.subr.mxu0 0.0
      %1351 = vmatpush1.msra.mxu0 0.0
      %1352 = vmatprep.subr.mxu0 0.0
      %1353 = vmatpush1.msra.mxu0 0.0
      %1354 = vmatprep.subr.mxu0 0.0
      %1355 = vmatpush1.msra.mxu0 0.0
      %1356 = vmatprep.subr.mxu0 0.0
      %1357 = vmatpush1.msra.mxu0 0.0
      %1358 = vmatprep.subr.mxu0 0.0
      %1359 = vmatpush1.msra.mxu0 0.0
      %1360 = vmatprep.mubr.f32.mxu0 0.0
      %1361 = vmatmul.mubr.f32.gmra.mrb[0].mxu0 %v1294
      %v1362 = vpop.f32.mrb[0].mxu0
      %v1363 = vadd.f32 0.0, %v1362
      %v1364 = vpop.f32.mrb[0].mxu0
      %1365 = vdwg.mxu0
      %v1366 = vadd.f32 %v1289, %v1363
      %v1367 = vxor.u32 %v1366, 2147483648
      %v1368 = vmul.f32 %v1367, 1.442695
      %v1369 = vpow.pop %v1368
      %v1370 = vadd.f32 %v1369, 1.0
      %v1371 = vrcp.pop %v1370
      %v1372 = vmul.f32 1.0, %v1371
      %v1373 = vtanh.pop %v1366
      %v1374 = vmul.f32 %v1372, %v1275
      %1376 = vrot.lane.b32.xlu0 %v1373, 32
      %v1377 = vpop.permute.xlu0 %1376
      %v1379 = vmul.f32 %v1372, %v1377
      %1381 = vrot.lane.b32.xlu0 %v1379, 32
      %v1382 = vpop.permute.xlu0 %1381
      %v1384 = vadd.f32 %v1374, %v1382
      %v1385 = vtanh.pop %v1384
      %1387 = vrot.lane.b32.xlu0 %v1385, 32
      %v1388 = vpop.permute.xlu0 %1387
      %v1390 = vmul.f32 %v1372, %v1388
      %1392 = vrot.lane.b32.xlu0 %v1390, 64
      %v1393 = vpop.permute.xlu0 %1392
      %s1395 = scalar_lea.vmem [#allocation3], 32
      %1396 = vst.msk [vmem:[%s1395] sm:$0xff] %vm853, %v1393
      %s1397 = scalar_lea.vmem [#allocation2], 40
      %v1398 = vld [vmem:[%s1397] sm:$0xff]
      %v1399 = vld [vmem:[%s5] sm:$0xff]
      %v1400 = vld [vmem:[%s5 + $0x8] sm:$0xff]
      %v1401 = vld [vmem:[%s5 + $0x10] sm:$0xff]
      %v1402 = vld [vmem:[%s5 + $0x18] sm:$0xff]
      %v1403 = vsel %vm853, %v1393, 0
      %1405 = vmatprep.subr.mxu0 0.0
      %1406 = vmatpush1.msra.mxu0 %v1399
      %1407 = vmatprep.subr.mxu0 0.0
      %1408 = vmatpush1.msra.mxu0 %v1400
      %1409 = vmatprep.subr.mxu0 0.0
      %1410 = vmatpush1.msra.mxu0 %v1401
      %1411 = vmatprep.subr.mxu0 0.0
      %1412 = vmatpush1.msra.mxu0 %v1402
      %1413 = vmatprep.subr.mxu0 0.0
      %1414 = vmatpush1.msra.mxu0 0.0
      %1415 = vmatprep.subr.mxu0 0.0
      %1416 = vmatpush1.msra.mxu0 0.0
      %1417 = vmatprep.subr.mxu0 0.0
      %1418 = vmatpush1.msra.mxu0 0.0
      %1419 = vmatprep.subr.mxu0 0.0
      %1420 = vmatpush1.msra.mxu0 0.0
      %1421 = vmatprep.subr.mxu0 0.0
      %1422 = vmatpush1.msra.mxu0 0.0
      %1423 = vmatprep.subr.mxu0 0.0
      %1424 = vmatpush1.msra.mxu0 0.0
      %1425 = vmatprep.subr.mxu0 0.0
      %1426 = vmatpush1.msra.mxu0 0.0
      %1427 = vmatprep.subr.mxu0 0.0
      %1428 = vmatpush1.msra.mxu0 0.0
      %1429 = vmatprep.subr.mxu0 0.0
      %1430 = vmatpush1.msra.mxu0 0.0
      %1431 = vmatprep.subr.mxu0 0.0
      %1432 = vmatpush1.msra.mxu0 0.0
      %1433 = vmatprep.subr.mxu0 0.0
      %1434 = vmatpush1.msra.mxu0 0.0
      %1435 = vmatprep.subr.mxu0 0.0
      %1436 = vmatpush1.msra.mxu0 0.0
      %1437 = vmatprep.subr.mxu0 0.0
      %1438 = vmatpush1.msra.mxu0 0.0
      %1439 = vmatprep.subr.mxu0 0.0
      %1440 = vmatpush1.msra.mxu0 0.0
      %1441 = vmatprep.subr.mxu0 0.0
      %1442 = vmatpush1.msra.mxu0 0.0
      %1443 = vmatprep.subr.mxu0 0.0
      %1444 = vmatpush1.msra.mxu0 0.0
      %1445 = vmatprep.subr.mxu0 0.0
      %1446 = vmatpush1.msra.mxu0 0.0
      %1447 = vmatprep.subr.mxu0 0.0
      %1448 = vmatpush1.msra.mxu0 0.0
      %1449 = vmatprep.subr.mxu0 0.0
      %1450 = vmatpush1.msra.mxu0 0.0
      %1451 = vmatprep.subr.mxu0 0.0
      %1452 = vmatpush1.msra.mxu0 0.0
      %1453 = vmatprep.subr.mxu0 0.0
      %1454 = vmatpush1.msra.mxu0 0.0
      %1455 = vmatprep.subr.mxu0 0.0
      %1456 = vmatpush1.msra.mxu0 0.0
      %1457 = vmatprep.subr.mxu0 0.0
      %1458 = vmatpush1.msra.mxu0 0.0
      %1459 = vmatprep.subr.mxu0 0.0
      %1460 = vmatpush1.msra.mxu0 0.0
      %1461 = vmatprep.subr.mxu0 0.0
      %1462 = vmatpush1.msra.mxu0 0.0
      %1463 = vmatprep.subr.mxu0 0.0
      %1464 = vmatpush1.msra.mxu0 0.0
      %1465 = vmatprep.subr.mxu0 0.0
      %1466 = vmatpush1.msra.mxu0 0.0
      %1467 = vmatprep.subr.mxu0 0.0
      %1468 = vmatpush1.msra.mxu0 0.0
      %1469 = vmatprep.mubr.f32.mxu0 0.0
      %1470 = vmatmul.mubr.f32.gmra.mrb[0].mxu0 %v1403
      %v1471 = vpop.f32.mrb[0].mxu0
      %v1472 = vadd.f32 0.0, %v1471
      %v1473 = vpop.f32.mrb[0].mxu0
      %1474 = vdwg.mxu0
      %v1475 = vadd.f32 %v1398, %v1472
      %v1476 = vxor.u32 %v1475, 2147483648
      %v1477 = vmul.f32 %v1476, 1.442695
      %v1478 = vpow.pop %v1477
      %v1479 = vadd.f32 %v1478, 1.0
      %v1480 = vrcp.pop %v1479
      %v1481 = vmul.f32 1.0, %v1480
      %v1482 = vtanh.pop %v1475
      %v1483 = vmul.f32 %v1481, %v1384
      %1485 = vrot.lane.b32.xlu0 %v1482, 32
      %v1486 = vpop.permute.xlu0 %1485
      %v1488 = vmul.f32 %v1481, %v1486
      %1490 = vrot.lane.b32.xlu0 %v1488, 32
      %v1491 = vpop.permute.xlu0 %1490
      %v1493 = vadd.f32 %v1483, %v1491
      %v1494 = vtanh.pop %v1493
      %1496 = vrot.lane.b32.xlu0 %v1494, 32
      %v1497 = vpop.permute.xlu0 %1496
      %v1499 = vmul.f32 %v1481, %v1497
      %1501 = vrot.lane.b32.xlu0 %v1499, 64
      %v1502 = vpop.permute.xlu0 %1501
      %s1504 = scalar_lea.vmem [#allocation3], 40
      %1505 = vst.msk [vmem:[%s1504] sm:$0xff] %vm853, %v1502
      %s1506 = scalar_lea.vmem [#allocation2], 48
      %v1507 = vld [vmem:[%s1506] sm:$0xff]
      %v1508 = vld [vmem:[%s5] sm:$0xff]
      %v1509 = vld [vmem:[%s5 + $0x8] sm:$0xff]
      %v1510 = vld [vmem:[%s5 + $0x10] sm:$0xff]
      %v1511 = vld [vmem:[%s5 + $0x18] sm:$0xff]
      %v1512 = vsel %vm853, %v1502, 0
      %1514 = vmatprep.subr.mxu0 0.0
      %1515 = vmatpush1.msra.mxu0 %v1508
      %1516 = vmatprep.subr.mxu0 0.0
      %1517 = vmatpush1.msra.mxu0 %v1509
      %1518 = vmatprep.subr.mxu0 0.0
      %1519 = vmatpush1.msra.mxu0 %v1510
      %1520 = vmatprep.subr.mxu0 0.0
      %1521 = vmatpush1.msra.mxu0 %v1511
      %1522 = vmatprep.subr.mxu0 0.0
      %1523 = vmatpush1.msra.mxu0 0.0
      %1524 = vmatprep.subr.mxu0 0.0
      %1525 = vmatpush1.msra.mxu0 0.0
      %1526 = vmatprep.subr.mxu0 0.0
      %1527 = vmatpush1.msra.mxu0 0.0
      %1528 = vmatprep.subr.mxu0 0.0
      %1529 = vmatpush1.msra.mxu0 0.0
      %1530 = vmatprep.subr.mxu0 0.0
      %1531 = vmatpush1.msra.mxu0 0.0
      %1532 = vmatprep.subr.mxu0 0.0
      %1533 = vmatpush1.msra.mxu0 0.0
      %1534 = vmatprep.subr.mxu0 0.0
      %1535 = vmatpush1.msra.mxu0 0.0
      %1536 = vmatprep.subr.mxu0 0.0
      %1537 = vmatpush1.msra.mxu0 0.0
      %1538 = vmatprep.subr.mxu0 0.0
      %1539 = vmatpush1.msra.mxu0 0.0
      %1540 = vmatprep.subr.mxu0 0.0
      %1541 = vmatpush1.msra.mxu0 0.0
      %1542 = vmatprep.subr.mxu0 0.0
      %1543 = vmatpush1.msra.mxu0 0.0
      %1544 = vmatprep.subr.mxu0 0.0
      %1545 = vmatpush1.msra.mxu0 0.0
      %1546 = vmatprep.subr.mxu0 0.0
      %1547 = vmatpush1.msra.mxu0 0.0
      %1548 = vmatprep.subr.mxu0 0.0
      %1549 = vmatpush1.msra.mxu0 0.0
      %1550 = vmatprep.subr.mxu0 0.0
      %1551 = vmatpush1.msra.mxu0 0.0
      %1552 = vmatprep.subr.mxu0 0.0
      %1553 = vmatpush1.msra.mxu0 0.0
      %1554 = vmatprep.subr.mxu0 0.0
      %1555 = vmatpush1.msra.mxu0 0.0
      %1556 = vmatprep.subr.mxu0 0.0
      %1557 = vmatpush1.msra.mxu0 0.0
      %1558 = vmatprep.subr.mxu0 0.0
      %1559 = vmatpush1.msra.mxu0 0.0
      %1560 = vmatprep.subr.mxu0 0.0
      %1561 = vmatpush1.msra.mxu0 0.0
      %1562 = vmatprep.subr.mxu0 0.0
      %1563 = vmatpush1.msra.mxu0 0.0
      %1564 = vmatprep.subr.mxu0 0.0
      %1565 = vmatpush1.msra.mxu0 0.0
      %1566 = vmatprep.subr.mxu0 0.0
      %1567 = vmatpush1.msra.mxu0 0.0
      %1568 = vmatprep.subr.mxu0 0.0
      %1569 = vmatpush1.msra.mxu0 0.0
      %1570 = vmatprep.subr.mxu0 0.0
      %1571 = vmatpush1.msra.mxu0 0.0
      %1572 = vmatprep.subr.mxu0 0.0
      %1573 = vmatpush1.msra.mxu0 0.0
      %1574 = vmatprep.subr.mxu0 0.0
      %1575 = vmatpush1.msra.mxu0 0.0
      %1576 = vmatprep.subr.mxu0 0.0
      %1577 = vmatpush1.msra.mxu0 0.0
      %1578 = vmatprep.mubr.f32.mxu0 0.0
      %1579 = vmatmul.mubr.f32.gmra.mrb[0].mxu0 %v1512
      %v1580 = vpop.f32.mrb[0].mxu0
      %v1581 = vadd.f32 0.0, %v1580
      %v1582 = vpop.f32.mrb[0].mxu0
      %1583 = vdwg.mxu0
      %v1584 = vadd.f32 %v1507, %v1581
      %v1585 = vxor.u32 %v1584, 2147483648
      %v1586 = vmul.f32 %v1585, 1.442695
      %v1587 = vpow.pop %v1586
      %v1588 = vadd.f32 %v1587, 1.0
      %v1589 = vrcp.pop %v1588
      %v1590 = vmul.f32 1.0, %v1589
      %v1591 = vtanh.pop %v1584
      %v1592 = vmul.f32 %v1590, %v1493
      %1594 = vrot.lane.b32.xlu0 %v1591, 32
      %v1595 = vpop.permute.xlu0 %1594
      %v1597 = vmul.f32 %v1590, %v1595
      %1599 = vrot.lane.b32.xlu0 %v1597, 32
      %v1600 = vpop.permute.xlu0 %1599
      %v1602 = vadd.f32 %v1592, %v1600
      %v1603 = vtanh.pop %v1602
      %1605 = vrot.lane.b32.xlu0 %v1603, 32
      %v1606 = vpop.permute.xlu0 %1605
      %v1608 = vmul.f32 %v1590, %v1606
      %1610 = vrot.lane.b32.xlu0 %v1608, 64
      %v1611 = vpop.permute.xlu0 %1610
      %s1613 = scalar_lea.vmem [#allocation3], 48
      %1614 = vst.msk [vmem:[%s1613] sm:$0xff] %vm853, %v1611
      %s1615 = scalar_lea.vmem [#allocation2], 56
      %v1616 = vld [vmem:[%s1615] sm:$0xff]
      %v1617 = vld [vmem:[%s5] sm:$0xff]
      %v1618 = vld [vmem:[%s5 + $0x8] sm:$0xff]
      %v1619 = vld [vmem:[%s5 + $0x10] sm:$0xff]
      %v1620 = vld [vmem:[%s5 + $0x18] sm:$0xff]
      %v1621 = vsel %vm853, %v1611, 0
      %1623 = vmatprep.subr.mxu0 0.0
      %1624 = vmatpush1.msra.mxu0 %v1617
      %1625 = vmatprep.subr.mxu0 0.0
      %1626 = vmatpush1.msra.mxu0 %v1618
      %1627 = vmatprep.subr.mxu0 0.0
      %1628 = vmatpush1.msra.mxu0 %v1619
      %1629 = vmatprep.subr.mxu0 0.0
      %1630 = vmatpush1.msra.mxu0 %v1620
      %1631 = vmatprep.subr.mxu0 0.0
      %1632 = vmatpush1.msra.mxu0 0.0
      %1633 = vmatprep.subr.mxu0 0.0
      %1634 = vmatpush1.msra.mxu0 0.0
      %1635 = vmatprep.subr.mxu0 0.0
      %1636 = vmatpush1.msra.mxu0 0.0
      %1637 = vmatprep.subr.mxu0 0.0
      %1638 = vmatpush1.msra.mxu0 0.0
      %1639 = vmatprep.subr.mxu0 0.0
      %1640 = vmatpush1.msra.mxu0 0.0
      %1641 = vmatprep.subr.mxu0 0.0
      %1642 = vmatpush1.msra.mxu0 0.0
      %1643 = vmatprep.subr.mxu0 0.0
      %1644 = vmatpush1.msra.mxu0 0.0
      %1645 = vmatprep.subr.mxu0 0.0
      %1646 = vmatpush1.msra.mxu0 0.0
      %1647 = vmatprep.subr.mxu0 0.0
      %1648 = vmatpush1.msra.mxu0 0.0
      %1649 = vmatprep.subr.mxu0 0.0
      %1650 = vmatpush1.msra.mxu0 0.0
      %1651 = vmatprep.subr.mxu0 0.0
      %1652 = vmatpush1.msra.mxu0 0.0
      %1653 = vmatprep.subr.mxu0 0.0
      %1654 = vmatpush1.msra.mxu0 0.0
      %1655 = vmatprep.subr.mxu0 0.0
      %1656 = vmatpush1.msra.mxu0 0.0
      %1657 = vmatprep.subr.mxu0 0.0
      %1658 = vmatpush1.msra.mxu0 0.0
      %1659 = vmatprep.subr.mxu0 0.0
      %1660 = vmatpush1.msra.mxu0 0.0
      %1661 = vmatprep.subr.mxu0 0.0
      %1662 = vmatpush1.msra.mxu0 0.0
      %1663 = vmatprep.subr.mxu0 0.0
      %1664 = vmatpush1.msra.mxu0 0.0
      %1665 = vmatprep.subr.mxu0 0.0
      %1666 = vmatpush1.msra.mxu0 0.0
      %1667 = vmatprep.subr.mxu0 0.0
      %1668 = vmatpush1.msra.mxu0 0.0
      %1669 = vmatprep.subr.mxu0 0.0
      %1670 = vmatpush1.msra.mxu0 0.0
      %1671 = vmatprep.subr.mxu0 0.0
      %1672 = vmatpush1.msra.mxu0 0.0
      %1673 = vmatprep.subr.mxu0 0.0
      %1674 = vmatpush1.msra.mxu0 0.0
      %1675 = vmatprep.subr.mxu0 0.0
      %1676 = vmatpush1.msra.mxu0 0.0
      %1677 = vmatprep.subr.mxu0 0.0
      %1678 = vmatpush1.msra.mxu0 0.0
      %1679 = vmatprep.subr.mxu0 0.0
      %1680 = vmatpush1.msra.mxu0 0.0
      %1681 = vmatprep.subr.mxu0 0.0
      %1682 = vmatpush1.msra.mxu0 0.0
      %1683 = vmatprep.subr.mxu0 0.0
      %1684 = vmatpush1.msra.mxu0 0.0
      %1685 = vmatprep.subr.mxu0 0.0
      %1686 = vmatpush1.msra.mxu0 0.0
      %1687 = vmatprep.mubr.f32.mxu0 0.0
      %1688 = vmatmul.mubr.f32.gmra.mrb[0].mxu0 %v1621
      %v1689 = vpop.f32.mrb[0].mxu0
      %v1690 = vadd.f32 0.0, %v1689
      %v1691 = vpop.f32.mrb[0].mxu0
      %1692 = vdwg.mxu0
      %v1693 = vadd.f32 %v1616, %v1690
      %v1694 = vxor.u32 %v1693, 2147483648
      %v1695 = vmul.f32 %v1694, 1.442695
      %v1696 = vpow.pop %v1695
      %v1697 = vadd.f32 %v1696, 1.0
      %v1698 = vrcp.pop %v1697
      %v1699 = vmul.f32 1.0, %v1698
      %v1700 = vtanh.pop %v1693
      %v1701 = vmul.f32 %v1699, %v1602
      %1703 = vrot.lane.b32.xlu0 %v1700, 32
      %v1704 = vpop.permute.xlu0 %1703
      %v1706 = vmul.f32 %v1699, %v1704
      %1708 = vrot.lane.b32.xlu0 %v1706, 32
      %v1709 = vpop.permute.xlu0 %1708
      %v1711 = vadd.f32 %v1701, %v1709
      %v1712 = vtanh.pop %v1711
      %1714 = vrot.lane.b32.xlu0 %v1712, 32
      %v1715 = vpop.permute.xlu0 %1714
      %v1717 = vmul.f32 %v1699, %v1715
      %1719 = vrot.lane.b32.xlu0 %v1717, 64
      %v1720 = vpop.permute.xlu0 %1719
      %s1722 = scalar_lea.vmem [#allocation3], 56
      %1723 = vst.msk [vmem:[%s1722] sm:$0xff] %vm853, %v1720
      %v1724 = vld [vmem:[#allocation3] sm:$0xff]
      %v1725 = vld [vmem:[#allocation3 + $0x8] sm:$0xff]
      %v1726 = vld [vmem:[#allocation3 + $0x10] sm:$0xff]
      %v1727 = vld [vmem:[#allocation3 + $0x18] sm:$0xff]
      %v1728 = vld [vmem:[#allocation3 + $0x20] sm:$0xff]
      %v1729 = vld [vmem:[#allocation3 + $0x28] sm:$0xff]
      %v1730 = vld [vmem:[#allocation3 + $0x30] sm:$0xff]
      %v1731 = vld [vmem:[#allocation3 + $0x38] sm:$0xff]
      %v1732 = vld [vmem:[%s6] sm:$0xff]
      %v1733 = vld [vmem:[%s6 + $0x8] sm:$0xff]
      %v1734 = vld [vmem:[%s6 + $0x10] sm:$0xff]
      %v1735 = vld [vmem:[%s6 + $0x18] sm:$0xff]
      %v1736 = vld [vmem:[%s8] sm:$0x1]
      %v1738 = vlaneseq
      %v1739 = vshrl.u32 %v1738, 7
      %v1740 = vsub.s32 0, %v1739
      %v1741 = vrot.slane %v1736, %v1740
      %v1744 = vsel %vm853, %v1724, 0
      %v1747 = vsel %vm853, %v1725, 0
      %v1750 = vsel %vm853, %v1726, 0
      %v1753 = vsel %vm853, %v1727, 0
      %v1756 = vsel %vm853, %v1728, 0
      %v1759 = vsel %vm853, %v1729, 0
      %v1762 = vsel %vm853, %v1730, 0
      %v1765 = vsel %vm853, %v1731, 0
      %1767 = vmatprep.subr.mxu0 0.0
      %1768 = vmatpush1.msra.mxu0 %v1732
      %1769 = vmatprep.subr.mxu0 0.0
      %1770 = vmatpush1.msra.mxu0 %v1733
      %1771 = vmatprep.subr.mxu0 0.0
      %1772 = vmatpush1.msra.mxu0 %v1734
      %1773 = vmatprep.subr.mxu0 0.0
      %1774 = vmatpush1.msra.mxu0 %v1735
      %1775 = vmatprep.subr.mxu0 0.0
      %1776 = vmatpush1.msra.mxu0 0.0
      %1777 = vmatprep.subr.mxu0 0.0
      %1778 = vmatpush1.msra.mxu0 0.0
      %1779 = vmatprep.subr.mxu0 0.0
      %1780 = vmatpush1.msra.mxu0 0.0
      %1781 = vmatprep.subr.mxu0 0.0
      %1782 = vmatpush1.msra.mxu0 0.0
      %1783 = vmatprep.subr.mxu0 0.0
      %1784 = vmatpush1.msra.mxu0 0.0
      %1785 = vmatprep.subr.mxu0 0.0
      %1786 = vmatpush1.msra.mxu0 0.0
      %1787 = vmatprep.subr.mxu0 0.0
      %1788 = vmatpush1.msra.mxu0 0.0
      %1789 = vmatprep.subr.mxu0 0.0
      %1790 = vmatpush1.msra.mxu0 0.0
      %1791 = vmatprep.subr.mxu0 0.0
      %1792 = vmatpush1.msra.mxu0 0.0
      %1793 = vmatprep.subr.mxu0 0.0
      %1794 = vmatpush1.msra.mxu0 0.0
      %1795 = vmatprep.subr.mxu0 0.0
      %1796 = vmatpush1.msra.mxu0 0.0
      %1797 = vmatprep.subr.mxu0 0.0
      %1798 = vmatpush1.msra.mxu0 0.0
      %1799 = vmatprep.subr.mxu0 0.0
      %1800 = vmatpush1.msra.mxu0 0.0
      %1801 = vmatprep.subr.mxu0 0.0
      %1802 = vmatpush1.msra.mxu0 0.0
      %1803 = vmatprep.subr.mxu0 0.0
      %1804 = vmatpush1.msra.mxu0 0.0
      %1805 = vmatprep.subr.mxu0 0.0
      %1806 = vmatpush1.msra.mxu0 0.0
      %1807 = vmatprep.subr.mxu0 0.0
      %1808 = vmatpush1.msra.mxu0 0.0
      %1809 = vmatprep.subr.mxu0 0.0
      %1810 = vmatpush1.msra.mxu0 0.0
      %1811 = vmatprep.subr.mxu0 0.0
      %1812 = vmatpush1.msra.mxu0 0.0
      %1813 = vmatprep.subr.mxu0 0.0
      %1814 = vmatpush1.msra.mxu0 0.0
      %1815 = vmatprep.subr.mxu0 0.0
      %1816 = vmatpush1.msra.mxu0 0.0
      %1817 = vmatprep.subr.mxu0 0.0
      %1818 = vmatpush1.msra.mxu0 0.0
      %1819 = vmatprep.subr.mxu0 0.0
      %1820 = vmatpush1.msra.mxu0 0.0
      %1821 = vmatprep.subr.mxu0 0.0
      %1822 = vmatpush1.msra.mxu0 0.0
      %1823 = vmatprep.subr.mxu0 0.0
      %1824 = vmatpush1.msra.mxu0 0.0
      %1825 = vmatprep.subr.mxu0 0.0
      %1826 = vmatpush1.msra.mxu0 0.0
      %1827 = vmatprep.subr.mxu0 0.0
      %1828 = vmatpush1.msra.mxu0 0.0
      %1829 = vmatprep.subr.mxu0 0.0
      %1830 = vmatpush1.msra.mxu0 0.0
      %1831 = vmatprep.mubr.f32.mxu0 0.0
      %1832 = vmatmul.mubr.f32.gmra.mrb[0].mxu0 %v1744
      %v1833 = vpop.f32.mrb[0].mxu0
      %v1834 = vadd.f32 %v1741, %v1833
      %v1835 = vpop.f32.mrb[0].mxu0
      %1836 = vmatprep.mubr.f32.mxu0 0.0
      %1837 = vmatmul.mubr.f32.gmra.mrb[0].mxu0 %v1747
      %v1838 = vpop.f32.mrb[0].mxu0
      %v1839 = vadd.f32 %v1741, %v1838
      %v1840 = vpop.f32.mrb[0].mxu0
      %1841 = vmatprep.mubr.f32.mxu0 0.0
      %1842 = vmatmul.mubr.f32.gmra.mrb[0].mxu0 %v1750
      %v1843 = vpop.f32.mrb[0].mxu0
      %v1844 = vadd.f32 %v1741, %v1843
      %v1845 = vpop.f32.mrb[0].mxu0
      %1846 = vmatprep.mubr.f32.mxu0 0.0
      %1847 = vmatmul.mubr.f32.gmra.mrb[0].mxu0 %v1753
      %v1848 = vpop.f32.mrb[0].mxu0
      %v1849 = vadd.f32 %v1741, %v1848
      %v1850 = vpop.f32.mrb[0].mxu0
      %1851 = vmatprep.mubr.f32.mxu0 0.0
      %1852 = vmatmul.mubr.f32.gmra.mrb[0].mxu0 %v1756
      %v1853 = vpop.f32.mrb[0].mxu0
      %v1854 = vadd.f32 %v1741, %v1853
      %v1855 = vpop.f32.mrb[0].mxu0
      %1856 = vmatprep.mubr.f32.mxu0 0.0
      %1857 = vmatmul.mubr.f32.gmra.mrb[0].mxu0 %v1759
      %v1858 = vpop.f32.mrb[0].mxu0
      %v1859 = vadd.f32 %v1741, %v1858
      %v1860 = vpop.f32.mrb[0].mxu0
      %1861 = vmatprep.mubr.f32.mxu0 0.0
      %1862 = vmatmul.mubr.f32.gmra.mrb[0].mxu0 %v1762
      %v1863 = vpop.f32.mrb[0].mxu0
      %v1864 = vadd.f32 %v1741, %v1863
      %v1865 = vpop.f32.mrb[0].mxu0
      %1866 = vmatprep.mubr.f32.mxu0 0.0
      %1867 = vmatmul.mubr.f32.gmra.mrb[0].mxu0 %v1765
      %v1868 = vpop.f32.mrb[0].mxu0
      %v1869 = vadd.f32 %v1741, %v1868
      %v1870 = vpop.f32.mrb[0].mxu0
      %1871 = vdwg.mxu0
      %1872 = vst [vmem:[%s532] sm:$0xff] %v1834
      %1873 = vst [vmem:[%s532 + $0x8] sm:$0xff] %v1839
      %1874 = vst [vmem:[%s532 + $0x10] sm:$0xff] %v1844
      %1875 = vst [vmem:[%s532 + $0x18] sm:$0xff] %v1849
      %1876 = vst [vmem:[%s532 + $0x20] sm:$0xff] %v1854
      %1877 = vst [vmem:[%s532 + $0x28] sm:$0xff] %v1859
      %1878 = vst [vmem:[%s532 + $0x30] sm:$0xff] %v1864
      %1879 = vst [vmem:[%s532 + $0x38] sm:$0xff] %v1869
      %v1880 = vld [vmem:[#allocation3] sm:$0xff]
      %v1881 = vld [vmem:[#allocation3 + $0x8] sm:$0xff]
      %v1882 = vld [vmem:[#allocation3 + $0x10] sm:$0xff]
      %v1883 = vld [vmem:[#allocation3 + $0x18] sm:$0xff]
      %v1884 = vld [vmem:[#allocation3 + $0x20] sm:$0xff]
      %v1885 = vld [vmem:[#allocation3 + $0x28] sm:$0xff]
      %v1886 = vld [vmem:[#allocation3 + $0x30] sm:$0xff]
      %v1887 = vld [vmem:[#allocation3 + $0x38] sm:$0xff]
      %v1888 = vld [vmem:[%s7] sm:$0xff]
      %v1889 = vld [vmem:[%s7 + $0x8] sm:$0xff]
      %v1890 = vld [vmem:[%s7 + $0x10] sm:$0xff]
      %v1891 = vld [vmem:[%s7 + $0x18] sm:$0xff]
      %v1893 = vsel %vm853, %v1880, 0
      %v1896 = vsel %vm853, %v1881, 0
      %v1899 = vsel %vm853, %v1882, 0
      %v1902 = vsel %vm853, %v1883, 0
      %v1905 = vsel %vm853, %v1884, 0
      %v1908 = vsel %vm853, %v1885, 0
      %v1911 = vsel %vm853, %v1886, 0
      %v1914 = vsel %vm853, %v1887, 0
      %1916 = vmatprep.subr.mxu0 0.0
      %1917 = vmatpush1.msra.mxu0 %v1888
      %1918 = vmatprep.subr.mxu0 0.0
      %1919 = vmatpush1.msra.mxu0 %v1889
      %1920 = vmatprep.subr.mxu0 0.0
      %1921 = vmatpush1.msra.mxu0 %v1890
      %1922 = vmatprep.subr.mxu0 0.0
      %1923 = vmatpush1.msra.mxu0 %v1891
      %1924 = vmatprep.subr.mxu0 0.0
      %1925 = vmatpush1.msra.mxu0 0.0
      %1926 = vmatprep.subr.mxu0 0.0
      %1927 = vmatpush1.msra.mxu0 0.0
      %1928 = vmatprep.subr.mxu0 0.0
      %1929 = vmatpush1.msra.mxu0 0.0
      %1930 = vmatprep.subr.mxu0 0.0
      %1931 = vmatpush1.msra.mxu0 0.0
      %1932 = vmatprep.subr.mxu0 0.0
      %1933 = vmatpush1.msra.mxu0 0.0
      %1934 = vmatprep.subr.mxu0 0.0
      %1935 = vmatpush1.msra.mxu0 0.0
      %1936 = vmatprep.subr.mxu0 0.0
      %1937 = vmatpush1.msra.mxu0 0.0
      %1938 = vmatprep.subr.mxu0 0.0
      %1939 = vmatpush1.msra.mxu0 0.0
      %1940 = vmatprep.subr.mxu0 0.0
      %1941 = vmatpush1.msra.mxu0 0.0
      %1942 = vmatprep.subr.mxu0 0.0
      %1943 = vmatpush1.msra.mxu0 0.0
      %1944 = vmatprep.subr.mxu0 0.0
      %1945 = vmatpush1.msra.mxu0 0.0
      %1946 = vmatprep.subr.mxu0 0.0
      %1947 = vmatpush1.msra.mxu0 0.0
      %1948 = vmatprep.subr.mxu0 0.0
      %1949 = vmatpush1.msra.mxu0 0.0
      %1950 = vmatprep.subr.mxu0 0.0
      %1951 = vmatpush1.msra.mxu0 0.0
      %1952 = vmatprep.subr.mxu0 0.0
      %1953 = vmatpush1.msra.mxu0 0.0
      %1954 = vmatprep.subr.mxu0 0.0
      %1955 = vmatpush1.msra.mxu0 0.0
      %1956 = vmatprep.subr.mxu0 0.0
      %1957 = vmatpush1.msra.mxu0 0.0
      %1958 = vmatprep.subr.mxu0 0.0
      %1959 = vmatpush1.msra.mxu0 0.0
      %1960 = vmatprep.subr.mxu0 0.0
      %1961 = vmatpush1.msra.mxu0 0.0
      %1962 = vmatprep.subr.mxu0 0.0
      %1963 = vmatpush1.msra.mxu0 0.0
      %1964 = vmatprep.subr.mxu0 0.0
      %1965 = vmatpush1.msra.mxu0 0.0
      %1966 = vmatprep.subr.mxu0 0.0
      %1967 = vmatpush1.msra.mxu0 0.0
      %1968 = vmatprep.subr.mxu0 0.0
      %1969 = vmatpush1.msra.mxu0 0.0
      %1970 = vmatprep.subr.mxu0 0.0
      %1971 = vmatpush1.msra.mxu0 0.0
      %1972 = vmatprep.subr.mxu0 0.0
      %1973 = vmatpush1.msra.mxu0 0.0
      %1974 = vmatprep.subr.mxu0 0.0
      %1975 = vmatpush1.msra.mxu0 0.0
      %1976 = vmatprep.subr.mxu0 0.0
      %1977 = vmatpush1.msra.mxu0 0.0
      %1978 = vmatprep.subr.mxu0 0.0
      %1979 = vmatpush1.msra.mxu0 0.0
      %1980 = vmatprep.mubr.f32.mxu0 0.0
      %1981 = vmatmul.mubr.f32.gmra.mrb[0].mxu0 %v1893
      %v1982 = vpop.f32.mrb[0].mxu0
      %v1983 = vadd.f32 0.0, %v1982
      %v1984 = vpop.f32.mrb[0].mxu0
      %1985 = vmatprep.mubr.f32.mxu0 0.0
      %1986 = vmatmul.mubr.f32.gmra.mrb[0].mxu0 %v1896
      %v1987 = vpop.f32.mrb[0].mxu0
      %v1988 = vadd.f32 0.0, %v1987
      %v1989 = vpop.f32.mrb[0].mxu0
      %1990 = vmatprep.mubr.f32.mxu0 0.0
      %1991 = vmatmul.mubr.f32.gmra.mrb[0].mxu0 %v1899
      %v1992 = vpop.f32.mrb[0].mxu0
      %v1993 = vadd.f32 0.0, %v1992
      %v1994 = vpop.f32.mrb[0].mxu0
      %1995 = vmatprep.mubr.f32.mxu0 0.0
      %1996 = vmatmul.mubr.f32.gmra.mrb[0].mxu0 %v1902
      %v1997 = vpop.f32.mrb[0].mxu0
      %v1998 = vadd.f32 0.0, %v1997
      %v1999 = vpop.f32.mrb[0].mxu0
      %2000 = vmatprep.mubr.f32.mxu0 0.0
      %2001 = vmatmul.mubr.f32.gmra.mrb[0].mxu0 %v1905
      %v2002 = vpop.f32.mrb[0].mxu0
      %v2003 = vadd.f32 0.0, %v2002
      %v2004 = vpop.f32.mrb[0].mxu0
      %2005 = vmatprep.mubr.f32.mxu0 0.0
      %2006 = vmatmul.mubr.f32.gmra.mrb[0].mxu0 %v1908
      %v2007 = vpop.f32.mrb[0].mxu0
      %v2008 = vadd.f32 0.0, %v2007
      %v2009 = vpop.f32.mrb[0].mxu0
      %2010 = vmatprep.mubr.f32.mxu0 0.0
      %2011 = vmatmul.mubr.f32.gmra.mrb[0].mxu0 %v1911
      %v2012 = vpop.f32.mrb[0].mxu0
      %v2013 = vadd.f32 0.0, %v2012
      %v2014 = vpop.f32.mrb[0].mxu0
      %2015 = vmatprep.mubr.f32.mxu0 0.0
      %2016 = vmatmul.mubr.f32.gmra.mrb[0].mxu0 %v1914
      %v2017 = vpop.f32.mrb[0].mxu0
      %v2018 = vadd.f32 0.0, %v2017
      %v2019 = vpop.f32.mrb[0].mxu0
      %2020 = vdwg.mxu0
      %2021 = vst [vmem:[#allocation4] sm:$0xff] %v1983
      %2022 = vst [vmem:[#allocation4 + $0x8] sm:$0xff] %v1988
      %2023 = vst [vmem:[#allocation4 + $0x10] sm:$0xff] %v1993
      %2024 = vst [vmem:[#allocation4 + $0x18] sm:$0xff] %v1998
      %2025 = vst [vmem:[#allocation4 + $0x20] sm:$0xff] %v2003
      %2026 = vst [vmem:[#allocation4 + $0x28] sm:$0xff] %v2008
      %2027 = vst [vmem:[#allocation4 + $0x30] sm:$0xff] %v2013
      %2028 = vst [vmem:[#allocation4 + $0x38] sm:$0xff] %v2018
      %v2029 = vld [vmem:[%s532] sm:$0xff]
      %s2030 = scalar_lea.vmem [#allocation4], 56
      %v2031 = vld [vmem:[%s2030] sm:$0xff]
      %v2032 = vadd.f32 %v2029, %v2031
      %2033 = vst [vmem:[%s532] sm:$0xff] %v2032
      %s2034 = scalar_lea.vmem %s532, 8
      %v2035 = vld [vmem:[%s2034] sm:$0xff]
      %s2036 = scalar_lea.vmem [#allocation4], 48
      %v2037 = vld [vmem:[%s2036] sm:$0xff]
      %v2038 = vadd.f32 %v2035, %v2037
      %2039 = vst [vmem:[%s2034] sm:$0xff] %v2038
      %s2040 = scalar_lea.vmem %s532, 16
      %v2041 = vld [vmem:[%s2040] sm:$0xff]
      %s2042 = scalar_lea.vmem [#allocation4], 40
      %v2043 = vld [vmem:[%s2042] sm:$0xff]
      %v2044 = vadd.f32 %v2041, %v2043
      %2045 = vst [vmem:[%s2040] sm:$0xff] %v2044
      %s2046 = scalar_lea.vmem %s532, 24
      %v2047 = vld [vmem:[%s2046] sm:$0xff]
      %s2048 = scalar_lea.vmem [#allocation4], 32
      %v2049 = vld [vmem:[%s2048] sm:$0xff]
      %v2050 = vadd.f32 %v2047, %v2049
      %2051 = vst [vmem:[%s2046] sm:$0xff] %v2050
      %s2052 = scalar_lea.vmem %s532, 32
      %v2053 = vld [vmem:[%s2052] sm:$0xff]
      %s2054 = scalar_lea.vmem [#allocation4], 24
      %v2055 = vld [vmem:[%s2054] sm:$0xff]
      %v2056 = vadd.f32 %v2053, %v2055
      %2057 = vst [vmem:[%s2052] sm:$0xff] %v2056
      %s2058 = scalar_lea.vmem %s532, 40
      %v2059 = vld [vmem:[%s2058] sm:$0xff]
      %s2060 = scalar_lea.vmem [#allocation4], 16
      %v2061 = vld [vmem:[%s2060] sm:$0xff]
      %v2062 = vadd.f32 %v2059, %v2061
      %2063 = vst [vmem:[%s2058] sm:$0xff] %v2062
      %s2064 = scalar_lea.vmem %s532, 48
      %v2065 = vld [vmem:[%s2064] sm:$0xff]
      %s2066 = scalar_lea.vmem [#allocation4], 8
      %v2067 = vld [vmem:[%s2066] sm:$0xff]
      %v2068 = vadd.f32 %v2065, %v2067
      %2069 = vst [vmem:[%s2064] sm:$0xff] %v2068
      %s2070 = scalar_lea.vmem %s532, 56
      %v2071 = vld [vmem:[%s2070] sm:$0xff]
      %v2072 = vld [vmem:[#allocation4] sm:$0xff]
      %v2073 = vadd.f32 %v2071, %v2072
      %2074 = vst [vmem:[%s2070] sm:$0xff] %v2073
      %v2075 = vlaneseq
      %v2076 = vshrl.u32 %v2075, 7
      %v2077 = vlaneseq
      %v2078 = vand.u32 %v2077, 127
      %vm2079 = vcmp.eq.s32.totalorder %v2076, %v2078
      %v2080 = vld [vmem:[%s9] sm:$0xff]
      %vm2081 = vcmp.eq.s32.totalorder %v2076, 3
      %v2082 = vsel %vm2081, 0.0, -10000.0
      %v2083 = vadd.f32 %v2080, %v2082
      %v2084 = vrot.slane %v2083, 4
      %v2085 = vmax.f32 %v2083, %v2084
      %v2086 = vrot.slane %v2085, 2
      %v2087 = vmax.f32 %v2085, %v2086
      %v2088 = vrot.slane %v2087, 1
      %v2089 = vmax.f32 %v2087, %v2088
      %vm2090 = vcmp.ge.f32.partialorder %v2083, %v2089
      %v2091 = vsel %vm2090, %v2076, 128
      %v2092 = vrot.slane %v2091, 4
      %vm2093 = vcmp.lt.s32.totalorder %v2091, %v2092
      %v2094 = vsel %vm2093, %v2091, %v2092
      %v2095 = vrot.slane %v2094, 2
      %vm2096 = vcmp.lt.s32.totalorder %v2094, %v2095
      %v2097 = vsel %vm2096, %v2094, %v2095
      %v2098 = vrot.slane %v2097, 1
      %vm2099 = vcmp.lt.s32.totalorder %v2097, %v2098
      %v2100 = vsel %vm2099, %v2097, %v2098
      %vm2101 = vcmask 1041409
      %vm2102 = vcmask 1042434
      %v2103 = vsel %vm2102, %v2100, %v2100
      %vm2104 = vcmask 1043459
      %v2105 = vsel %vm2104, %v2100, %v2103
      %vm2106 = vcmask 1044484
      %v2107 = vsel %vm2106, %v2100, %v2105
      %vm2108 = vcmask 1045509
      %v2109 = vsel %vm2108, %v2100, %v2107
      %vm2110 = vcmask 1046534
      %v2111 = vsel %vm2110, %v2100, %v2109
      %vm2112 = vcmask 1047559
      %v2113 = vsel %vm2112, %v2100, %v2111
      %2114 = vst [vmem:[#allocation5] sm:$0xff] %v2113
      %v2115 = vld [vmem:[%s532] sm:$0xff]
      %v2117 = vrot.slane %v2115, 1
      %v2118 = vrot.slane %v2115, 2
      %v2119 = vrot.slane %v2115, 3
      %v2120 = vrot.slane %v2115, 4
      %v2121 = vrot.slane %v2115, 5
      %v2122 = vrot.slane %v2115, 6
      %v2123 = vrot.slane %v2115, 7
      %v2132 = vadd.f32 %v2089, %v2115
      %v2133 = vadd.f32 %v2089, %v2117
      %v2134 = vadd.f32 %v2089, %v2118
      %v2135 = vadd.f32 %v2089, %v2119
      %v2136 = vadd.f32 %v2089, %v2120
      %v2137 = vadd.f32 %v2089, %v2121
      %v2138 = vadd.f32 %v2089, %v2122
      %v2139 = vadd.f32 %v2089, %v2123
      %v2140 = vsel %vm2079, 1, 0
      %vm2141 = vcmp.eq.s32.totalorder %v2140, 1
      %v2142 = vlaneseq
      %v2143 = vshrl.u32 %v2142, 7
      %v2144 = vsub.s32 0, %v2143
      %v2145 = vrot.slane %v2132, %v2144
      %v2146 = vlaneseq
      %v2147 = vshrl.u32 %v2146, 7
      %v2148 = vsub.s32 0, %v2147
      %v2149 = vrot.slane %v2133, %v2148
      %v2150 = vlaneseq
      %v2151 = vshrl.u32 %v2150, 7
      %v2152 = vsub.s32 0, %v2151
      %v2153 = vrot.slane %v2134, %v2152
      %v2154 = vlaneseq
      %v2155 = vshrl.u32 %v2154, 7
      %v2156 = vsub.s32 0, %v2155
      %v2157 = vrot.slane %v2135, %v2156
      %v2158 = vlaneseq
      %v2159 = vshrl.u32 %v2158, 7
      %v2160 = vsub.s32 0, %v2159
      %v2161 = vrot.slane %v2136, %v2160
      %v2162 = vlaneseq
      %v2163 = vshrl.u32 %v2162, 7
      %v2164 = vsub.s32 0, %v2163
      %v2165 = vrot.slane %v2137, %v2164
      %v2166 = vlaneseq
      %v2167 = vshrl.u32 %v2166, 7
      %v2168 = vsub.s32 0, %v2167
      %v2169 = vrot.slane %v2138, %v2168
      %v2170 = vlaneseq
      %v2171 = vshrl.u32 %v2170, 7
      %v2172 = vsub.s32 0, %v2171
      %v2173 = vrot.slane %v2139, %v2172
      %v2174 = vsel %vm2141, %v2145, -1e+30
      %v2175 = vsel %vm2141, %v2149, -1e+30
      %v2176 = vsel %vm2141, %v2153, -1e+30
      %v2177 = vsel %vm2141, %v2157, -1e+30
      %v2178 = vsel %vm2141, %v2161, -1e+30
      %v2179 = vsel %vm2141, %v2165, -1e+30
      %v2180 = vsel %vm2141, %v2169, -1e+30
      %v2181 = vsel %vm2141, %v2173, -1e+30
      %2182 = vmax.xlane.f32.xlu0 %v2174
      %v2183 = vpop.xlane.xlu0 %2182
      %2184 = vmax.xlane.f32.xlu0 %v2175
      %v2185 = vpop.xlane.xlu0 %2184
      %2186 = vmax.xlane.f32.xlu0 %v2176
      %v2187 = vpop.xlane.xlu0 %2186
      %2188 = vmax.xlane.f32.xlu0 %v2177
      %v2189 = vpop.xlane.xlu0 %2188
      %2190 = vmax.xlane.f32.xlu0 %v2178
      %v2191 = vpop.xlane.xlu0 %2190
      %2192 = vmax.xlane.f32.xlu0 %v2179
      %v2193 = vpop.xlane.xlu0 %2192
      %2194 = vmax.xlane.f32.xlu0 %v2180
      %v2195 = vpop.xlane.xlu0 %2194
      %2196 = vmax.xlane.f32.xlu0 %v2181
      %v2197 = vpop.xlane.xlu0 %2196
      %v2198 = vadd.f32 %v2080, %v2183
      %v2199 = vadd.f32 %v2080, %v2185
      %v2200 = vadd.f32 %v2080, %v2187
      %v2201 = vadd.f32 %v2080, %v2189
      %v2202 = vadd.f32 %v2080, %v2191
      %v2203 = vadd.f32 %v2080, %v2193
      %v2204 = vadd.f32 %v2080, %v2195
      %v2205 = vadd.f32 %v2080, %v2197
      %v2206 = vrot.slane %v2198, 4
      %v2207 = vmax.f32 %v2198, %v2206
      %v2208 = vrot.slane %v2207, 2
      %v2209 = vmax.f32 %v2207, %v2208
      %v2210 = vrot.slane %v2209, 1
      %v2211 = vmax.f32 %v2209, %v2210
      %v2212 = vrot.slane %v2199, 4
      %v2213 = vmax.f32 %v2199, %v2212
      %v2214 = vrot.slane %v2213, 2
      %v2215 = vmax.f32 %v2213, %v2214
      %v2216 = vrot.slane %v2215, 1
      %v2217 = vmax.f32 %v2215, %v2216
      %v2218 = vrot.slane %v2200, 4
      %v2219 = vmax.f32 %v2200, %v2218
      %v2220 = vrot.slane %v2219, 2
      %v2221 = vmax.f32 %v2219, %v2220
      %v2222 = vrot.slane %v2221, 1
      %v2223 = vmax.f32 %v2221, %v2222
      %v2224 = vrot.slane %v2201, 4
      %v2225 = vmax.f32 %v2201, %v2224
      %v2226 = vrot.slane %v2225, 2
      %v2227 = vmax.f32 %v2225, %v2226
      %v2228 = vrot.slane %v2227, 1
      %v2229 = vmax.f32 %v2227, %v2228
      %v2230 = vrot.slane %v2202, 4
      %v2231 = vmax.f32 %v2202, %v2230
      %v2232 = vrot.slane %v2231, 2
      %v2233 = vmax.f32 %v2231, %v2232
      %v2234 = vrot.slane %v2233, 1
      %v2235 = vmax.f32 %v2233, %v2234
      %v2236 = vrot.slane %v2203, 4
      %v2237 = vmax.f32 %v2203, %v2236
      %v2238 = vrot.slane %v2237, 2
      %v2239 = vmax.f32 %v2237, %v2238
      %v2240 = vrot.slane %v2239, 1
      %v2241 = vmax.f32 %v2239, %v2240
      %v2242 = vrot.slane %v2204, 4
      %v2243 = vmax.f32 %v2204, %v2242
      %v2244 = vrot.slane %v2243, 2
      %v2245 = vmax.f32 %v2243, %v2244
      %v2246 = vrot.slane %v2245, 1
      %v2247 = vmax.f32 %v2245, %v2246
      %v2248 = vrot.slane %v2205, 4
      %v2249 = vmax.f32 %v2205, %v2248
      %v2250 = vrot.slane %v2249, 2
      %v2251 = vmax.f32 %v2249, %v2250
      %v2252 = vrot.slane %v2251, 1
      %v2253 = vmax.f32 %v2251, %v2252
      %vm2254 = vcmp.ge.f32.partialorder %v2198, %v2211
      %vm2255 = vcmp.ge.f32.partialorder %v2199, %v2217
      %vm2256 = vcmp.ge.f32.partialorder %v2200, %v2223
      %vm2257 = vcmp.ge.f32.partialorder %v2201, %v2229
      %vm2258 = vcmp.ge.f32.partialorder %v2202, %v2235
      %vm2259 = vcmp.ge.f32.partialorder %v2203, %v2241
      %vm2260 = vcmp.ge.f32.partialorder %v2204, %v2247
      %vm2261 = vcmp.ge.f32.partialorder %v2205, %v2253
      %v2262 = vsel %vm2254, %v2076, 128
      %v2263 = vsel %vm2255, %v2076, 128
      %v2264 = vsel %vm2256, %v2076, 128
      %v2265 = vsel %vm2257, %v2076, 128
      %v2266 = vsel %vm2258, %v2076, 128
      %v2267 = vsel %vm2259, %v2076, 128
      %v2268 = vsel %vm2260, %v2076, 128
      %v2269 = vsel %vm2261, %v2076, 128
      %v2270 = vrot.slane %v2262, 4
      %vm2271 = vcmp.lt.s32.totalorder %v2262, %v2270
      %v2272 = vsel %vm2271, %v2262, %v2270
      %v2273 = vrot.slane %v2272, 2
      %vm2274 = vcmp.lt.s32.totalorder %v2272, %v2273
      %v2275 = vsel %vm2274, %v2272, %v2273
      %v2276 = vrot.slane %v2275, 1
      %vm2277 = vcmp.lt.s32.totalorder %v2275, %v2276
      %v2278 = vsel %vm2277, %v2275, %v2276
      %v2279 = vrot.slane %v2263, 4
      %vm2280 = vcmp.lt.s32.totalorder %v2263, %v2279
      %v2281 = vsel %vm2280, %v2263, %v2279
      %v2282 = vrot.slane %v2281, 2
      %vm2283 = vcmp.lt.s32.totalorder %v2281, %v2282
      %v2284 = vsel %vm2283, %v2281, %v2282
      %v2285 = vrot.slane %v2284, 1
      %vm2286 = vcmp.lt.s32.totalorder %v2284, %v2285
      %v2287 = vsel %vm2286, %v2284, %v2285
      %v2288 = vrot.slane %v2264, 4
      %vm2289 = vcmp.lt.s32.totalorder %v2264, %v2288
      %v2290 = vsel %vm2289, %v2264, %v2288
      %v2291 = vrot.slane %v2290, 2
      %vm2292 = vcmp.lt.s32.totalorder %v2290, %v2291
      %v2293 = vsel %vm2292, %v2290, %v2291
      %v2294 = vrot.slane %v2293, 1
      %vm2295 = vcmp.lt.s32.totalorder %v2293, %v2294
      %v2296 = vsel %vm2295, %v2293, %v2294
      %v2297 = vrot.slane %v2265, 4
      %vm2298 = vcmp.lt.s32.totalorder %v2265, %v2297
      %v2299 = vsel %vm2298, %v2265, %v2297
      %v2300 = vrot.slane %v2299, 2
      %vm2301 = vcmp.lt.s32.totalorder %v2299, %v2300
      %v2302 = vsel %vm2301, %v2299, %v2300
      %v2303 = vrot.slane %v2302, 1
      %vm2304 = vcmp.lt.s32.totalorder %v2302, %v2303
      %v2305 = vsel %vm2304, %v2302, %v2303
      %v2306 = vrot.slane %v2266, 4
      %vm2307 = vcmp.lt.s32.totalorder %v2266, %v2306
      %v2308 = vsel %vm2307, %v2266, %v2306
      %v2309 = vrot.slane %v2308, 2
      %vm2310 = vcmp.lt.s32.totalorder %v2308, %v2309
      %v2311 = vsel %vm2310, %v2308, %v2309
      %v2312 = vrot.slane %v2311, 1
      %vm2313 = vcmp.lt.s32.totalorder %v2311, %v2312
      %v2314 = vsel %vm2313, %v2311, %v2312
      %v2315 = vrot.slane %v2267, 4
      %vm2316 = vcmp.lt.s32.totalorder %v2267, %v2315
      %v2317 = vsel %vm2316, %v2267, %v2315
      %v2318 = vrot.slane %v2317, 2
      %vm2319 = vcmp.lt.s32.totalorder %v2317, %v2318
      %v2320 = vsel %vm2319, %v2317, %v2318
      %v2321 = vrot.slane %v2320, 1
      %vm2322 = vcmp.lt.s32.totalorder %v2320, %v2321
      %v2323 = vsel %vm2322, %v2320, %v2321
      %v2324 = vrot.slane %v2268, 4
      %vm2325 = vcmp.lt.s32.totalorder %v2268, %v2324
      %v2326 = vsel %vm2325, %v2268, %v2324
      %v2327 = vrot.slane %v2326, 2
      %vm2328 = vcmp.lt.s32.totalorder %v2326, %v2327
      %v2329 = vsel %vm2328, %v2326, %v2327
      %v2330 = vrot.slane %v2329, 1
      %vm2331 = vcmp.lt.s32.totalorder %v2329, %v2330
      %v2332 = vsel %vm2331, %v2329, %v2330
      %v2333 = vrot.slane %v2269, 4
      %vm2334 = vcmp.lt.s32.totalorder %v2269, %v2333
      %v2335 = vsel %vm2334, %v2269, %v2333
      %v2336 = vrot.slane %v2335, 2
      %vm2337 = vcmp.lt.s32.totalorder %v2335, %v2336
      %v2338 = vsel %vm2337, %v2335, %v2336
      %v2339 = vrot.slane %v2338, 1
      %vm2340 = vcmp.lt.s32.totalorder %v2338, %v2339
      %v2341 = vsel %vm2340, %v2338, %v2339
      %v2342 = vsel %vm2101, %v2287, %v2278
      %v2343 = vsel %vm2102, %v2296, %v2342
      %v2344 = vsel %vm2104, %v2305, %v2343
      %v2345 = vsel %vm2106, %v2314, %v2344
      %v2346 = vsel %vm2108, %v2323, %v2345
      %v2347 = vsel %vm2110, %v2332, %v2346
      %v2348 = vsel %vm2112, %v2341, %v2347
      %s2349 = scalar_lea.vmem [#allocation5], 8
      %2350 = vst [vmem:[%s2349] sm:$0xff] %v2348
      %v2351 = vld [vmem:[%s2034] sm:$0xff]
      %v2353 = vrot.slane %v2351, 1
      %v2354 = vrot.slane %v2351, 2
      %v2355 = vrot.slane %v2351, 3
      %v2356 = vrot.slane %v2351, 4
      %v2357 = vrot.slane %v2351, 5
      %v2358 = vrot.slane %v2351, 6
      %v2359 = vrot.slane %v2351, 7
      %v2368 = vadd.f32 %v2211, %v2351
      %v2369 = vadd.f32 %v2217, %v2353
      %v2370 = vadd.f32 %v2223, %v2354
      %v2371 = vadd.f32 %v2229, %v2355
      %v2372 = vadd.f32 %v2235, %v2356
      %v2373 = vadd.f32 %v2241, %v2357
      %v2374 = vadd.f32 %v2247, %v2358
      %v2375 = vadd.f32 %v2253, %v2359
      %v2376 = vlaneseq
      %v2377 = vshrl.u32 %v2376, 7
      %v2378 = vsub.s32 0, %v2377
      %v2379 = vrot.slane %v2368, %v2378
      %v2380 = vlaneseq
      %v2381 = vshrl.u32 %v2380, 7
      %v2382 = vsub.s32 0, %v2381
      %v2383 = vrot.slane %v2369, %v2382
      %v2384 = vlaneseq
      %v2385 = vshrl.u32 %v2384, 7
      %v2386 = vsub.s32 0, %v2385
      %v2387 = vrot.slane %v2370, %v2386
      %v2388 = vlaneseq
      %v2389 = vshrl.u32 %v2388, 7
      %v2390 = vsub.s32 0, %v2389
      %v2391 = vrot.slane %v2371, %v2390
      %v2392 = vlaneseq
      %v2393 = vshrl.u32 %v2392, 7
      %v2394 = vsub.s32 0, %v2393
      %v2395 = vrot.slane %v2372, %v2394
      %v2396 = vlaneseq
      %v2397 = vshrl.u32 %v2396, 7
      %v2398 = vsub.s32 0, %v2397
      %v2399 = vrot.slane %v2373, %v2398
      %v2400 = vlaneseq
      %v2401 = vshrl.u32 %v2400, 7
      %v2402 = vsub.s32 0, %v2401
      %v2403 = vrot.slane %v2374, %v2402
      %v2404 = vlaneseq
      %v2405 = vshrl.u32 %v2404, 7
      %v2406 = vsub.s32 0, %v2405
      %v2407 = vrot.slane %v2375, %v2406
      %v2408 = vsel %vm2141, %v2379, -1e+30
      %v2409 = vsel %vm2141, %v2383, -1e+30
      %v2410 = vsel %vm2141, %v2387, -1e+30
      %v2411 = vsel %vm2141, %v2391, -1e+30
      %v2412 = vsel %vm2141, %v2395, -1e+30
      %v2413 = vsel %vm2141, %v2399, -1e+30
      %v2414 = vsel %vm2141, %v2403, -1e+30
      %v2415 = vsel %vm2141, %v2407, -1e+30
      %2416 = vmax.xlane.f32.xlu0 %v2408
      %v2417 = vpop.xlane.xlu0 %2416
      %2418 = vmax.xlane.f32.xlu0 %v2409
      %v2419 = vpop.xlane.xlu0 %2418
      %2420 = vmax.xlane.f32.xlu0 %v2410
      %v2421 = vpop.xlane.xlu0 %2420
      %2422 = vmax.xlane.f32.xlu0 %v2411
      %v2423 = vpop.xlane.xlu0 %2422
      %2424 = vmax.xlane.f32.xlu0 %v2412
      %v2425 = vpop.xlane.xlu0 %2424
      %2426 = vmax.xlane.f32.xlu0 %v2413
      %v2427 = vpop.xlane.xlu0 %2426
      %2428 = vmax.xlane.f32.xlu0 %v2414
      %v2429 = vpop.xlane.xlu0 %2428
      %2430 = vmax.xlane.f32.xlu0 %v2415
      %v2431 = vpop.xlane.xlu0 %2430
      %v2432 = vadd.f32 %v2080, %v2417
      %v2433 = vadd.f32 %v2080, %v2419
      %v2434 = vadd.f32 %v2080, %v2421
      %v2435 = vadd.f32 %v2080, %v2423
      %v2436 = vadd.f32 %v2080, %v2425
      %v2437 = vadd.f32 %v2080, %v2427
      %v2438 = vadd.f32 %v2080, %v2429
      %v2439 = vadd.f32 %v2080, %v2431
      %v2440 = vrot.slane %v2432, 4
      %v2441 = vmax.f32 %v2432, %v2440
      %v2442 = vrot.slane %v2441, 2
      %v2443 = vmax.f32 %v2441, %v2442
      %v2444 = vrot.slane %v2443, 1
      %v2445 = vmax.f32 %v2443, %v2444
      %v2446 = vrot.slane %v2433, 4
      %v2447 = vmax.f32 %v2433, %v2446
      %v2448 = vrot.slane %v2447, 2
      %v2449 = vmax.f32 %v2447, %v2448
      %v2450 = vrot.slane %v2449, 1
      %v2451 = vmax.f32 %v2449, %v2450
      %v2452 = vrot.slane %v2434, 4
      %v2453 = vmax.f32 %v2434, %v2452
      %v2454 = vrot.slane %v2453, 2
      %v2455 = vmax.f32 %v2453, %v2454
      %v2456 = vrot.slane %v2455, 1
      %v2457 = vmax.f32 %v2455, %v2456
      %v2458 = vrot.slane %v2435, 4
      %v2459 = vmax.f32 %v2435, %v2458
      %v2460 = vrot.slane %v2459, 2
      %v2461 = vmax.f32 %v2459, %v2460
      %v2462 = vrot.slane %v2461, 1
      %v2463 = vmax.f32 %v2461, %v2462
      %v2464 = vrot.slane %v2436, 4
      %v2465 = vmax.f32 %v2436, %v2464
      %v2466 = vrot.slane %v2465, 2
      %v2467 = vmax.f32 %v2465, %v2466
      %v2468 = vrot.slane %v2467, 1
      %v2469 = vmax.f32 %v2467, %v2468
      %v2470 = vrot.slane %v2437, 4
      %v2471 = vmax.f32 %v2437, %v2470
      %v2472 = vrot.slane %v2471, 2
      %v2473 = vmax.f32 %v2471, %v2472
      %v2474 = vrot.slane %v2473, 1
      %v2475 = vmax.f32 %v2473, %v2474
      %v2476 = vrot.slane %v2438, 4
      %v2477 = vmax.f32 %v2438, %v2476
      %v2478 = vrot.slane %v2477, 2
      %v2479 = vmax.f32 %v2477, %v2478
      %v2480 = vrot.slane %v2479, 1
      %v2481 = vmax.f32 %v2479, %v2480
      %v2482 = vrot.slane %v2439, 4
      %v2483 = vmax.f32 %v2439, %v2482
      %v2484 = vrot.slane %v2483, 2
      %v2485 = vmax.f32 %v2483, %v2484
      %v2486 = vrot.slane %v2485, 1
      %v2487 = vmax.f32 %v2485, %v2486
      %vm2488 = vcmp.ge.f32.partialorder %v2432, %v2445
      %vm2489 = vcmp.ge.f32.partialorder %v2433, %v2451
      %vm2490 = vcmp.ge.f32.partialorder %v2434, %v2457
      %vm2491 = vcmp.ge.f32.partialorder %v2435, %v2463
      %vm2492 = vcmp.ge.f32.partialorder %v2436, %v2469
      %vm2493 = vcmp.ge.f32.partialorder %v2437, %v2475
      %vm2494 = vcmp.ge.f32.partialorder %v2438, %v2481
      %vm2495 = vcmp.ge.f32.partialorder %v2439, %v2487
      %v2496 = vsel %vm2488, %v2076, 128
      %v2497 = vsel %vm2489, %v2076, 128
      %v2498 = vsel %vm2490, %v2076, 128
      %v2499 = vsel %vm2491, %v2076, 128
      %v2500 = vsel %vm2492, %v2076, 128
      %v2501 = vsel %vm2493, %v2076, 128
      %v2502 = vsel %vm2494, %v2076, 128
      %v2503 = vsel %vm2495, %v2076, 128
      %v2504 = vrot.slane %v2496, 4
      %vm2505 = vcmp.lt.s32.totalorder %v2496, %v2504
      %v2506 = vsel %vm2505, %v2496, %v2504
      %v2507 = vrot.slane %v2506, 2
      %vm2508 = vcmp.lt.s32.totalorder %v2506, %v2507
      %v2509 = vsel %vm2508, %v2506, %v2507
      %v2510 = vrot.slane %v2509, 1
      %vm2511 = vcmp.lt.s32.totalorder %v2509, %v2510
      %v2512 = vsel %vm2511, %v2509, %v2510
      %v2513 = vrot.slane %v2497, 4
      %vm2514 = vcmp.lt.s32.totalorder %v2497, %v2513
      %v2515 = vsel %vm2514, %v2497, %v2513
      %v2516 = vrot.slane %v2515, 2
      %vm2517 = vcmp.lt.s32.totalorder %v2515, %v2516
      %v2518 = vsel %vm2517, %v2515, %v2516
      %v2519 = vrot.slane %v2518, 1
      %vm2520 = vcmp.lt.s32.totalorder %v2518, %v2519
      %v2521 = vsel %vm2520, %v2518, %v2519
      %v2522 = vrot.slane %v2498, 4
      %vm2523 = vcmp.lt.s32.totalorder %v2498, %v2522
      %v2524 = vsel %vm2523, %v2498, %v2522
      %v2525 = vrot.slane %v2524, 2
      %vm2526 = vcmp.lt.s32.totalorder %v2524, %v2525
      %v2527 = vsel %vm2526, %v2524, %v2525
      %v2528 = vrot.slane %v2527, 1
      %vm2529 = vcmp.lt.s32.totalorder %v2527, %v2528
      %v2530 = vsel %vm2529, %v2527, %v2528
      %v2531 = vrot.slane %v2499, 4
      %vm2532 = vcmp.lt.s32.totalorder %v2499, %v2531
      %v2533 = vsel %vm2532, %v2499, %v2531
      %v2534 = vrot.slane %v2533, 2
      %vm2535 = vcmp.lt.s32.totalorder %v2533, %v2534
      %v2536 = vsel %vm2535, %v2533, %v2534
      %v2537 = vrot.slane %v2536, 1
      %vm2538 = vcmp.lt.s32.totalorder %v2536, %v2537
      %v2539 = vsel %vm2538, %v2536, %v2537
      %v2540 = vrot.slane %v2500, 4
      %vm2541 = vcmp.lt.s32.totalorder %v2500, %v2540
      %v2542 = vsel %vm2541, %v2500, %v2540
      %v2543 = vrot.slane %v2542, 2
      %vm2544 = vcmp.lt.s32.totalorder %v2542, %v2543
      %v2545 = vsel %vm2544, %v2542, %v2543
      %v2546 = vrot.slane %v2545, 1
      %vm2547 = vcmp.lt.s32.totalorder %v2545, %v2546
      %v2548 = vsel %vm2547, %v2545, %v2546
      %v2549 = vrot.slane %v2501, 4
      %vm2550 = vcmp.lt.s32.totalorder %v2501, %v2549
      %v2551 = vsel %vm2550, %v2501, %v2549
      %v2552 = vrot.slane %v2551, 2
      %vm2553 = vcmp.lt.s32.totalorder %v2551, %v2552
      %v2554 = vsel %vm2553, %v2551, %v2552
      %v2555 = vrot.slane %v2554, 1
      %vm2556 = vcmp.lt.s32.totalorder %v2554, %v2555
      %v2557 = vsel %vm2556, %v2554, %v2555
      %v2558 = vrot.slane %v2502, 4
      %vm2559 = vcmp.lt.s32.totalorder %v2502, %v2558
      %v2560 = vsel %vm2559, %v2502, %v2558
      %v2561 = vrot.slane %v2560, 2
      %vm2562 = vcmp.lt.s32.totalorder %v2560, %v2561
      %v2563 = vsel %vm2562, %v2560, %v2561
      %v2564 = vrot.slane %v2563, 1
      %vm2565 = vcmp.lt.s32.totalorder %v2563, %v2564
      %v2566 = vsel %vm2565, %v2563, %v2564
      %v2567 = vrot.slane %v2503, 4
      %vm2568 = vcmp.lt.s32.totalorder %v2503, %v2567
      %v2569 = vsel %vm2568, %v2503, %v2567
      %v2570 = vrot.slane %v2569, 2
      %vm2571 = vcmp.lt.s32.totalorder %v2569, %v2570
      %v2572 = vsel %vm2571, %v2569, %v2570
      %v2573 = vrot.slane %v2572, 1
      %vm2574 = vcmp.lt.s32.totalorder %v2572, %v2573
      %v2575 = vsel %vm2574, %v2572, %v2573
      %v2576 = vsel %vm2101, %v2521, %v2512
      %v2577 = vsel %vm2102, %v2530, %v2576
      %v2578 = vsel %vm2104, %v2539, %v2577
      %v2579 = vsel %vm2106, %v2548, %v2578
      %v2580 = vsel %vm2108, %v2557, %v2579
      %v2581 = vsel %vm2110, %v2566, %v2580
      %v2582 = vsel %vm2112, %v2575, %v2581
      %s2583 = scalar_lea.vmem [#allocation5], 16
      %2584 = vst [vmem:[%s2583] sm:$0xff] %v2582
      %v2585 = vld [vmem:[%s2040] sm:$0xff]
      %v2587 = vrot.slane %v2585, 1
      %v2588 = vrot.slane %v2585, 2
      %v2589 = vrot.slane %v2585, 3
      %v2590 = vrot.slane %v2585, 4
      %v2591 = vrot.slane %v2585, 5
      %v2592 = vrot.slane %v2585, 6
      %v2593 = vrot.slane %v2585, 7
      %v2602 = vadd.f32 %v2445, %v2585
      %v2603 = vadd.f32 %v2451, %v2587
      %v2604 = vadd.f32 %v2457, %v2588
      %v2605 = vadd.f32 %v2463, %v2589
      %v2606 = vadd.f32 %v2469, %v2590
      %v2607 = vadd.f32 %v2475, %v2591
      %v2608 = vadd.f32 %v2481, %v2592
      %v2609 = vadd.f32 %v2487, %v2593
      %v2610 = vlaneseq
      %v2611 = vshrl.u32 %v2610, 7
      %v2612 = vsub.s32 0, %v2611
      %v2613 = vrot.slane %v2602, %v2612
      %v2614 = vlaneseq
      %v2615 = vshrl.u32 %v2614, 7
      %v2616 = vsub.s32 0, %v2615
      %v2617 = vrot.slane %v2603, %v2616
      %v2618 = vlaneseq
      %v2619 = vshrl.u32 %v2618, 7
      %v2620 = vsub.s32 0, %v2619
      %v2621 = vrot.slane %v2604, %v2620
      %v2622 = vlaneseq
      %v2623 = vshrl.u32 %v2622, 7
      %v2624 = vsub.s32 0, %v2623
      %v2625 = vrot.slane %v2605, %v2624
      %v2626 = vlaneseq
      %v2627 = vshrl.u32 %v2626, 7
      %v2628 = vsub.s32 0, %v2627
      %v2629 = vrot.slane %v2606, %v2628
      %v2630 = vlaneseq
      %v2631 = vshrl.u32 %v2630, 7
      %v2632 = vsub.s32 0, %v2631
      %v2633 = vrot.slane %v2607, %v2632
      %v2634 = vlaneseq
      %v2635 = vshrl.u32 %v2634, 7
      %v2636 = vsub.s32 0, %v2635
      %v2637 = vrot.slane %v2608, %v2636
      %v2638 = vlaneseq
      %v2639 = vshrl.u32 %v2638, 7
      %v2640 = vsub.s32 0, %v2639
      %v2641 = vrot.slane %v2609, %v2640
      %v2642 = vsel %vm2141, %v2613, -1e+30
      %v2643 = vsel %vm2141, %v2617, -1e+30
      %v2644 = vsel %vm2141, %v2621, -1e+30
      %v2645 = vsel %vm2141, %v2625, -1e+30
      %v2646 = vsel %vm2141, %v2629, -1e+30
      %v2647 = vsel %vm2141, %v2633, -1e+30
      %v2648 = vsel %vm2141, %v2637, -1e+30
      %v2649 = vsel %vm2141, %v2641, -1e+30
      %2650 = vmax.xlane.f32.xlu0 %v2642
      %v2651 = vpop.xlane.xlu0 %2650
      %2652 = vmax.xlane.f32.xlu0 %v2643
      %v2653 = vpop.xlane.xlu0 %2652
      %2654 = vmax.xlane.f32.xlu0 %v2644
      %v2655 = vpop.xlane.xlu0 %2654
      %2656 = vmax.xlane.f32.xlu0 %v2645
      %v2657 = vpop.xlane.xlu0 %2656
      %2658 = vmax.xlane.f32.xlu0 %v2646
      %v2659 = vpop.xlane.xlu0 %2658
      %2660 = vmax.xlane.f32.xlu0 %v2647
      %v2661 = vpop.xlane.xlu0 %2660
      %2662 = vmax.xlane.f32.xlu0 %v2648
      %v2663 = vpop.xlane.xlu0 %2662
      %2664 = vmax.xlane.f32.xlu0 %v2649
      %v2665 = vpop.xlane.xlu0 %2664
      %v2666 = vadd.f32 %v2080, %v2651
      %v2667 = vadd.f32 %v2080, %v2653
      %v2668 = vadd.f32 %v2080, %v2655
      %v2669 = vadd.f32 %v2080, %v2657
      %v2670 = vadd.f32 %v2080, %v2659
      %v2671 = vadd.f32 %v2080, %v2661
      %v2672 = vadd.f32 %v2080, %v2663
      %v2673 = vadd.f32 %v2080, %v2665
      %v2674 = vrot.slane %v2666, 4
      %v2675 = vmax.f32 %v2666, %v2674
      %v2676 = vrot.slane %v2675, 2
      %v2677 = vmax.f32 %v2675, %v2676
      %v2678 = vrot.slane %v2677, 1
      %v2679 = vmax.f32 %v2677, %v2678
      %v2680 = vrot.slane %v2667, 4
      %v2681 = vmax.f32 %v2667, %v2680
      %v2682 = vrot.slane %v2681, 2
      %v2683 = vmax.f32 %v2681, %v2682
      %v2684 = vrot.slane %v2683, 1
      %v2685 = vmax.f32 %v2683, %v2684
      %v2686 = vrot.slane %v2668, 4
      %v2687 = vmax.f32 %v2668, %v2686
      %v2688 = vrot.slane %v2687, 2
      %v2689 = vmax.f32 %v2687, %v2688
      %v2690 = vrot.slane %v2689, 1
      %v2691 = vmax.f32 %v2689, %v2690
      %v2692 = vrot.slane %v2669, 4
      %v2693 = vmax.f32 %v2669, %v2692
      %v2694 = vrot.slane %v2693, 2
      %v2695 = vmax.f32 %v2693, %v2694
      %v2696 = vrot.slane %v2695, 1
      %v2697 = vmax.f32 %v2695, %v2696
      %v2698 = vrot.slane %v2670, 4
      %v2699 = vmax.f32 %v2670, %v2698
      %v2700 = vrot.slane %v2699, 2
      %v2701 = vmax.f32 %v2699, %v2700
      %v2702 = vrot.slane %v2701, 1
      %v2703 = vmax.f32 %v2701, %v2702
      %v2704 = vrot.slane %v2671, 4
      %v2705 = vmax.f32 %v2671, %v2704
      %v2706 = vrot.slane %v2705, 2
      %v2707 = vmax.f32 %v2705, %v2706
      %v2708 = vrot.slane %v2707, 1
      %v2709 = vmax.f32 %v2707, %v2708
      %v2710 = vrot.slane %v2672, 4
      %v2711 = vmax.f32 %v2672, %v2710
      %v2712 = vrot.slane %v2711, 2
      %v2713 = vmax.f32 %v2711, %v2712
      %v2714 = vrot.slane %v2713, 1
      %v2715 = vmax.f32 %v2713, %v2714
      %v2716 = vrot.slane %v2673, 4
      %v2717 = vmax.f32 %v2673, %v2716
      %v2718 = vrot.slane %v2717, 2
      %v2719 = vmax.f32 %v2717, %v2718
      %v2720 = vrot.slane %v2719, 1
      %v2721 = vmax.f32 %v2719, %v2720
      %vm2722 = vcmp.ge.f32.partialorder %v2666, %v2679
      %vm2723 = vcmp.ge.f32.partialorder %v2667, %v2685
      %vm2724 = vcmp.ge.f32.partialorder %v2668, %v2691
      %vm2725 = vcmp.ge.f32.partialorder %v2669, %v2697
      %vm2726 = vcmp.ge.f32.partialorder %v2670, %v2703
      %vm2727 = vcmp.ge.f32.partialorder %v2671, %v2709
      %vm2728 = vcmp.ge.f32.partialorder %v2672, %v2715
      %vm2729 = vcmp.ge.f32.partialorder %v2673, %v2721
      %v2730 = vsel %vm2722, %v2076, 128
      %v2731 = vsel %vm2723, %v2076, 128
      %v2732 = vsel %vm2724, %v2076, 128
      %v2733 = vsel %vm2725, %v2076, 128
      %v2734 = vsel %vm2726, %v2076, 128
      %v2735 = vsel %vm2727, %v2076, 128
      %v2736 = vsel %vm2728, %v2076, 128
      %v2737 = vsel %vm2729, %v2076, 128
      %v2738 = vrot.slane %v2730, 4
      %vm2739 = vcmp.lt.s32.totalorder %v2730, %v2738
      %v2740 = vsel %vm2739, %v2730, %v2738
      %v2741 = vrot.slane %v2740, 2
      %vm2742 = vcmp.lt.s32.totalorder %v2740, %v2741
      %v2743 = vsel %vm2742, %v2740, %v2741
      %v2744 = vrot.slane %v2743, 1
      %vm2745 = vcmp.lt.s32.totalorder %v2743, %v2744
      %v2746 = vsel %vm2745, %v2743, %v2744
      %v2747 = vrot.slane %v2731, 4
      %vm2748 = vcmp.lt.s32.totalorder %v2731, %v2747
      %v2749 = vsel %vm2748, %v2731, %v2747
      %v2750 = vrot.slane %v2749, 2
      %vm2751 = vcmp.lt.s32.totalorder %v2749, %v2750
      %v2752 = vsel %vm2751, %v2749, %v2750
      %v2753 = vrot.slane %v2752, 1
      %vm2754 = vcmp.lt.s32.totalorder %v2752, %v2753
      %v2755 = vsel %vm2754, %v2752, %v2753
      %v2756 = vrot.slane %v2732, 4
      %vm2757 = vcmp.lt.s32.totalorder %v2732, %v2756
      %v2758 = vsel %vm2757, %v2732, %v2756
      %v2759 = vrot.slane %v2758, 2
      %vm2760 = vcmp.lt.s32.totalorder %v2758, %v2759
      %v2761 = vsel %vm2760, %v2758, %v2759
      %v2762 = vrot.slane %v2761, 1
      %vm2763 = vcmp.lt.s32.totalorder %v2761, %v2762
      %v2764 = vsel %vm2763, %v2761, %v2762
      %v2765 = vrot.slane %v2733, 4
      %vm2766 = vcmp.lt.s32.totalorder %v2733, %v2765
      %v2767 = vsel %vm2766, %v2733, %v2765
      %v2768 = vrot.slane %v2767, 2
      %vm2769 = vcmp.lt.s32.totalorder %v2767, %v2768
      %v2770 = vsel %vm2769, %v2767, %v2768
      %v2771 = vrot.slane %v2770, 1
      %vm2772 = vcmp.lt.s32.totalorder %v2770, %v2771
      %v2773 = vsel %vm2772, %v2770, %v2771
      %v2774 = vrot.slane %v2734, 4
      %vm2775 = vcmp.lt.s32.totalorder %v2734, %v2774
      %v2776 = vsel %vm2775, %v2734, %v2774
      %v2777 = vrot.slane %v2776, 2
      %vm2778 = vcmp.lt.s32.totalorder %v2776, %v2777
      %v2779 = vsel %vm2778, %v2776, %v2777
      %v2780 = vrot.slane %v2779, 1
      %vm2781 = vcmp.lt.s32.totalorder %v2779, %v2780
      %v2782 = vsel %vm2781, %v2779, %v2780
      %v2783 = vrot.slane %v2735, 4
      %vm2784 = vcmp.lt.s32.totalorder %v2735, %v2783
      %v2785 = vsel %vm2784, %v2735, %v2783
      %v2786 = vrot.slane %v2785, 2
      %vm2787 = vcmp.lt.s32.totalorder %v2785, %v2786
      %v2788 = vsel %vm2787, %v2785, %v2786
      %v2789 = vrot.slane %v2788, 1
      %vm2790 = vcmp.lt.s32.totalorder %v2788, %v2789
      %v2791 = vsel %vm2790, %v2788, %v2789
      %v2792 = vrot.slane %v2736, 4
      %vm2793 = vcmp.lt.s32.totalorder %v2736, %v2792
      %v2794 = vsel %vm2793, %v2736, %v2792
      %v2795 = vrot.slane %v2794, 2
      %vm2796 = vcmp.lt.s32.totalorder %v2794, %v2795
      %v2797 = vsel %vm2796, %v2794, %v2795
      %v2798 = vrot.slane %v2797, 1
      %vm2799 = vcmp.lt.s32.totalorder %v2797, %v2798
      %v2800 = vsel %vm2799, %v2797, %v2798
      %v2801 = vrot.slane %v2737, 4
      %vm2802 = vcmp.lt.s32.totalorder %v2737, %v2801
      %v2803 = vsel %vm2802, %v2737, %v2801
      %v2804 = vrot.slane %v2803, 2
      %vm2805 = vcmp.lt.s32.totalorder %v2803, %v2804
      %v2806 = vsel %vm2805, %v2803, %v2804
      %v2807 = vrot.slane %v2806, 1
      %vm2808 = vcmp.lt.s32.totalorder %v2806, %v2807
      %v2809 = vsel %vm2808, %v2806, %v2807
      %v2810 = vsel %vm2101, %v2755, %v2746
      %v2811 = vsel %vm2102, %v2764, %v2810
      %v2812 = vsel %vm2104, %v2773, %v2811
      %v2813 = vsel %vm2106, %v2782, %v2812
      %v2814 = vsel %vm2108, %v2791, %v2813
      %v2815 = vsel %vm2110, %v2800, %v2814
      %v2816 = vsel %vm2112, %v2809, %v2815
      %s2817 = scalar_lea.vmem [#allocation5], 24
      %2818 = vst [vmem:[%s2817] sm:$0xff] %v2816
      %v2819 = vld [vmem:[%s2046] sm:$0xff]
      %v2821 = vrot.slane %v2819, 1
      %v2822 = vrot.slane %v2819, 2
      %v2823 = vrot.slane %v2819, 3
      %v2824 = vrot.slane %v2819, 4
      %v2825 = vrot.slane %v2819, 5
      %v2826 = vrot.slane %v2819, 6
      %v2827 = vrot.slane %v2819, 7
      %v2836 = vadd.f32 %v2679, %v2819
      %v2837 = vadd.f32 %v2685, %v2821
      %v2838 = vadd.f32 %v2691, %v2822
      %v2839 = vadd.f32 %v2697, %v2823
      %v2840 = vadd.f32 %v2703, %v2824
      %v2841 = vadd.f32 %v2709, %v2825
      %v2842 = vadd.f32 %v2715, %v2826
      %v2843 = vadd.f32 %v2721, %v2827
      %v2844 = vlaneseq
      %v2845 = vshrl.u32 %v2844, 7
      %v2846 = vsub.s32 0, %v2845
      %v2847 = vrot.slane %v2836, %v2846
      %v2848 = vlaneseq
      %v2849 = vshrl.u32 %v2848, 7
      %v2850 = vsub.s32 0, %v2849
      %v2851 = vrot.slane %v2837, %v2850
      %v2852 = vlaneseq
      %v2853 = vshrl.u32 %v2852, 7
      %v2854 = vsub.s32 0, %v2853
      %v2855 = vrot.slane %v2838, %v2854
      %v2856 = vlaneseq
      %v2857 = vshrl.u32 %v2856, 7
      %v2858 = vsub.s32 0, %v2857
      %v2859 = vrot.slane %v2839, %v2858
      %v2860 = vlaneseq
      %v2861 = vshrl.u32 %v2860, 7
      %v2862 = vsub.s32 0, %v2861
      %v2863 = vrot.slane %v2840, %v2862
      %v2864 = vlaneseq
      %v2865 = vshrl.u32 %v2864, 7
      %v2866 = vsub.s32 0, %v2865
      %v2867 = vrot.slane %v2841, %v2866
      %v2868 = vlaneseq
      %v2869 = vshrl.u32 %v2868, 7
      %v2870 = vsub.s32 0, %v2869
      %v2871 = vrot.slane %v2842, %v2870
      %v2872 = vlaneseq
      %v2873 = vshrl.u32 %v2872, 7
      %v2874 = vsub.s32 0, %v2873
      %v2875 = vrot.slane %v2843, %v2874
      %v2876 = vsel %vm2141, %v2847, -1e+30
      %v2877 = vsel %vm2141, %v2851, -1e+30
      %v2878 = vsel %vm2141, %v2855, -1e+30
      %v2879 = vsel %vm2141, %v2859, -1e+30
      %v2880 = vsel %vm2141, %v2863, -1e+30
      %v2881 = vsel %vm2141, %v2867, -1e+30
      %v2882 = vsel %vm2141, %v2871, -1e+30
      %v2883 = vsel %vm2141, %v2875, -1e+30
      %2884 = vmax.xlane.f32.xlu0 %v2876
      %v2885 = vpop.xlane.xlu0 %2884
      %2886 = vmax.xlane.f32.xlu0 %v2877
      %v2887 = vpop.xlane.xlu0 %2886
      %2888 = vmax.xlane.f32.xlu0 %v2878
      %v2889 = vpop.xlane.xlu0 %2888
      %2890 = vmax.xlane.f32.xlu0 %v2879
      %v2891 = vpop.xlane.xlu0 %2890
      %2892 = vmax.xlane.f32.xlu0 %v2880
      %v2893 = vpop.xlane.xlu0 %2892
      %2894 = vmax.xlane.f32.xlu0 %v2881
      %v2895 = vpop.xlane.xlu0 %2894
      %2896 = vmax.xlane.f32.xlu0 %v2882
      %v2897 = vpop.xlane.xlu0 %2896
      %2898 = vmax.xlane.f32.xlu0 %v2883
      %v2899 = vpop.xlane.xlu0 %2898
      %v2900 = vadd.f32 %v2080, %v2885
      %v2901 = vadd.f32 %v2080, %v2887
      %v2902 = vadd.f32 %v2080, %v2889
      %v2903 = vadd.f32 %v2080, %v2891
      %v2904 = vadd.f32 %v2080, %v2893
      %v2905 = vadd.f32 %v2080, %v2895
      %v2906 = vadd.f32 %v2080, %v2897
      %v2907 = vadd.f32 %v2080, %v2899
      %v2908 = vrot.slane %v2900, 4
      %v2909 = vmax.f32 %v2900, %v2908
      %v2910 = vrot.slane %v2909, 2
      %v2911 = vmax.f32 %v2909, %v2910
      %v2912 = vrot.slane %v2911, 1
      %v2913 = vmax.f32 %v2911, %v2912
      %v2914 = vrot.slane %v2901, 4
      %v2915 = vmax.f32 %v2901, %v2914
      %v2916 = vrot.slane %v2915, 2
      %v2917 = vmax.f32 %v2915, %v2916
      %v2918 = vrot.slane %v2917, 1
      %v2919 = vmax.f32 %v2917, %v2918
      %v2920 = vrot.slane %v2902, 4
      %v2921 = vmax.f32 %v2902, %v2920
      %v2922 = vrot.slane %v2921, 2
      %v2923 = vmax.f32 %v2921, %v2922
      %v2924 = vrot.slane %v2923, 1
      %v2925 = vmax.f32 %v2923, %v2924
      %v2926 = vrot.slane %v2903, 4
      %v2927 = vmax.f32 %v2903, %v2926
      %v2928 = vrot.slane %v2927, 2
      %v2929 = vmax.f32 %v2927, %v2928
      %v2930 = vrot.slane %v2929, 1
      %v2931 = vmax.f32 %v2929, %v2930
      %v2932 = vrot.slane %v2904, 4
      %v2933 = vmax.f32 %v2904, %v2932
      %v2934 = vrot.slane %v2933, 2
      %v2935 = vmax.f32 %v2933, %v2934
      %v2936 = vrot.slane %v2935, 1
      %v2937 = vmax.f32 %v2935, %v2936
      %v2938 = vrot.slane %v2905, 4
      %v2939 = vmax.f32 %v2905, %v2938
      %v2940 = vrot.slane %v2939, 2
      %v2941 = vmax.f32 %v2939, %v2940
      %v2942 = vrot.slane %v2941, 1
      %v2943 = vmax.f32 %v2941, %v2942
      %v2944 = vrot.slane %v2906, 4
      %v2945 = vmax.f32 %v2906, %v2944
      %v2946 = vrot.slane %v2945, 2
      %v2947 = vmax.f32 %v2945, %v2946
      %v2948 = vrot.slane %v2947, 1
      %v2949 = vmax.f32 %v2947, %v2948
      %v2950 = vrot.slane %v2907, 4
      %v2951 = vmax.f32 %v2907, %v2950
      %v2952 = vrot.slane %v2951, 2
      %v2953 = vmax.f32 %v2951, %v2952
      %v2954 = vrot.slane %v2953, 1
      %v2955 = vmax.f32 %v2953, %v2954
      %vm2956 = vcmp.ge.f32.partialorder %v2900, %v2913
      %vm2957 = vcmp.ge.f32.partialorder %v2901, %v2919
      %vm2958 = vcmp.ge.f32.partialorder %v2902, %v2925
      %vm2959 = vcmp.ge.f32.partialorder %v2903, %v2931
      %vm2960 = vcmp.ge.f32.partialorder %v2904, %v2937
      %vm2961 = vcmp.ge.f32.partialorder %v2905, %v2943
      %vm2962 = vcmp.ge.f32.partialorder %v2906, %v2949
      %vm2963 = vcmp.ge.f32.partialorder %v2907, %v2955
      %v2964 = vsel %vm2956, %v2076, 128
      %v2965 = vsel %vm2957, %v2076, 128
      %v2966 = vsel %vm2958, %v2076, 128
      %v2967 = vsel %vm2959, %v2076, 128
      %v2968 = vsel %vm2960, %v2076, 128
      %v2969 = vsel %vm2961, %v2076, 128
      %v2970 = vsel %vm2962, %v2076, 128
      %v2971 = vsel %vm2963, %v2076, 128
      %v2972 = vrot.slane %v2964, 4
      %vm2973 = vcmp.lt.s32.totalorder %v2964, %v2972
      %v2974 = vsel %vm2973, %v2964, %v2972
      %v2975 = vrot.slane %v2974, 2
      %vm2976 = vcmp.lt.s32.totalorder %v2974, %v2975
      %v2977 = vsel %vm2976, %v2974, %v2975
      %v2978 = vrot.slane %v2977, 1
      %vm2979 = vcmp.lt.s32.totalorder %v2977, %v2978
      %v2980 = vsel %vm2979, %v2977, %v2978
      %v2981 = vrot.slane %v2965, 4
      %vm2982 = vcmp.lt.s32.totalorder %v2965, %v2981
      %v2983 = vsel %vm2982, %v2965, %v2981
      %v2984 = vrot.slane %v2983, 2
      %vm2985 = vcmp.lt.s32.totalorder %v2983, %v2984
      %v2986 = vsel %vm2985, %v2983, %v2984
      %v2987 = vrot.slane %v2986, 1
      %vm2988 = vcmp.lt.s32.totalorder %v2986, %v2987
      %v2989 = vsel %vm2988, %v2986, %v2987
      %v2990 = vrot.slane %v2966, 4
      %vm2991 = vcmp.lt.s32.totalorder %v2966, %v2990
      %v2992 = vsel %vm2991, %v2966, %v2990
      %v2993 = vrot.slane %v2992, 2
      %vm2994 = vcmp.lt.s32.totalorder %v2992, %v2993
      %v2995 = vsel %vm2994, %v2992, %v2993
      %v2996 = vrot.slane %v2995, 1
      %vm2997 = vcmp.lt.s32.totalorder %v2995, %v2996
      %v2998 = vsel %vm2997, %v2995, %v2996
      %v2999 = vrot.slane %v2967, 4
      %vm3000 = vcmp.lt.s32.totalorder %v2967, %v2999
      %v3001 = vsel %vm3000, %v2967, %v2999
      %v3002 = vrot.slane %v3001, 2
      %vm3003 = vcmp.lt.s32.totalorder %v3001, %v3002
      %v3004 = vsel %vm3003, %v3001, %v3002
      %v3005 = vrot.slane %v3004, 1
      %vm3006 = vcmp.lt.s32.totalorder %v3004, %v3005
      %v3007 = vsel %vm3006, %v3004, %v3005
      %v3008 = vrot.slane %v2968, 4
      %vm3009 = vcmp.lt.s32.totalorder %v2968, %v3008
      %v3010 = vsel %vm3009, %v2968, %v3008
      %v3011 = vrot.slane %v3010, 2
      %vm3012 = vcmp.lt.s32.totalorder %v3010, %v3011
      %v3013 = vsel %vm3012, %v3010, %v3011
      %v3014 = vrot.slane %v3013, 1
      %vm3015 = vcmp.lt.s32.totalorder %v3013, %v3014
      %v3016 = vsel %vm3015, %v3013, %v3014
      %v3017 = vrot.slane %v2969, 4
      %vm3018 = vcmp.lt.s32.totalorder %v2969, %v3017
      %v3019 = vsel %vm3018, %v2969, %v3017
      %v3020 = vrot.slane %v3019, 2
      %vm3021 = vcmp.lt.s32.totalorder %v3019, %v3020
      %v3022 = vsel %vm3021, %v3019, %v3020
      %v3023 = vrot.slane %v3022, 1
      %vm3024 = vcmp.lt.s32.totalorder %v3022, %v3023
      %v3025 = vsel %vm3024, %v3022, %v3023
      %v3026 = vrot.slane %v2970, 4
      %vm3027 = vcmp.lt.s32.totalorder %v2970, %v3026
      %v3028 = vsel %vm3027, %v2970, %v3026
      %v3029 = vrot.slane %v3028, 2
      %vm3030 = vcmp.lt.s32.totalorder %v3028, %v3029
      %v3031 = vsel %vm3030, %v3028, %v3029
      %v3032 = vrot.slane %v3031, 1
      %vm3033 = vcmp.lt.s32.totalorder %v3031, %v3032
      %v3034 = vsel %vm3033, %v3031, %v3032
      %v3035 = vrot.slane %v2971, 4
      %vm3036 = vcmp.lt.s32.totalorder %v2971, %v3035
      %v3037 = vsel %vm3036, %v2971, %v3035
      %v3038 = vrot.slane %v3037, 2
      %vm3039 = vcmp.lt.s32.totalorder %v3037, %v3038
      %v3040 = vsel %vm3039, %v3037, %v3038
      %v3041 = vrot.slane %v3040, 1
      %vm3042 = vcmp.lt.s32.totalorder %v3040, %v3041
      %v3043 = vsel %vm3042, %v3040, %v3041
      %v3044 = vsel %vm2101, %v2989, %v2980
      %v3045 = vsel %vm2102, %v2998, %v3044
      %v3046 = vsel %vm2104, %v3007, %v3045
      %v3047 = vsel %vm2106, %v3016, %v3046
      %v3048 = vsel %vm2108, %v3025, %v3047
      %v3049 = vsel %vm2110, %v3034, %v3048
      %v3050 = vsel %vm2112, %v3043, %v3049
      %s3051 = scalar_lea.vmem [#allocation5], 32
      %3052 = vst [vmem:[%s3051] sm:$0xff] %v3050
      %v3053 = vld [vmem:[%s2052] sm:$0xff]
      %v3055 = vrot.slane %v3053, 1
      %v3056 = vrot.slane %v3053, 2
      %v3057 = vrot.slane %v3053, 3
      %v3058 = vrot.slane %v3053, 4
      %v3059 = vrot.slane %v3053, 5
      %v3060 = vrot.slane %v3053, 6
      %v3061 = vrot.slane %v3053, 7
      %v3070 = vadd.f32 %v2913, %v3053
      %v3071 = vadd.f32 %v2919, %v3055
      %v3072 = vadd.f32 %v2925, %v3056
      %v3073 = vadd.f32 %v2931, %v3057
      %v3074 = vadd.f32 %v2937, %v3058
      %v3075 = vadd.f32 %v2943, %v3059
      %v3076 = vadd.f32 %v2949, %v3060
      %v3077 = vadd.f32 %v2955, %v3061
      %v3078 = vlaneseq
      %v3079 = vshrl.u32 %v3078, 7
      %v3080 = vsub.s32 0, %v3079
      %v3081 = vrot.slane %v3070, %v3080
      %v3082 = vlaneseq
      %v3083 = vshrl.u32 %v3082, 7
      %v3084 = vsub.s32 0, %v3083
      %v3085 = vrot.slane %v3071, %v3084
      %v3086 = vlaneseq
      %v3087 = vshrl.u32 %v3086, 7
      %v3088 = vsub.s32 0, %v3087
      %v3089 = vrot.slane %v3072, %v3088
      %v3090 = vlaneseq
      %v3091 = vshrl.u32 %v3090, 7
      %v3092 = vsub.s32 0, %v3091
      %v3093 = vrot.slane %v3073, %v3092
      %v3094 = vlaneseq
      %v3095 = vshrl.u32 %v3094, 7
      %v3096 = vsub.s32 0, %v3095
      %v3097 = vrot.slane %v3074, %v3096
      %v3098 = vlaneseq
      %v3099 = vshrl.u32 %v3098, 7
      %v3100 = vsub.s32 0, %v3099
      %v3101 = vrot.slane %v3075, %v3100
      %v3102 = vlaneseq
      %v3103 = vshrl.u32 %v3102, 7
      %v3104 = vsub.s32 0, %v3103
      %v3105 = vrot.slane %v3076, %v3104
      %v3106 = vlaneseq
      %v3107 = vshrl.u32 %v3106, 7
      %v3108 = vsub.s32 0, %v3107
      %v3109 = vrot.slane %v3077, %v3108
      %v3110 = vsel %vm2141, %v3081, -1e+30
      %v3111 = vsel %vm2141, %v3085, -1e+30
      %v3112 = vsel %vm2141, %v3089, -1e+30
      %v3113 = vsel %vm2141, %v3093, -1e+30
      %v3114 = vsel %vm2141, %v3097, -1e+30
      %v3115 = vsel %vm2141, %v3101, -1e+30
      %v3116 = vsel %vm2141, %v3105, -1e+30
      %v3117 = vsel %vm2141, %v3109, -1e+30
      %3118 = vmax.xlane.f32.xlu0 %v3110
      %v3119 = vpop.xlane.xlu0 %3118
      %3120 = vmax.xlane.f32.xlu0 %v3111
      %v3121 = vpop.xlane.xlu0 %3120
      %3122 = vmax.xlane.f32.xlu0 %v3112
      %v3123 = vpop.xlane.xlu0 %3122
      %3124 = vmax.xlane.f32.xlu0 %v3113
      %v3125 = vpop.xlane.xlu0 %3124
      %3126 = vmax.xlane.f32.xlu0 %v3114
      %v3127 = vpop.xlane.xlu0 %3126
      %3128 = vmax.xlane.f32.xlu0 %v3115
      %v3129 = vpop.xlane.xlu0 %3128
      %3130 = vmax.xlane.f32.xlu0 %v3116
      %v3131 = vpop.xlane.xlu0 %3130
      %3132 = vmax.xlane.f32.xlu0 %v3117
      %v3133 = vpop.xlane.xlu0 %3132
      %v3134 = vadd.f32 %v2080, %v3119
      %v3135 = vadd.f32 %v2080, %v3121
      %v3136 = vadd.f32 %v2080, %v3123
      %v3137 = vadd.f32 %v2080, %v3125
      %v3138 = vadd.f32 %v2080, %v3127
      %v3139 = vadd.f32 %v2080, %v3129
      %v3140 = vadd.f32 %v2080, %v3131
      %v3141 = vadd.f32 %v2080, %v3133
      %v3142 = vrot.slane %v3134, 4
      %v3143 = vmax.f32 %v3134, %v3142
      %v3144 = vrot.slane %v3143, 2
      %v3145 = vmax.f32 %v3143, %v3144
      %v3146 = vrot.slane %v3145, 1
      %v3147 = vmax.f32 %v3145, %v3146
      %v3148 = vrot.slane %v3135, 4
      %v3149 = vmax.f32 %v3135, %v3148
      %v3150 = vrot.slane %v3149, 2
      %v3151 = vmax.f32 %v3149, %v3150
      %v3152 = vrot.slane %v3151, 1
      %v3153 = vmax.f32 %v3151, %v3152
      %v3154 = vrot.slane %v3136, 4
      %v3155 = vmax.f32 %v3136, %v3154
      %v3156 = vrot.slane %v3155, 2
      %v3157 = vmax.f32 %v3155, %v3156
      %v3158 = vrot.slane %v3157, 1
      %v3159 = vmax.f32 %v3157, %v3158
      %v3160 = vrot.slane %v3137, 4
      %v3161 = vmax.f32 %v3137, %v3160
      %v3162 = vrot.slane %v3161, 2
      %v3163 = vmax.f32 %v3161, %v3162
      %v3164 = vrot.slane %v3163, 1
      %v3165 = vmax.f32 %v3163, %v3164
      %v3166 = vrot.slane %v3138, 4
      %v3167 = vmax.f32 %v3138, %v3166
      %v3168 = vrot.slane %v3167, 2
      %v3169 = vmax.f32 %v3167, %v3168
      %v3170 = vrot.slane %v3169, 1
      %v3171 = vmax.f32 %v3169, %v3170
      %v3172 = vrot.slane %v3139, 4
      %v3173 = vmax.f32 %v3139, %v3172
      %v3174 = vrot.slane %v3173, 2
      %v3175 = vmax.f32 %v3173, %v3174
      %v3176 = vrot.slane %v3175, 1
      %v3177 = vmax.f32 %v3175, %v3176
      %v3178 = vrot.slane %v3140, 4
      %v3179 = vmax.f32 %v3140, %v3178
      %v3180 = vrot.slane %v3179, 2
      %v3181 = vmax.f32 %v3179, %v3180
      %v3182 = vrot.slane %v3181, 1
      %v3183 = vmax.f32 %v3181, %v3182
      %v3184 = vrot.slane %v3141, 4
      %v3185 = vmax.f32 %v3141, %v3184
      %v3186 = vrot.slane %v3185, 2
      %v3187 = vmax.f32 %v3185, %v3186
      %v3188 = vrot.slane %v3187, 1
      %v3189 = vmax.f32 %v3187, %v3188
      %vm3190 = vcmp.ge.f32.partialorder %v3134, %v3147
      %vm3191 = vcmp.ge.f32.partialorder %v3135, %v3153
      %vm3192 = vcmp.ge.f32.partialorder %v3136, %v3159
      %vm3193 = vcmp.ge.f32.partialorder %v3137, %v3165
      %vm3194 = vcmp.ge.f32.partialorder %v3138, %v3171
      %vm3195 = vcmp.ge.f32.partialorder %v3139, %v3177
      %vm3196 = vcmp.ge.f32.partialorder %v3140, %v3183
      %vm3197 = vcmp.ge.f32.partialorder %v3141, %v3189
      %v3198 = vsel %vm3190, %v2076, 128
      %v3199 = vsel %vm3191, %v2076, 128
      %v3200 = vsel %vm3192, %v2076, 128
      %v3201 = vsel %vm3193, %v2076, 128
      %v3202 = vsel %vm3194, %v2076, 128
      %v3203 = vsel %vm3195, %v2076, 128
      %v3204 = vsel %vm3196, %v2076, 128
      %v3205 = vsel %vm3197, %v2076, 128
      %v3206 = vrot.slane %v3198, 4
      %vm3207 = vcmp.lt.s32.totalorder %v3198, %v3206
      %v3208 = vsel %vm3207, %v3198, %v3206
      %v3209 = vrot.slane %v3208, 2
      %vm3210 = vcmp.lt.s32.totalorder %v3208, %v3209
      %v3211 = vsel %vm3210, %v3208, %v3209
      %v3212 = vrot.slane %v3211, 1
      %vm3213 = vcmp.lt.s32.totalorder %v3211, %v3212
      %v3214 = vsel %vm3213, %v3211, %v3212
      %v3215 = vrot.slane %v3199, 4
      %vm3216 = vcmp.lt.s32.totalorder %v3199, %v3215
      %v3217 = vsel %vm3216, %v3199, %v3215
      %v3218 = vrot.slane %v3217, 2
      %vm3219 = vcmp.lt.s32.totalorder %v3217, %v3218
      %v3220 = vsel %vm3219, %v3217, %v3218
      %v3221 = vrot.slane %v3220, 1
      %vm3222 = vcmp.lt.s32.totalorder %v3220, %v3221
      %v3223 = vsel %vm3222, %v3220, %v3221
      %v3224 = vrot.slane %v3200, 4
      %vm3225 = vcmp.lt.s32.totalorder %v3200, %v3224
      %v3226 = vsel %vm3225, %v3200, %v3224
      %v3227 = vrot.slane %v3226, 2
      %vm3228 = vcmp.lt.s32.totalorder %v3226, %v3227
      %v3229 = vsel %vm3228, %v3226, %v3227
      %v3230 = vrot.slane %v3229, 1
      %vm3231 = vcmp.lt.s32.totalorder %v3229, %v3230
      %v3232 = vsel %vm3231, %v3229, %v3230
      %v3233 = vrot.slane %v3201, 4
      %vm3234 = vcmp.lt.s32.totalorder %v3201, %v3233
      %v3235 = vsel %vm3234, %v3201, %v3233
      %v3236 = vrot.slane %v3235, 2
      %vm3237 = vcmp.lt.s32.totalorder %v3235, %v3236
      %v3238 = vsel %vm3237, %v3235, %v3236
      %v3239 = vrot.slane %v3238, 1
      %vm3240 = vcmp.lt.s32.totalorder %v3238, %v3239
      %v3241 = vsel %vm3240, %v3238, %v3239
      %v3242 = vrot.slane %v3202, 4
      %vm3243 = vcmp.lt.s32.totalorder %v3202, %v3242
      %v3244 = vsel %vm3243, %v3202, %v3242
      %v3245 = vrot.slane %v3244, 2
      %vm3246 = vcmp.lt.s32.totalorder %v3244, %v3245
      %v3247 = vsel %vm3246, %v3244, %v3245
      %v3248 = vrot.slane %v3247, 1
      %vm3249 = vcmp.lt.s32.totalorder %v3247, %v3248
      %v3250 = vsel %vm3249, %v3247, %v3248
      %v3251 = vrot.slane %v3203, 4
      %vm3252 = vcmp.lt.s32.totalorder %v3203, %v3251
      %v3253 = vsel %vm3252, %v3203, %v3251
      %v3254 = vrot.slane %v3253, 2
      %vm3255 = vcmp.lt.s32.totalorder %v3253, %v3254
      %v3256 = vsel %vm3255, %v3253, %v3254
      %v3257 = vrot.slane %v3256, 1
      %vm3258 = vcmp.lt.s32.totalorder %v3256, %v3257
      %v3259 = vsel %vm3258, %v3256, %v3257
      %v3260 = vrot.slane %v3204, 4
      %vm3261 = vcmp.lt.s32.totalorder %v3204, %v3260
      %v3262 = vsel %vm3261, %v3204, %v3260
      %v3263 = vrot.slane %v3262, 2
      %vm3264 = vcmp.lt.s32.totalorder %v3262, %v3263
      %v3265 = vsel %vm3264, %v3262, %v3263
      %v3266 = vrot.slane %v3265, 1
      %vm3267 = vcmp.lt.s32.totalorder %v3265, %v3266
      %v3268 = vsel %vm3267, %v3265, %v3266
      %v3269 = vrot.slane %v3205, 4
      %vm3270 = vcmp.lt.s32.totalorder %v3205, %v3269
      %v3271 = vsel %vm3270, %v3205, %v3269
      %v3272 = vrot.slane %v3271, 2
      %vm3273 = vcmp.lt.s32.totalorder %v3271, %v3272
      %v3274 = vsel %vm3273, %v3271, %v3272
      %v3275 = vrot.slane %v3274, 1
      %vm3276 = vcmp.lt.s32.totalorder %v3274, %v3275
      %v3277 = vsel %vm3276, %v3274, %v3275
      %v3278 = vsel %vm2101, %v3223, %v3214
      %v3279 = vsel %vm2102, %v3232, %v3278
      %v3280 = vsel %vm2104, %v3241, %v3279
      %v3281 = vsel %vm2106, %v3250, %v3280
      %v3282 = vsel %vm2108, %v3259, %v3281
      %v3283 = vsel %vm2110, %v3268, %v3282
      %v3284 = vsel %vm2112, %v3277, %v3283
      %s3285 = scalar_lea.vmem [#allocation5], 40
      %3286 = vst [vmem:[%s3285] sm:$0xff] %v3284
      %v3287 = vld [vmem:[%s2058] sm:$0xff]
      %v3289 = vrot.slane %v3287, 1
      %v3290 = vrot.slane %v3287, 2
      %v3291 = vrot.slane %v3287, 3
      %v3292 = vrot.slane %v3287, 4
      %v3293 = vrot.slane %v3287, 5
      %v3294 = vrot.slane %v3287, 6
      %v3295 = vrot.slane %v3287, 7
      %v3304 = vadd.f32 %v3147, %v3287
      %v3305 = vadd.f32 %v3153, %v3289
      %v3306 = vadd.f32 %v3159, %v3290
      %v3307 = vadd.f32 %v3165, %v3291
      %v3308 = vadd.f32 %v3171, %v3292
      %v3309 = vadd.f32 %v3177, %v3293
      %v3310 = vadd.f32 %v3183, %v3294
      %v3311 = vadd.f32 %v3189, %v3295
      %v3312 = vlaneseq
      %v3313 = vshrl.u32 %v3312, 7
      %v3314 = vsub.s32 0, %v3313
      %v3315 = vrot.slane %v3304, %v3314
      %v3316 = vlaneseq
      %v3317 = vshrl.u32 %v3316, 7
      %v3318 = vsub.s32 0, %v3317
      %v3319 = vrot.slane %v3305, %v3318
      %v3320 = vlaneseq
      %v3321 = vshrl.u32 %v3320, 7
      %v3322 = vsub.s32 0, %v3321
      %v3323 = vrot.slane %v3306, %v3322
      %v3324 = vlaneseq
      %v3325 = vshrl.u32 %v3324, 7
      %v3326 = vsub.s32 0, %v3325
      %v3327 = vrot.slane %v3307, %v3326
      %v3328 = vlaneseq
      %v3329 = vshrl.u32 %v3328, 7
      %v3330 = vsub.s32 0, %v3329
      %v3331 = vrot.slane %v3308, %v3330
      %v3332 = vlaneseq
      %v3333 = vshrl.u32 %v3332, 7
      %v3334 = vsub.s32 0, %v3333
      %v3335 = vrot.slane %v3309, %v3334
      %v3336 = vlaneseq
      %v3337 = vshrl.u32 %v3336, 7
      %v3338 = vsub.s32 0, %v3337
      %v3339 = vrot.slane %v3310, %v3338
      %v3340 = vlaneseq
      %v3341 = vshrl.u32 %v3340, 7
      %v3342 = vsub.s32 0, %v3341
      %v3343 = vrot.slane %v3311, %v3342
      %v3344 = vsel %vm2141, %v3315, -1e+30
      %v3345 = vsel %vm2141, %v3319, -1e+30
      %v3346 = vsel %vm2141, %v3323, -1e+30
      %v3347 = vsel %vm2141, %v3327, -1e+30
      %v3348 = vsel %vm2141, %v3331, -1e+30
      %v3349 = vsel %vm2141, %v3335, -1e+30
      %v3350 = vsel %vm2141, %v3339, -1e+30
      %v3351 = vsel %vm2141, %v3343, -1e+30
      %3352 = vmax.xlane.f32.xlu0 %v3344
      %v3353 = vpop.xlane.xlu0 %3352
      %3354 = vmax.xlane.f32.xlu0 %v3345
      %v3355 = vpop.xlane.xlu0 %3354
      %3356 = vmax.xlane.f32.xlu0 %v3346
      %v3357 = vpop.xlane.xlu0 %3356
      %3358 = vmax.xlane.f32.xlu0 %v3347
      %v3359 = vpop.xlane.xlu0 %3358
      %3360 = vmax.xlane.f32.xlu0 %v3348
      %v3361 = vpop.xlane.xlu0 %3360
      %3362 = vmax.xlane.f32.xlu0 %v3349
      %v3363 = vpop.xlane.xlu0 %3362
      %3364 = vmax.xlane.f32.xlu0 %v3350
      %v3365 = vpop.xlane.xlu0 %3364
      %3366 = vmax.xlane.f32.xlu0 %v3351
      %v3367 = vpop.xlane.xlu0 %3366
      %v3368 = vadd.f32 %v2080, %v3353
      %v3369 = vadd.f32 %v2080, %v3355
      %v3370 = vadd.f32 %v2080, %v3357
      %v3371 = vadd.f32 %v2080, %v3359
      %v3372 = vadd.f32 %v2080, %v3361
      %v3373 = vadd.f32 %v2080, %v3363
      %v3374 = vadd.f32 %v2080, %v3365
      %v3375 = vadd.f32 %v2080, %v3367
      %v3376 = vrot.slane %v3368, 4
      %v3377 = vmax.f32 %v3368, %v3376
      %v3378 = vrot.slane %v3377, 2
      %v3379 = vmax.f32 %v3377, %v3378
      %v3380 = vrot.slane %v3379, 1
      %v3381 = vmax.f32 %v3379, %v3380
      %v3382 = vrot.slane %v3369, 4
      %v3383 = vmax.f32 %v3369, %v3382
      %v3384 = vrot.slane %v3383, 2
      %v3385 = vmax.f32 %v3383, %v3384
      %v3386 = vrot.slane %v3385, 1
      %v3387 = vmax.f32 %v3385, %v3386
      %v3388 = vrot.slane %v3370, 4
      %v3389 = vmax.f32 %v3370, %v3388
      %v3390 = vrot.slane %v3389, 2
      %v3391 = vmax.f32 %v3389, %v3390
      %v3392 = vrot.slane %v3391, 1
      %v3393 = vmax.f32 %v3391, %v3392
      %v3394 = vrot.slane %v3371, 4
      %v3395 = vmax.f32 %v3371, %v3394
      %v3396 = vrot.slane %v3395, 2
      %v3397 = vmax.f32 %v3395, %v3396
      %v3398 = vrot.slane %v3397, 1
      %v3399 = vmax.f32 %v3397, %v3398
      %v3400 = vrot.slane %v3372, 4
      %v3401 = vmax.f32 %v3372, %v3400
      %v3402 = vrot.slane %v3401, 2
      %v3403 = vmax.f32 %v3401, %v3402
      %v3404 = vrot.slane %v3403, 1
      %v3405 = vmax.f32 %v3403, %v3404
      %v3406 = vrot.slane %v3373, 4
      %v3407 = vmax.f32 %v3373, %v3406
      %v3408 = vrot.slane %v3407, 2
      %v3409 = vmax.f32 %v3407, %v3408
      %v3410 = vrot.slane %v3409, 1
      %v3411 = vmax.f32 %v3409, %v3410
      %v3412 = vrot.slane %v3374, 4
      %v3413 = vmax.f32 %v3374, %v3412
      %v3414 = vrot.slane %v3413, 2
      %v3415 = vmax.f32 %v3413, %v3414
      %v3416 = vrot.slane %v3415, 1
      %v3417 = vmax.f32 %v3415, %v3416
      %v3418 = vrot.slane %v3375, 4
      %v3419 = vmax.f32 %v3375, %v3418
      %v3420 = vrot.slane %v3419, 2
      %v3421 = vmax.f32 %v3419, %v3420
      %v3422 = vrot.slane %v3421, 1
      %v3423 = vmax.f32 %v3421, %v3422
      %vm3424 = vcmp.ge.f32.partialorder %v3368, %v3381
      %vm3425 = vcmp.ge.f32.partialorder %v3369, %v3387
      %vm3426 = vcmp.ge.f32.partialorder %v3370, %v3393
      %vm3427 = vcmp.ge.f32.partialorder %v3371, %v3399
      %vm3428 = vcmp.ge.f32.partialorder %v3372, %v3405
      %vm3429 = vcmp.ge.f32.partialorder %v3373, %v3411
      %vm3430 = vcmp.ge.f32.partialorder %v3374, %v3417
      %vm3431 = vcmp.ge.f32.partialorder %v3375, %v3423
      %v3432 = vsel %vm3424, %v2076, 128
      %v3433 = vsel %vm3425, %v2076, 128
      %v3434 = vsel %vm3426, %v2076, 128
      %v3435 = vsel %vm3427, %v2076, 128
      %v3436 = vsel %vm3428, %v2076, 128
      %v3437 = vsel %vm3429, %v2076, 128
      %v3438 = vsel %vm3430, %v2076, 128
      %v3439 = vsel %vm3431, %v2076, 128
      %v3440 = vrot.slane %v3432, 4
      %vm3441 = vcmp.lt.s32.totalorder %v3432, %v3440
      %v3442 = vsel %vm3441, %v3432, %v3440
      %v3443 = vrot.slane %v3442, 2
      %vm3444 = vcmp.lt.s32.totalorder %v3442, %v3443
      %v3445 = vsel %vm3444, %v3442, %v3443
      %v3446 = vrot.slane %v3445, 1
      %vm3447 = vcmp.lt.s32.totalorder %v3445, %v3446
      %v3448 = vsel %vm3447, %v3445, %v3446
      %v3449 = vrot.slane %v3433, 4
      %vm3450 = vcmp.lt.s32.totalorder %v3433, %v3449
      %v3451 = vsel %vm3450, %v3433, %v3449
      %v3452 = vrot.slane %v3451, 2
      %vm3453 = vcmp.lt.s32.totalorder %v3451, %v3452
      %v3454 = vsel %vm3453, %v3451, %v3452
      %v3455 = vrot.slane %v3454, 1
      %vm3456 = vcmp.lt.s32.totalorder %v3454, %v3455
      %v3457 = vsel %vm3456, %v3454, %v3455
      %v3458 = vrot.slane %v3434, 4
      %vm3459 = vcmp.lt.s32.totalorder %v3434, %v3458
      %v3460 = vsel %vm3459, %v3434, %v3458
      %v3461 = vrot.slane %v3460, 2
      %vm3462 = vcmp.lt.s32.totalorder %v3460, %v3461
      %v3463 = vsel %vm3462, %v3460, %v3461
      %v3464 = vrot.slane %v3463, 1
      %vm3465 = vcmp.lt.s32.totalorder %v3463, %v3464
      %v3466 = vsel %vm3465, %v3463, %v3464
      %v3467 = vrot.slane %v3435, 4
      %vm3468 = vcmp.lt.s32.totalorder %v3435, %v3467
      %v3469 = vsel %vm3468, %v3435, %v3467
      %v3470 = vrot.slane %v3469, 2
      %vm3471 = vcmp.lt.s32.totalorder %v3469, %v3470
      %v3472 = vsel %vm3471, %v3469, %v3470
      %v3473 = vrot.slane %v3472, 1
      %vm3474 = vcmp.lt.s32.totalorder %v3472, %v3473
      %v3475 = vsel %vm3474, %v3472, %v3473
      %v3476 = vrot.slane %v3436, 4
      %vm3477 = vcmp.lt.s32.totalorder %v3436, %v3476
      %v3478 = vsel %vm3477, %v3436, %v3476
      %v3479 = vrot.slane %v3478, 2
      %vm3480 = vcmp.lt.s32.totalorder %v3478, %v3479
      %v3481 = vsel %vm3480, %v3478, %v3479
      %v3482 = vrot.slane %v3481, 1
      %vm3483 = vcmp.lt.s32.totalorder %v3481, %v3482
      %v3484 = vsel %vm3483, %v3481, %v3482
      %v3485 = vrot.slane %v3437, 4
      %vm3486 = vcmp.lt.s32.totalorder %v3437, %v3485
      %v3487 = vsel %vm3486, %v3437, %v3485
      %v3488 = vrot.slane %v3487, 2
      %vm3489 = vcmp.lt.s32.totalorder %v3487, %v3488
      %v3490 = vsel %vm3489, %v3487, %v3488
      %v3491 = vrot.slane %v3490, 1
      %vm3492 = vcmp.lt.s32.totalorder %v3490, %v3491
      %v3493 = vsel %vm3492, %v3490, %v3491
      %v3494 = vrot.slane %v3438, 4
      %vm3495 = vcmp.lt.s32.totalorder %v3438, %v3494
      %v3496 = vsel %vm3495, %v3438, %v3494
      %v3497 = vrot.slane %v3496, 2
      %vm3498 = vcmp.lt.s32.totalorder %v3496, %v3497
      %v3499 = vsel %vm3498, %v3496, %v3497
      %v3500 = vrot.slane %v3499, 1
      %vm3501 = vcmp.lt.s32.totalorder %v3499, %v3500
      %v3502 = vsel %vm3501, %v3499, %v3500
      %v3503 = vrot.slane %v3439, 4
      %vm3504 = vcmp.lt.s32.totalorder %v3439, %v3503
      %v3505 = vsel %vm3504, %v3439, %v3503
      %v3506 = vrot.slane %v3505, 2
      %vm3507 = vcmp.lt.s32.totalorder %v3505, %v3506
      %v3508 = vsel %vm3507, %v3505, %v3506
      %v3509 = vrot.slane %v3508, 1
      %vm3510 = vcmp.lt.s32.totalorder %v3508, %v3509
      %v3511 = vsel %vm3510, %v3508, %v3509
      %v3512 = vsel %vm2101, %v3457, %v3448
      %v3513 = vsel %vm2102, %v3466, %v3512
      %v3514 = vsel %vm2104, %v3475, %v3513
      %v3515 = vsel %vm2106, %v3484, %v3514
      %v3516 = vsel %vm2108, %v3493, %v3515
      %v3517 = vsel %vm2110, %v3502, %v3516
      %v3518 = vsel %vm2112, %v3511, %v3517
      %s3519 = scalar_lea.vmem [#allocation5], 48
      %3520 = vst [vmem:[%s3519] sm:$0xff] %v3518
      %v3521 = vld [vmem:[%s2064] sm:$0xff]
      %v3523 = vrot.slane %v3521, 1
      %v3524 = vrot.slane %v3521, 2
      %v3525 = vrot.slane %v3521, 3
      %v3526 = vrot.slane %v3521, 4
      %v3527 = vrot.slane %v3521, 5
      %v3528 = vrot.slane %v3521, 6
      %v3529 = vrot.slane %v3521, 7
      %v3538 = vadd.f32 %v3381, %v3521
      %v3539 = vadd.f32 %v3387, %v3523
      %v3540 = vadd.f32 %v3393, %v3524
      %v3541 = vadd.f32 %v3399, %v3525
      %v3542 = vadd.f32 %v3405, %v3526
      %v3543 = vadd.f32 %v3411, %v3527
      %v3544 = vadd.f32 %v3417, %v3528
      %v3545 = vadd.f32 %v3423, %v3529
      %v3546 = vlaneseq
      %v3547 = vshrl.u32 %v3546, 7
      %v3548 = vsub.s32 0, %v3547
      %v3549 = vrot.slane %v3538, %v3548
      %v3550 = vlaneseq
      %v3551 = vshrl.u32 %v3550, 7
      %v3552 = vsub.s32 0, %v3551
      %v3553 = vrot.slane %v3539, %v3552
      %v3554 = vlaneseq
      %v3555 = vshrl.u32 %v3554, 7
      %v3556 = vsub.s32 0, %v3555
      %v3557 = vrot.slane %v3540, %v3556
      %v3558 = vlaneseq
      %v3559 = vshrl.u32 %v3558, 7
      %v3560 = vsub.s32 0, %v3559
      %v3561 = vrot.slane %v3541, %v3560
      %v3562 = vlaneseq
      %v3563 = vshrl.u32 %v3562, 7
      %v3564 = vsub.s32 0, %v3563
      %v3565 = vrot.slane %v3542, %v3564
      %v3566 = vlaneseq
      %v3567 = vshrl.u32 %v3566, 7
      %v3568 = vsub.s32 0, %v3567
      %v3569 = vrot.slane %v3543, %v3568
      %v3570 = vlaneseq
      %v3571 = vshrl.u32 %v3570, 7
      %v3572 = vsub.s32 0, %v3571
      %v3573 = vrot.slane %v3544, %v3572
      %v3574 = vlaneseq
      %v3575 = vshrl.u32 %v3574, 7
      %v3576 = vsub.s32 0, %v3575
      %v3577 = vrot.slane %v3545, %v3576
      %v3578 = vsel %vm2141, %v3549, -1e+30
      %v3579 = vsel %vm2141, %v3553, -1e+30
      %v3580 = vsel %vm2141, %v3557, -1e+30
      %v3581 = vsel %vm2141, %v3561, -1e+30
      %v3582 = vsel %vm2141, %v3565, -1e+30
      %v3583 = vsel %vm2141, %v3569, -1e+30
      %v3584 = vsel %vm2141, %v3573, -1e+30
      %v3585 = vsel %vm2141, %v3577, -1e+30
      %3586 = vmax.xlane.f32.xlu0 %v3578
      %v3587 = vpop.xlane.xlu0 %3586
      %3588 = vmax.xlane.f32.xlu0 %v3579
      %v3589 = vpop.xlane.xlu0 %3588
      %3590 = vmax.xlane.f32.xlu0 %v3580
      %v3591 = vpop.xlane.xlu0 %3590
      %3592 = vmax.xlane.f32.xlu0 %v3581
      %v3593 = vpop.xlane.xlu0 %3592
      %3594 = vmax.xlane.f32.xlu0 %v3582
      %v3595 = vpop.xlane.xlu0 %3594
      %3596 = vmax.xlane.f32.xlu0 %v3583
      %v3597 = vpop.xlane.xlu0 %3596
      %3598 = vmax.xlane.f32.xlu0 %v3584
      %v3599 = vpop.xlane.xlu0 %3598
      %3600 = vmax.xlane.f32.xlu0 %v3585
      %v3601 = vpop.xlane.xlu0 %3600
      %v3602 = vadd.f32 %v2080, %v3587
      %v3603 = vadd.f32 %v2080, %v3589
      %v3604 = vadd.f32 %v2080, %v3591
      %v3605 = vadd.f32 %v2080, %v3593
      %v3606 = vadd.f32 %v2080, %v3595
      %v3607 = vadd.f32 %v2080, %v3597
      %v3608 = vadd.f32 %v2080, %v3599
      %v3609 = vadd.f32 %v2080, %v3601
      %v3610 = vrot.slane %v3602, 4
      %v3611 = vmax.f32 %v3602, %v3610
      %v3612 = vrot.slane %v3611, 2
      %v3613 = vmax.f32 %v3611, %v3612
      %v3614 = vrot.slane %v3613, 1
      %v3615 = vmax.f32 %v3613, %v3614
      %v3616 = vrot.slane %v3603, 4
      %v3617 = vmax.f32 %v3603, %v3616
      %v3618 = vrot.slane %v3617, 2
      %v3619 = vmax.f32 %v3617, %v3618
      %v3620 = vrot.slane %v3619, 1
      %v3621 = vmax.f32 %v3619, %v3620
      %v3622 = vrot.slane %v3604, 4
      %v3623 = vmax.f32 %v3604, %v3622
      %v3624 = vrot.slane %v3623, 2
      %v3625 = vmax.f32 %v3623, %v3624
      %v3626 = vrot.slane %v3625, 1
      %v3627 = vmax.f32 %v3625, %v3626
      %v3628 = vrot.slane %v3605, 4
      %v3629 = vmax.f32 %v3605, %v3628
      %v3630 = vrot.slane %v3629, 2
      %v3631 = vmax.f32 %v3629, %v3630
      %v3632 = vrot.slane %v3631, 1
      %v3633 = vmax.f32 %v3631, %v3632
      %v3634 = vrot.slane %v3606, 4
      %v3635 = vmax.f32 %v3606, %v3634
      %v3636 = vrot.slane %v3635, 2
      %v3637 = vmax.f32 %v3635, %v3636
      %v3638 = vrot.slane %v3637, 1
      %v3639 = vmax.f32 %v3637, %v3638
      %v3640 = vrot.slane %v3607, 4
      %v3641 = vmax.f32 %v3607, %v3640
      %v3642 = vrot.slane %v3641, 2
      %v3643 = vmax.f32 %v3641, %v3642
      %v3644 = vrot.slane %v3643, 1
      %v3645 = vmax.f32 %v3643, %v3644
      %v3646 = vrot.slane %v3608, 4
      %v3647 = vmax.f32 %v3608, %v3646
      %v3648 = vrot.slane %v3647, 2
      %v3649 = vmax.f32 %v3647, %v3648
      %v3650 = vrot.slane %v3649, 1
      %v3651 = vmax.f32 %v3649, %v3650
      %v3652 = vrot.slane %v3609, 4
      %v3653 = vmax.f32 %v3609, %v3652
      %v3654 = vrot.slane %v3653, 2
      %v3655 = vmax.f32 %v3653, %v3654
      %v3656 = vrot.slane %v3655, 1
      %v3657 = vmax.f32 %v3655, %v3656
      %vm3658 = vcmp.ge.f32.partialorder %v3602, %v3615
      %vm3659 = vcmp.ge.f32.partialorder %v3603, %v3621
      %vm3660 = vcmp.ge.f32.partialorder %v3604, %v3627
      %vm3661 = vcmp.ge.f32.partialorder %v3605, %v3633
      %vm3662 = vcmp.ge.f32.partialorder %v3606, %v3639
      %vm3663 = vcmp.ge.f32.partialorder %v3607, %v3645
      %vm3664 = vcmp.ge.f32.partialorder %v3608, %v3651
      %vm3665 = vcmp.ge.f32.partialorder %v3609, %v3657
      %v3666 = vsel %vm3658, %v2076, 128
      %v3667 = vsel %vm3659, %v2076, 128
      %v3668 = vsel %vm3660, %v2076, 128
      %v3669 = vsel %vm3661, %v2076, 128
      %v3670 = vsel %vm3662, %v2076, 128
      %v3671 = vsel %vm3663, %v2076, 128
      %v3672 = vsel %vm3664, %v2076, 128
      %v3673 = vsel %vm3665, %v2076, 128
      %v3674 = vrot.slane %v3666, 4
      %vm3675 = vcmp.lt.s32.totalorder %v3666, %v3674
      %v3676 = vsel %vm3675, %v3666, %v3674
      %v3677 = vrot.slane %v3676, 2
      %vm3678 = vcmp.lt.s32.totalorder %v3676, %v3677
      %v3679 = vsel %vm3678, %v3676, %v3677
      %v3680 = vrot.slane %v3679, 1
      %vm3681 = vcmp.lt.s32.totalorder %v3679, %v3680
      %v3682 = vsel %vm3681, %v3679, %v3680
      %v3683 = vrot.slane %v3667, 4
      %vm3684 = vcmp.lt.s32.totalorder %v3667, %v3683
      %v3685 = vsel %vm3684, %v3667, %v3683
      %v3686 = vrot.slane %v3685, 2
      %vm3687 = vcmp.lt.s32.totalorder %v3685, %v3686
      %v3688 = vsel %vm3687, %v3685, %v3686
      %v3689 = vrot.slane %v3688, 1
      %vm3690 = vcmp.lt.s32.totalorder %v3688, %v3689
      %v3691 = vsel %vm3690, %v3688, %v3689
      %v3692 = vrot.slane %v3668, 4
      %vm3693 = vcmp.lt.s32.totalorder %v3668, %v3692
      %v3694 = vsel %vm3693, %v3668, %v3692
      %v3695 = vrot.slane %v3694, 2
      %vm3696 = vcmp.lt.s32.totalorder %v3694, %v3695
      %v3697 = vsel %vm3696, %v3694, %v3695
      %v3698 = vrot.slane %v3697, 1
      %vm3699 = vcmp.lt.s32.totalorder %v3697, %v3698
      %v3700 = vsel %vm3699, %v3697, %v3698
      %v3701 = vrot.slane %v3669, 4
      %vm3702 = vcmp.lt.s32.totalorder %v3669, %v3701
      %v3703 = vsel %vm3702, %v3669, %v3701
      %v3704 = vrot.slane %v3703, 2
      %vm3705 = vcmp.lt.s32.totalorder %v3703, %v3704
      %v3706 = vsel %vm3705, %v3703, %v3704
      %v3707 = vrot.slane %v3706, 1
      %vm3708 = vcmp.lt.s32.totalorder %v3706, %v3707
      %v3709 = vsel %vm3708, %v3706, %v3707
      %v3710 = vrot.slane %v3670, 4
      %vm3711 = vcmp.lt.s32.totalorder %v3670, %v3710
      %v3712 = vsel %vm3711, %v3670, %v3710
      %v3713 = vrot.slane %v3712, 2
      %vm3714 = vcmp.lt.s32.totalorder %v3712, %v3713
      %v3715 = vsel %vm3714, %v3712, %v3713
      %v3716 = vrot.slane %v3715, 1
      %vm3717 = vcmp.lt.s32.totalorder %v3715, %v3716
      %v3718 = vsel %vm3717, %v3715, %v3716
      %v3719 = vrot.slane %v3671, 4
      %vm3720 = vcmp.lt.s32.totalorder %v3671, %v3719
      %v3721 = vsel %vm3720, %v3671, %v3719
      %v3722 = vrot.slane %v3721, 2
      %vm3723 = vcmp.lt.s32.totalorder %v3721, %v3722
      %v3724 = vsel %vm3723, %v3721, %v3722
      %v3725 = vrot.slane %v3724, 1
      %vm3726 = vcmp.lt.s32.totalorder %v3724, %v3725
      %v3727 = vsel %vm3726, %v3724, %v3725
      %v3728 = vrot.slane %v3672, 4
      %vm3729 = vcmp.lt.s32.totalorder %v3672, %v3728
      %v3730 = vsel %vm3729, %v3672, %v3728
      %v3731 = vrot.slane %v3730, 2
      %vm3732 = vcmp.lt.s32.totalorder %v3730, %v3731
      %v3733 = vsel %vm3732, %v3730, %v3731
      %v3734 = vrot.slane %v3733, 1
      %vm3735 = vcmp.lt.s32.totalorder %v3733, %v3734
      %v3736 = vsel %vm3735, %v3733, %v3734
      %v3737 = vrot.slane %v3673, 4
      %vm3738 = vcmp.lt.s32.totalorder %v3673, %v3737
      %v3739 = vsel %vm3738, %v3673, %v3737
      %v3740 = vrot.slane %v3739, 2
      %vm3741 = vcmp.lt.s32.totalorder %v3739, %v3740
      %v3742 = vsel %vm3741, %v3739, %v3740
      %v3743 = vrot.slane %v3742, 1
      %vm3744 = vcmp.lt.s32.totalorder %v3742, %v3743
      %v3745 = vsel %vm3744, %v3742, %v3743
      %v3746 = vsel %vm2101, %v3691, %v3682
      %v3747 = vsel %vm2102, %v3700, %v3746
      %v3748 = vsel %vm2104, %v3709, %v3747
      %v3749 = vsel %vm2106, %v3718, %v3748
      %v3750 = vsel %vm2108, %v3727, %v3749
      %v3751 = vsel %vm2110, %v3736, %v3750
      %v3752 = vsel %vm2112, %v3745, %v3751
      %s3753 = scalar_lea.vmem [#allocation5], 56
      %3754 = vst [vmem:[%s3753] sm:$0xff] %v3752
      %v3755 = vld [vmem:[%s2070] sm:$0xff]
      %v3757 = vrot.slane %v3755, 1
      %v3758 = vrot.slane %v3755, 2
      %v3759 = vrot.slane %v3755, 3
      %v3760 = vrot.slane %v3755, 4
      %v3761 = vrot.slane %v3755, 5
      %v3762 = vrot.slane %v3755, 6
      %v3763 = vrot.slane %v3755, 7
      %v3772 = vadd.f32 %v3615, %v3755
      %v3773 = vadd.f32 %v3621, %v3757
      %v3774 = vadd.f32 %v3627, %v3758
      %v3775 = vadd.f32 %v3633, %v3759
      %v3776 = vadd.f32 %v3639, %v3760
      %v3777 = vadd.f32 %v3645, %v3761
      %v3778 = vadd.f32 %v3651, %v3762
      %v3779 = vadd.f32 %v3657, %v3763
      %v3780 = vlaneseq
      %v3781 = vshrl.u32 %v3780, 7
      %v3782 = vsub.s32 0, %v3781
      %v3783 = vrot.slane %v3772, %v3782
      %v3784 = vlaneseq
      %v3785 = vshrl.u32 %v3784, 7
      %v3786 = vsub.s32 0, %v3785
      %v3787 = vrot.slane %v3773, %v3786
      %v3788 = vlaneseq
      %v3789 = vshrl.u32 %v3788, 7
      %v3790 = vsub.s32 0, %v3789
      %v3791 = vrot.slane %v3774, %v3790
      %v3792 = vlaneseq
      %v3793 = vshrl.u32 %v3792, 7
      %v3794 = vsub.s32 0, %v3793
      %v3795 = vrot.slane %v3775, %v3794
      %v3796 = vlaneseq
      %v3797 = vshrl.u32 %v3796, 7
      %v3798 = vsub.s32 0, %v3797
      %v3799 = vrot.slane %v3776, %v3798
      %v3800 = vlaneseq
      %v3801 = vshrl.u32 %v3800, 7
      %v3802 = vsub.s32 0, %v3801
      %v3803 = vrot.slane %v3777, %v3802
      %v3804 = vlaneseq
      %v3805 = vshrl.u32 %v3804, 7
      %v3806 = vsub.s32 0, %v3805
      %v3807 = vrot.slane %v3778, %v3806
      %v3808 = vlaneseq
      %v3809 = vshrl.u32 %v3808, 7
      %v3810 = vsub.s32 0, %v3809
      %v3811 = vrot.slane %v3779, %v3810
      %v3812 = vsel %vm2141, %v3783, -1e+30
      %v3813 = vsel %vm2141, %v3787, -1e+30
      %v3814 = vsel %vm2141, %v3791, -1e+30
      %v3815 = vsel %vm2141, %v3795, -1e+30
      %v3816 = vsel %vm2141, %v3799, -1e+30
      %v3817 = vsel %vm2141, %v3803, -1e+30
      %v3818 = vsel %vm2141, %v3807, -1e+30
      %v3819 = vsel %vm2141, %v3811, -1e+30
      %3820 = vmax.xlane.f32.xlu0 %v3812
      %v3821 = vpop.xlane.xlu0 %3820
      %3822 = vmax.xlane.f32.xlu0 %v3813
      %v3823 = vpop.xlane.xlu0 %3822
      %3824 = vmax.xlane.f32.xlu0 %v3814
      %v3825 = vpop.xlane.xlu0 %3824
      %3826 = vmax.xlane.f32.xlu0 %v3815
      %v3827 = vpop.xlane.xlu0 %3826
      %3828 = vmax.xlane.f32.xlu0 %v3816
      %v3829 = vpop.xlane.xlu0 %3828
      %3830 = vmax.xlane.f32.xlu0 %v3817
      %v3831 = vpop.xlane.xlu0 %3830
      %3832 = vmax.xlane.f32.xlu0 %v3818
      %v3833 = vpop.xlane.xlu0 %3832
      %3834 = vmax.xlane.f32.xlu0 %v3819
      %v3835 = vpop.xlane.xlu0 %3834
      %v3836 = vsel %vm2141, %v3821, -1e+30
      %v3837 = vsel %vm2141, %v3823, -1e+30
      %v3838 = vsel %vm2141, %v3825, -1e+30
      %v3839 = vsel %vm2141, %v3827, -1e+30
      %v3840 = vsel %vm2141, %v3829, -1e+30
      %v3841 = vsel %vm2141, %v3831, -1e+30
      %v3842 = vsel %vm2141, %v3833, -1e+30
      %v3843 = vsel %vm2141, %v3835, -1e+30
      %v3844 = vrot.slane %v3836, 4
      %v3845 = vmax.f32 %v3836, %v3844
      %v3846 = vrot.slane %v3845, 2
      %v3847 = vmax.f32 %v3845, %v3846
      %v3848 = vrot.slane %v3847, 1
      %v3849 = vmax.f32 %v3847, %v3848
      %v3850 = vrot.slane %v3837, 4
      %v3851 = vmax.f32 %v3837, %v3850
      %v3852 = vrot.slane %v3851, 2
      %v3853 = vmax.f32 %v3851, %v3852
      %v3854 = vrot.slane %v3853, 1
      %v3855 = vmax.f32 %v3853, %v3854
      %v3856 = vrot.slane %v3838, 4
      %v3857 = vmax.f32 %v3838, %v3856
      %v3858 = vrot.slane %v3857, 2
      %v3859 = vmax.f32 %v3857, %v3858
      %v3860 = vrot.slane %v3859, 1
      %v3861 = vmax.f32 %v3859, %v3860
      %v3862 = vrot.slane %v3839, 4
      %v3863 = vmax.f32 %v3839, %v3862
      %v3864 = vrot.slane %v3863, 2
      %v3865 = vmax.f32 %v3863, %v3864
      %v3866 = vrot.slane %v3865, 1
      %v3867 = vmax.f32 %v3865, %v3866
      %v3868 = vrot.slane %v3840, 4
      %v3869 = vmax.f32 %v3840, %v3868
      %v3870 = vrot.slane %v3869, 2
      %v3871 = vmax.f32 %v3869, %v3870
      %v3872 = vrot.slane %v3871, 1
      %v3873 = vmax.f32 %v3871, %v3872
      %v3874 = vrot.slane %v3841, 4
      %v3875 = vmax.f32 %v3841, %v3874
      %v3876 = vrot.slane %v3875, 2
      %v3877 = vmax.f32 %v3875, %v3876
      %v3878 = vrot.slane %v3877, 1
      %v3879 = vmax.f32 %v3877, %v3878
      %v3880 = vrot.slane %v3842, 4
      %v3881 = vmax.f32 %v3842, %v3880
      %v3882 = vrot.slane %v3881, 2
      %v3883 = vmax.f32 %v3881, %v3882
      %v3884 = vrot.slane %v3883, 1
      %v3885 = vmax.f32 %v3883, %v3884
      %v3886 = vrot.slane %v3843, 4
      %v3887 = vmax.f32 %v3843, %v3886
      %v3888 = vrot.slane %v3887, 2
      %v3889 = vmax.f32 %v3887, %v3888
      %v3890 = vrot.slane %v3889, 1
      %v3891 = vmax.f32 %v3889, %v3890
      %v3892 = vld [vmem:[%s10] sm:$0x1]
      %v3894 = vlaneseq
      %v3895 = vshrl.u32 %v3894, 7
      %v3896 = vsub.s32 0, %v3895
      %v3897 = vrot.slane %v3892, %v3896
      %v3899 = vadd.f32 %v3849, %v3897
      %v3900 = vadd.f32 %v3855, %v3897
      %v3901 = vadd.f32 %v3861, %v3897
      %v3902 = vadd.f32 %v3867, %v3897
      %v3903 = vadd.f32 %v3873, %v3897
      %v3904 = vadd.f32 %v3879, %v3897
      %v3905 = vadd.f32 %v3885, %v3897
      %v3906 = vadd.f32 %v3891, %v3897
      %v3915 = vrot.slane %v3900, 7
      %v3916 = vsel %vm2101, %v3915, %v3899
      %v3917 = vrot.slane %v3901, 6
      %v3918 = vsel %vm2102, %v3917, %v3916
      %v3919 = vrot.slane %v3902, 5
      %v3920 = vsel %vm2104, %v3919, %v3918
      %v3921 = vrot.slane %v3903, 4
      %v3922 = vsel %vm2106, %v3921, %v3920
      %v3923 = vrot.slane %v3904, 3
      %v3924 = vsel %vm2108, %v3923, %v3922
      %v3925 = vrot.slane %v3905, 2
      %v3926 = vsel %vm2110, %v3925, %v3924
      %v3927 = vrot.slane %v3906, 1
      %v3928 = vsel %vm2112, %v3927, %v3926
      %3930 = vmax.xlane.f32.xlu0 %v3928
      %v3931 = vpop.xlane.xlu0 %3930
      %v3933 = vrot.slane %v3931, 1
      %v3934 = vrot.slane %v3931, 2
      %v3935 = vrot.slane %v3931, 3
      %v3936 = vrot.slane %v3931, 4
      %v3937 = vrot.slane %v3931, 5
      %v3938 = vrot.slane %v3931, 6
      %v3939 = vrot.slane %v3931, 7
      %vm3948 = vcmp.ge.f32.partialorder %v3899, %v3931
      %vm3949 = vcmp.ge.f32.partialorder %v3900, %v3933
      %vm3950 = vcmp.ge.f32.partialorder %v3901, %v3934
      %vm3951 = vcmp.ge.f32.partialorder %v3902, %v3935
      %vm3952 = vcmp.ge.f32.partialorder %v3903, %v3936
      %vm3953 = vcmp.ge.f32.partialorder %v3904, %v3937
      %vm3954 = vcmp.ge.f32.partialorder %v3905, %v3938
      %vm3955 = vcmp.ge.f32.partialorder %v3906, %v3939
      %v3956 = vsel %vm3948, %v2078, 128
      %v3957 = vsel %vm3949, %v2078, 128
      %v3958 = vsel %vm3950, %v2078, 128
      %v3959 = vsel %vm3951, %v2078, 128
      %v3960 = vsel %vm3952, %v2078, 128
      %v3961 = vsel %vm3953, %v2078, 128
      %v3962 = vsel %vm3954, %v2078, 128
      %v3963 = vsel %vm3955, %v2078, 128
      %v3964 = vrot.slane %v3957, 7
      %v3965 = vsel %vm2101, %v3964, %v3956
      %v3966 = vrot.slane %v3958, 6
      %v3967 = vsel %vm2102, %v3966, %v3965
      %v3968 = vrot.slane %v3959, 5
      %v3969 = vsel %vm2104, %v3968, %v3967
      %v3970 = vrot.slane %v3960, 4
      %v3971 = vsel %vm2106, %v3970, %v3969
      %v3972 = vrot.slane %v3961, 3
      %v3973 = vsel %vm2108, %v3972, %v3971
      %v3974 = vrot.slane %v3962, 2
      %v3975 = vsel %vm2110, %v3974, %v3973
      %v3976 = vrot.slane %v3963, 1
      %v3977 = vsel %vm2112, %v3976, %v3975
      %v3978 = vand.u32 %v3977, 65535
      %v3979 = vshra.s32 %v3977, 16
      %v3980 = vcvt.s32.f32 %v3978
      %v3981 = vcvt.s32.f32 %v3979
      %3982 = vmin.xlane.f32.xlu0 %v3981
      %v3983 = vpop.xlane.xlu0 %3982
      %vm3984 = vcmp.eq.f32.partialorder %v3981, %v3983
      %v3985 = vsel %vm3984, %v3980, inf
      %3986 = vmin.xlane.f32.xlu0 %v3985
      %v3987 = vpop.xlane.xlu0 %3986
      %v3988 = vcvt.f32.s32 %v3987
      %v3989 = vcvt.f32.s32 %v3983
      %v3990 = vshll.u32 %v3989, 16
      %v3991 = vadd.s32 %v3990, %v3988
      %3992 = vst [vmem:[%s543] sm:$0xff] %v3931
      %3993 = vst [vmem:[%s538 + $0x38] sm:$0xff] %v3991
      %v3994 = vld [vmem:[%s3753] sm:$0xff]
      %vm3995 = vcmp.eq.s32.totalorder %v2078, %v3991
      %v3996 = vsel %vm3995, %v3994, 4294967295
      %v3997 = vand.u32 %v3996, 65535
      %v3998 = vshra.s32 %v3996, 16
      %v3999 = vcvt.s32.f32 %v3997
      %v4000 = vcvt.s32.f32 %v3998
      %4001 = vmax.xlane.f32.xlu0 %v4000
      %v4002 = vpop.xlane.xlu0 %4001
      %vm4003 = vcmp.eq.f32.partialorder %v4000, %v4002
      %v4004 = vsel %vm4003, %v3999, -inf
      %4005 = vmax.xlane.f32.xlu0 %v4004
      %v4006 = vpop.xlane.xlu0 %4005
      %v4007 = vcvt.f32.s32 %v4006
      %v4008 = vcvt.f32.s32 %v4002
      %v4009 = vshll.u32 %v4008, 16
      %v4010 = vadd.s32 %v4009, %v4007
      %s4011 = scalar_lea.vmem %s538, 48
      %4012 = vst [vmem:[%s4011] sm:$0xff] %v4010
      %v4013 = vld [vmem:[%s3519] sm:$0xff]
      %vm4014 = vcmp.eq.s32.totalorder %v2078, %v4010
      %v4015 = vsel %vm4014, %v4013, 4294967295
      %v4016 = vand.u32 %v4015, 65535
      %v4017 = vshra.s32 %v4015, 16
      %v4018 = vcvt.s32.f32 %v4016
      %v4019 = vcvt.s32.f32 %v4017
      %4020 = vmax.xlane.f32.xlu0 %v4019
      %v4021 = vpop.xlane.xlu0 %4020
      %vm4022 = vcmp.eq.f32.partialorder %v4019, %v4021
      %v4023 = vsel %vm4022, %v4018, -inf
      %4024 = vmax.xlane.f32.xlu0 %v4023
      %v4025 = vpop.xlane.xlu0 %4024
      %v4026 = vcvt.f32.s32 %v4025
      %v4027 = vcvt.f32.s32 %v4021
      %v4028 = vshll.u32 %v4027, 16
      %v4029 = vadd.s32 %v4028, %v4026
      %s4030 = scalar_lea.vmem %s538, 40
      %4031 = vst [vmem:[%s4030] sm:$0xff] %v4029
      %v4032 = vld [vmem:[%s3285] sm:$0xff]
      %vm4033 = vcmp.eq.s32.totalorder %v2078, %v4029
      %v4034 = vsel %vm4033, %v4032, 4294967295
      %v4035 = vand.u32 %v4034, 65535
      %v4036 = vshra.s32 %v4034, 16
      %v4037 = vcvt.s32.f32 %v4035
      %v4038 = vcvt.s32.f32 %v4036
      %4039 = vmax.xlane.f32.xlu0 %v4038
      %v4040 = vpop.xlane.xlu0 %4039
      %vm4041 = vcmp.eq.f32.partialorder %v4038, %v4040
      %v4042 = vsel %vm4041, %v4037, -inf
      %4043 = vmax.xlane.f32.xlu0 %v4042
      %v4044 = vpop.xlane.xlu0 %4043
      %v4045 = vcvt.f32.s32 %v4044
      %v4046 = vcvt.f32.s32 %v4040
      %v4047 = vshll.u32 %v4046, 16
      %v4048 = vadd.s32 %v4047, %v4045
      %s4049 = scalar_lea.vmem %s538, 32
      %4050 = vst [vmem:[%s4049] sm:$0xff] %v4048
      %v4051 = vld [vmem:[%s3051] sm:$0xff]
      %vm4052 = vcmp.eq.s32.totalorder %v2078, %v4048
      %v4053 = vsel %vm4052, %v4051, 4294967295
      %v4054 = vand.u32 %v4053, 65535
      %v4055 = vshra.s32 %v4053, 16
      %v4056 = vcvt.s32.f32 %v4054
      %v4057 = vcvt.s32.f32 %v4055
      %4058 = vmax.xlane.f32.xlu0 %v4057
      %v4059 = vpop.xlane.xlu0 %4058
      %vm4060 = vcmp.eq.f32.partialorder %v4057, %v4059
      %v4061 = vsel %vm4060, %v4056, -inf
      %4062 = vmax.xlane.f32.xlu0 %v4061
      %v4063 = vpop.xlane.xlu0 %4062
      %v4064 = vcvt.f32.s32 %v4063
      %v4065 = vcvt.f32.s32 %v4059
      %v4066 = vshll.u32 %v4065, 16
      %v4067 = vadd.s32 %v4066, %v4064
      %s4068 = scalar_lea.vmem %s538, 24
      %4069 = vst [vmem:[%s4068] sm:$0xff] %v4067
      %v4070 = vld [vmem:[%s2817] sm:$0xff]
      %vm4071 = vcmp.eq.s32.totalorder %v2078, %v4067
      %v4072 = vsel %vm4071, %v4070, 4294967295
      %v4073 = vand.u32 %v4072, 65535
      %v4074 = vshra.s32 %v4072, 16
      %v4075 = vcvt.s32.f32 %v4073
      %v4076 = vcvt.s32.f32 %v4074
      %4077 = vmax.xlane.f32.xlu0 %v4076
      %v4078 = vpop.xlane.xlu0 %4077
      %vm4079 = vcmp.eq.f32.partialorder %v4076, %v4078
      %v4080 = vsel %vm4079, %v4075, -inf
      %4081 = vmax.xlane.f32.xlu0 %v4080
      %v4082 = vpop.xlane.xlu0 %4081
      %v4083 = vcvt.f32.s32 %v4082
      %v4084 = vcvt.f32.s32 %v4078
      %v4085 = vshll.u32 %v4084, 16
      %v4086 = vadd.s32 %v4085, %v4083
      %s4087 = scalar_lea.vmem %s538, 16
      %4088 = vst [vmem:[%s4087] sm:$0xff] %v4086
      %v4089 = vld [vmem:[%s2583] sm:$0xff]
      %vm4090 = vcmp.eq.s32.totalorder %v2078, %v4086
      %v4091 = vsel %vm4090, %v4089, 4294967295
      %v4092 = vand.u32 %v4091, 65535
      %v4093 = vshra.s32 %v4091, 16
      %v4094 = vcvt.s32.f32 %v4092
      %v4095 = vcvt.s32.f32 %v4093
      %4096 = vmax.xlane.f32.xlu0 %v4095
      %v4097 = vpop.xlane.xlu0 %4096
      %vm4098 = vcmp.eq.f32.partialorder %v4095, %v4097
      %v4099 = vsel %vm4098, %v4094, -inf
      %4100 = vmax.xlane.f32.xlu0 %v4099
      %v4101 = vpop.xlane.xlu0 %4100
      %v4102 = vcvt.f32.s32 %v4101
      %v4103 = vcvt.f32.s32 %v4097
      %v4104 = vshll.u32 %v4103, 16
      %v4105 = vadd.s32 %v4104, %v4102
      %s4106 = scalar_lea.vmem %s538, 8
      %4107 = vst [vmem:[%s4106] sm:$0xff] %v4105
      %v4108 = vld [vmem:[%s2349] sm:$0xff]
      %vm4109 = vcmp.eq.s32.totalorder %v2078, %v4105
      %v4110 = vsel %vm4109, %v4108, 4294967295
      %v4111 = vand.u32 %v4110, 65535
      %v4112 = vshra.s32 %v4110, 16
      %v4113 = vcvt.s32.f32 %v4111
      %v4114 = vcvt.s32.f32 %v4112
      %4115 = vmax.xlane.f32.xlu0 %v4114
      %v4116 = vpop.xlane.xlu0 %4115
      %vm4117 = vcmp.eq.f32.partialorder %v4114, %v4116
      %v4118 = vsel %vm4117, %v4113, -inf
      %4119 = vmax.xlane.f32.xlu0 %v4118
      %v4120 = vpop.xlane.xlu0 %4119
      %v4121 = vcvt.f32.s32 %v4120
      %v4122 = vcvt.f32.s32 %v4116
      %v4123 = vshll.u32 %v4122, 16
      %v4124 = vadd.s32 %v4123, %v4121
      %4125 = vst [vmem:[%s538] sm:$0xff] %v4124
      %s4126 = smul.u32 8, %s27
      %p4127 = scmp.lt.s32.totalorder %s4126, 15
      %s4128 = scalar_select %p4127, %s4126, 15
      %s4129 = smul.addr %s4128, 8
      %s4130 = scalar_lea.vmem %s13, %s4129
      %s4131 = smul.u32 8, %s27
      %p4132 = scmp.lt.s32.totalorder %s4131, 15
      %s4133 = scalar_select %p4132, %s4131, 15
      %s4134 = smul.addr %s4133, 8
      %s4135 = scalar_lea.vmem %s14, %s4134
      %p4136 = scmp.lt.s32.totalorder %s27, 1
      %s4137 = scalar_select %p4136, %s27, 1
      %s4138 = smul.addr %s4137, 8
      %s4139 = scalar_lea.vmem %s15, %s4138
      // Predicated region
      $region73: #{bilstm_crf_forward.1} parent=71 // pred_check
        %p4140 = pneg %p328
      $region74: #{bilstm_crf_forward.1} parent=71 // pred_check_branch
        %4142 = sbr.rel (%p4140) target = $region76
      $region75: #{bilstm_crf_forward.1} parent=71 // pred_region
        %s4143 = smul.u32 8, %s27
      $region76: #{bilstm_crf_forward.1} parent=71 // pred_fallthru
        _
      // Predicated region
      $region77: #{bilstm_crf_forward.1} parent=71 // pred_check
        %p4144 = pneg %p354
      $region78: #{bilstm_crf_forward.1} parent=71 // pred_check_branch
        %4146 = sbr.rel (%p4144) target = $region80
      $region79: #{bilstm_crf_forward.1} parent=71 // pred_region
        %s4147 = smul.u32 8, %s27
      $region80: #{bilstm_crf_forward.1} parent=71 // pred_fallthru
        _
      // Predicated region
      $region81: #{bilstm_crf_forward.1} parent=71 // pred_check
        %p4148 = pneg %p380
      $region82: #{bilstm_crf_forward.1} parent=71 // pred_check_branch
        %4150 = sbr.rel (%p4148) target = $region84
      $region83: #{bilstm_crf_forward.1} parent=71 // pred_region
        _
      $region84: #{bilstm_crf_forward.1} parent=71 // pred_fallthru
        _
    $region72: #{bilstm_crf_forward.1} parent=5 // pred_fallthru
      _
    %p4151 = scmp.le.s32.totalorder 2, %s22
    // Predicated region
    $region85: #{bilstm_crf_forward.1} parent=5 // pred_check
      %p4152 = pneg %p4151
    $region86: #{bilstm_crf_forward.1} parent=5 // pred_check_branch
      %4154 = sbr.rel (%p4152) target = $region88
    $region87: #{bilstm_crf_forward.1} parent=5 // pred_region
      %s4155 = ssub.s32 %s22, 2
      // Predicated region
      $region89: #{bilstm_crf_forward.1} parent=87 // pred_check
        %p4156 = pneg %p334
      $region90: #{bilstm_crf_forward.1} parent=87 // pred_check_branch
        %4158 = sbr.rel (%p4156) target = $region92
      $region91: #{bilstm_crf_forward.1} parent=87 // pred_region
        %s4159 = smul.u32 8, %s28
        %p4160 = scmp.lt.s32.totalorder %s4159, 15
        %s4161 = scalar_select %p4160, %s4159, 15
        %s4162 = smul.addr %s4161, 8
        %s4163 = scalar_lea.vmem %s13, %s4162
      $region92: #{bilstm_crf_forward.1} parent=87 // pred_fallthru
        _
      // Predicated region
      $region93: #{bilstm_crf_forward.1} parent=87 // pred_check
        %p4164 = pneg %p360
      $region94: #{bilstm_crf_forward.1} parent=87 // pred_check_branch
        %4166 = sbr.rel (%p4164) target = $region96
      $region95: #{bilstm_crf_forward.1} parent=87 // pred_region
        %s4167 = smul.u32 8, %s28
        %p4168 = scmp.lt.s32.totalorder %s4167, 15
        %s4169 = scalar_select %p4168, %s4167, 15
        %s4170 = smul.addr %s4169, 8
        %s4171 = scalar_lea.vmem %s14, %s4170
      $region96: #{bilstm_crf_forward.1} parent=87 // pred_fallthru
        _
      // Predicated region
      $region97: #{bilstm_crf_forward.1} parent=87 // pred_check
        %p4172 = pneg %p386
      $region98: #{bilstm_crf_forward.1} parent=87 // pred_check_branch
        %4174 = sbr.rel (%p4172) target = $region100
      $region99: #{bilstm_crf_forward.1} parent=87 // pred_region
        %p4175 = scmp.lt.s32.totalorder %s28, 1
        %s4176 = scalar_select %p4175, %s28, 1
        %s4177 = smul.addr %s4176, 8
        %s4178 = scalar_lea.vmem %s15, %s4177
      $region100: #{bilstm_crf_forward.1} parent=87 // pred_fallthru
        _
    $region88: #{bilstm_crf_forward.1} parent=5 // pred_fallthru
      _
  $region6: #{bilstm_crf_forward.1} parent=0 // loop_footer
    %s26 = sadd.s32 1, %s22
  $region7: #{bilstm_crf_forward.1} parent=0 // loop_footer_branch
    %21 = sbr.rel target = $region3
  $region8: #{bilstm_crf_forward.1} parent=0 // loop_exit
    _

</llo_original>
